<compile_context>
chip_gen: v6e
topology: v6e:2x2x1
jax: 0.10.0
libtpu: 0.0.40
codegen_flags: <defaults>
</compile_context>

<pallas_src>
import functools

import jax
import jax.numpy as jnp
from jax.experimental import pallas as pl
from jax.experimental.pallas import tpu as pltpu

IMAGENET_MEAN = jnp.array([0.485, 0.456, 0.406], jnp.float32)
IMAGENET_STD = jnp.array([0.229, 0.224, 0.225], jnp.float32)


def _round_up(x, m):
    return (x + m - 1) // m * m


def _choose_m_tiling(M):
    """Pick (padded M, tile m).  >=2 parallel blocks only when M is big enough."""
    M8 = _round_up(max(M, 1), 8)
    if M8 < 128:
        return M8, M8                      # one block, no padded zero rows
    tm = min(256, _round_up(M8 // 2, 8))   # 2+ blocks -> megacore sharding (v7x)
    return _round_up(M8, tm), tm


# ----------------------------- Pallas kernels ------------------------------

def _conv_mm_kernel(p_ref, w_ref, sb_ref, o_ref, *, relu):
    """conv-as-matmul with fused BN scale/bias (+ ReLU); no residual input."""
    acc = jnp.dot(p_ref[...], w_ref[...], preferred_element_type=jnp.float32)
    y = acc * sb_ref[0:1, :] + sb_ref[1:2, :]
    if relu:
        y = jnp.maximum(y, 0.0)
    o_ref[...] = y.astype(o_ref.dtype)


def _conv_mm_res_kernel(p_ref, w_ref, sb_ref, r_ref, o_ref, *, relu):
    """Same as above with a fused residual add before the ReLU."""
    acc = jnp.dot(p_ref[...], w_ref[...], preferred_element_type=jnp.float32)
    y = acc * sb_ref[0:1, :] + sb_ref[1:2, :] + r_ref[...].astype(jnp.float32)
    if relu:
        y = jnp.maximum(y, 0.0)
    o_ref[...] = y.astype(o_ref.dtype)


def _gap_kernel(x_ref, o_ref):
    """Global average pool: mean over the flattened spatial axis."""
    o_ref[...] = jnp.mean(x_ref[...].astype(jnp.float32), axis=1).astype(o_ref.dtype)


def matmul_bn_act(patches, weights, scale, bias, residual, relu):
    """out = act((patches @ weights) * scale + bias [+ residual]) via Pallas."""
    M, K = patches.shape
    _, N = weights.shape

    Mp, tm = _choose_m_tiling(M)
    Kp = _round_up(K, 16)                  # sublane / bf16-pack friendly, un-tiled
    if N <= 256:
        Np = _round_up(N, 128)
        tn = Np
    else:
        Np = _round_up(N, 256)             # MXU-shaped tiles if ever scaled up
        tn = 256

    p = jnp.pad(patches.astype(jnp.bfloat16), ((0, Mp - M), (0, Kp - K)))
    w = jnp.pad(weights.astype(jnp.bfloat16), ((0, Kp - K), (0, Np - N)))
    sb = jnp.pad(jnp.stack([scale, bias]).astype(jnp.float32),
                 ((0, 0), (0, Np - N)))

    in_specs = [
        pl.BlockSpec((tm, Kp), lambda i, j: (i, 0)),
        pl.BlockSpec((Kp, tn), lambda i, j: (0, j)),
        pl.BlockSpec((2, tn), lambda i, j: (0, j)),
    ]
    args = [p, w, sb]
    if residual is not None:
        r = jnp.pad(residual.astype(jnp.bfloat16), ((0, Mp - M), (0, Np - N)))
        in_specs.append(pl.BlockSpec((tm, tn), lambda i, j: (i, j)))
        args.append(r)
        kernel = functools.partial(_conv_mm_res_kernel, relu=relu)
    else:
        kernel = functools.partial(_conv_mm_kernel, relu=relu)

    out = pl.pallas_call(
        kernel,
        out_shape=jax.ShapeDtypeStruct((Mp, Np), jnp.bfloat16),
        grid_spec=pltpu.PrefetchScalarGridSpec(
            num_scalar_prefetch=0,
            grid=(Mp // tm, Np // tn),
            in_specs=in_specs,
            out_specs=pl.BlockSpec((tm, tn), lambda i, j: (i, j)),
        ),
        compiler_params=pltpu.CompilerParams(
            dimension_semantics=("parallel", "parallel")),
    )(*args)
    return out[:M, :N]


def global_avg_pool(x_nhwc):
    B, H, W, C = x_nhwc.shape
    x = x_nhwc.reshape(B, H * W, C)
    return pl.pallas_call(
        _gap_kernel,
        out_shape=jax.ShapeDtypeStruct((B, C), jnp.float32),
    )(x)


# ------------------------------ glue (im2col etc.) --------------------------

def im2col(x, kh, kw, stride, pad):
    """x: NHWC -> patches [B, Ho, Wo, kh*kw*C] (row-major over (dy, dx, c))."""
    B, H, W, C = x.shape
    xp = jnp.pad(x, ((0, 0), (pad, pad), (pad, pad), (0, 0)))
    Ho = (H + 2 * pad - kh) // stride + 1
    Wo = (W + 2 * pad - kw) // stride + 1
    cols = []
    for dy in range(kh):
        for dx in range(kw):
            cols.append(xp[:, dy:dy + stride * Ho:stride,
                           dx:dx + stride * Wo:stride, :])
    return jnp.concatenate(cols, axis=-1)


def conv_bn(x, w, bn, stride, pad, relu, residual=None):
    scale, bias = bn
    B, H, W, Cin = x.shape
    kh, kw, _, Cout = w.shape
    patches = im2col(x, kh, kw, stride, pad)
    Ho, Wo = patches.shape[1], patches.shape[2]
    M = B * Ho * Wo
    p2 = patches.reshape(M, kh * kw * Cin)
    w2 = w.reshape(kh * kw * Cin, Cout)
    r2 = None if residual is None else residual.reshape(M, Cout)
    out = matmul_bn_act(p2, w2, scale, bias, r2, relu)
    return out.reshape(B, Ho, Wo, Cout)


def basic_block(x, blk):
    stride = blk['stride']
    if 'wd' in blk:
        identity = conv_bn(x, blk['wd'], blk['bnd'], stride, 0, relu=False)
    else:
        identity = x
    y = conv_bn(x, blk['w1'], blk['bn1'], stride, 1, relu=True)
    # relu(bn2(conv2(y)) + identity), all fused in the matmul epilogue
    y = conv_bn(y, blk['w2'], blk['bn2'], 1, 1, relu=True, residual=identity)
    return y


# ------------------------------ parameters ---------------------------------

def _conv_init(key, kh, kw, cin, cout):
    fan_in = kh * kw * cin
    return jax.random.normal(key, (kh, kw, cin, cout), jnp.float32) * (2.0 / fan_in) ** 0.5


def _bn_init(key, c, eps=1e-5):
    k1, k2, k3, k4 = jax.random.split(key, 4)
    gamma = 1.0 + 0.1 * jax.random.normal(k1, (c,), jnp.float32)
    beta = 0.1 * jax.random.normal(k2, (c,), jnp.float32)
    mean = 0.1 * jax.random.normal(k3, (c,), jnp.float32)
    var = jax.random.uniform(k4, (c,), jnp.float32, minval=0.5, maxval=1.5)
    scale = gamma / jnp.sqrt(var + eps)
    bias = beta - mean * scale
    return scale, bias


def init_resnet34_params(key, base=8, blocks=(3, 4, 6, 3)):
    keys = iter(jax.random.split(key, 256))
    params = {
        'stem_w': _conv_init(next(keys), 7, 7, 3, base),
        'stem_bn': _bn_init(next(keys), base),
        'stages': [],
    }
    in_ch = base
    for s_idx, (nb, mult) in enumerate(zip(blocks, (1, 2, 4, 8))):
        out_ch = base * mult
        stage_stride = 1 if s_idx == 0 else 2
        stage = []
        for b in range(nb):
            st = stage_stride if b == 0 else 1
            blk = {
                'stride': st,
                'w1': _conv_init(next(keys), 3, 3, in_ch, out_ch),
                'bn1': _bn_init(next(keys), out_ch),
                'w2': _conv_init(next(keys), 3, 3, out_ch, out_ch),
                'bn2': _bn_init(next(keys), out_ch),
            }
            if st != 1 or in_ch != out_ch:
                blk['wd'] = _conv_init(next(keys), 1, 1, in_ch, out_ch)
                blk['bnd'] = _bn_init(next(keys), out_ch)
            stage.append(blk)
            in_ch = out_ch
        params['stages'].append(stage)
    return params


# ------------------------------ forward pass --------------------------------

def image_encoder_forward(params, images_nchw, resize_hw=32):
    """Mirrors ImageEncoder.forward: preprocess + resnet (no fc) -> features."""
    # preprocess_image: Resize + ToTensor + Normalize (glue in plain JAX)
    # TODO(synk): torchvision Resize uses PIL bilinear w/ antialias (target 224);
    # approximated with jax.image.resize bilinear at a small target size.
    B = images_nchw.shape[0]
    x = jax.image.resize(images_nchw, (B, 3, resize_hw, resize_hw), method='bilinear')
    x = (x - IMAGENET_MEAN.reshape(1, 3, 1, 1)) / IMAGENET_STD.reshape(1, 3, 1, 1)
    x = jnp.transpose(x, (0, 2, 3, 1))  # NCHW -> NHWC

    # stem: conv7x7/2 + bn + relu (Pallas), maxpool3x3/2 (XLA glue)
    x = conv_bn(x, params['stem_w'], params['stem_bn'], stride=2, pad=3, relu=True)
    x = jax.lax.reduce_window(x, jnp.array(-jnp.inf, x.dtype), jax.lax.max,
                              (1, 3, 3, 1), (1, 2, 2, 1),
                              [(0, 0), (1, 1), (1, 1), (0, 0)])

    for stage in params['stages']:
        for blk in stage:
            x = basic_block(x, blk)

    B_, H_, W_, C_ = x.shape
    if H_ * W_ == 1:
        feat = x.reshape(B_, C_).astype(jnp.float32)   # GAP over 1x1 == reshape
    else:
        feat = global_avg_pool(x)                      # [B, C_final]
    return feat[:, :, None, None]                      # (B, C, 1, 1), matching resnet avgpool


if __name__ == "__main__":
    key = jax.random.PRNGKey(0)
    k_param, k_img = jax.random.split(key)

    params = init_resnet34_params(k_param, base=8)

    # synthetic batch_dict['images']: NCHW float images in [0, 1]
    images = jax.random.uniform(k_img, (2, 3, 16, 16), dtype=jnp.float32)
    batch_dict = {'images': images}

    fwd = jax.jit(lambda img: image_encoder_forward(params, img))
    feats = fwd(batch_dict['images'])
    batch_dict['image_features'] = feats
    jax.block_until_ready(feats)

    assert feats.shape == (2, 64, 1, 1), feats.shape
    assert bool(jnp.all(jnp.isfinite(feats)))
    print("KERNEL_OK")
</pallas_src>

<mosaic_0001>
module attributes {stable_mosaic.version = 11 : i64} {
  func.func @_conv_mm_kernel(%arg0: i32, %arg1: i32, %arg2: memref<256x160xbf16, #tpu.memory_space<vmem>>, %arg3: memref<160x128xbf16, #tpu.memory_space<vmem>>, %arg4: memref<2x128xf32, #tpu.memory_space<vmem>>, %arg5: memref<256x128xbf16, #tpu.memory_space<vmem>>) attributes {dimension_semantics = [#tpu.dimension_semantics<parallel>, #tpu.dimension_semantics<parallel>], iteration_bounds = array<i64: 2, 1>, scalar_prefetch = 0 : i64, scratch_operands = 0 : i64, tpu.core_type = #tpu.core_type<tc>, window_params = [{transform_indices = @transform_0, window_bounds = array<i64: 256, 160>}, {transform_indices = @transform_1, window_bounds = array<i64: 160, 128>}, {transform_indices = @transform_2, window_bounds = array<i64: 2, 128>}, {transform_indices = @transform_3, window_bounds = array<i64: 256, 128>}]} {
    %c0 = arith.constant 0 : index
    %c0_0 = arith.constant 0 : index
    %0 = vector.load %arg2[%c0, %c0_0] : memref<256x160xbf16, #tpu.memory_space<vmem>>, vector<256x160xbf16>
    %c0_1 = arith.constant 0 : index
    %c0_2 = arith.constant 0 : index
    %1 = vector.load %arg3[%c0_1, %c0_2] : memref<160x128xbf16, #tpu.memory_space<vmem>>, vector<160x128xbf16>
    %cst = arith.constant dense<0.000000e+00> : vector<256x128xf32>
    %2 = tpu.matmul %0, %1, %cst {dimension_numbers = #tpu.dot_dimension_numbers<[1], [0], [0], [1], [0, 0, 1, 1], [], []>} : vector<256x160xbf16>, vector<160x128xbf16>, vector<256x128xf32> -> vector<256x128xf32>
    %c0_3 = arith.constant 0 : index
    %c0_4 = arith.constant 0 : index
    %3 = vector.load %arg4[%c0_3, %c0_4] : memref<2x128xf32, #tpu.memory_space<vmem>>, vector<1x128xf32>
    %4 = vector.broadcast %3 : vector<1x128xf32> to vector<256x128xf32>
    %5 = arith.mulf %2, %4 : vector<256x128xf32>
    %c1 = arith.constant 1 : index
    %c0_5 = arith.constant 0 : index
    %6 = vector.load %arg4[%c1, %c0_5] : memref<2x128xf32, #tpu.memory_space<vmem>>, vector<1x128xf32>
    %7 = vector.broadcast %6 : vector<1x128xf32> to vector<256x128xf32>
    %8 = arith.addf %5, %7 : vector<256x128xf32>
    %cst_6 = arith.constant 0.000000e+00 : f32
    %9 = vector.broadcast %cst_6 : f32 to vector<256x128xf32>
    %10 = arith.maximumf %8, %9 : vector<256x128xf32>
    %11 = arith.truncf %10 : vector<256x128xf32> to vector<256x128xbf16>
    %c0_7 = arith.constant 0 : index
    %c0_8 = arith.constant 0 : index
    %12 = vector.load %arg5[%c0_7, %c0_8] : memref<256x128xbf16, #tpu.memory_space<vmem>>, vector<256x128xbf16>
    tpu.vector_store %arg5[%c0_7, %c0_8], %11 {strides = array<i32>} : memref<256x128xbf16, #tpu.memory_space<vmem>>, vector<256x128xbf16>,
    return
  }
  func.func @transform_0(%arg0: i32, %arg1: i32) -> (i32, i32) {
    %c0_i32 = arith.constant 0 : i32
    %c0_i32_0 = arith.constant 0 : i32
    return %arg0, %c0_i32 : i32, i32
  }
  func.func @transform_1(%arg0: i32, %arg1: i32) -> (i32, i32) {
    %c0_i32 = arith.constant 0 : i32
    %c0_i32_0 = arith.constant 0 : i32
    return %c0_i32, %arg1 : i32, i32
  }
  func.func @transform_2(%arg0: i32, %arg1: i32) -> (i32, i32) {
    %c0_i32 = arith.constant 0 : i32
    %c0_i32_0 = arith.constant 0 : i32
    return %c0_i32, %arg1 : i32, i32
  }
  func.func @transform_3(%arg0: i32, %arg1: i32) -> (i32, i32) {
    %c0_i32 = arith.constant 0 : i32
    return %arg0, %arg1 : i32, i32
  }
}

module attributes {stable_mosaic.version = 11 : i64} {
  func.func @_conv_mm_kernel(%arg0: i32, %arg1: i32, %arg2: memref<64x80xbf16, #tpu.memory_space<vmem>>, %arg3: memref<80x128xbf16, #tpu.memory_space<vmem>>, %arg4: memref<2x128xf32, #tpu.memory_space<vmem>>, %arg5: memref<64x128xbf16, #tpu.memory_space<vmem>>) attributes {dimension_semantics = [#tpu.dimension_semantics<parallel>, #tpu.dimension_semantics<parallel>], iteration_bounds = array<i64: 2, 1>, scalar_prefetch = 0 : i64, scratch_operands = 0 : i64, tpu.core_type = #tpu.core_type<tc>, window_params = [{transform_indices = @transform_0, window_bounds = array<i64: 64, 80>}, {transform_indices = @transform_1, window_bounds = array<i64: 80, 128>}, {transform_indices = @transform_2, window_bounds = array<i64: 2, 128>}, {transform_indices = @transform_3, window_bounds = array<i64: 64, 128>}]} {
    %c0 = arith.constant 0 : index
    %c0_0 = arith.constant 0 : index
    %0 = vector.load %arg2[%c0, %c0_0] : memref<64x80xbf16, #tpu.memory_space<vmem>>, vector<64x80xbf16>
    %c0_1 = arith.constant 0 : index
    %c0_2 = arith.constant 0 : index
    %1 = vector.load %arg3[%c0_1, %c0_2] : memref<80x128xbf16, #tpu.memory_space<vmem>>, vector<80x128xbf16>
    %cst = arith.constant dense<0.000000e+00> : vector<64x128xf32>
    %2 = tpu.matmul %0, %1, %cst {dimension_numbers = #tpu.dot_dimension_numbers<[1], [0], [0], [1], [0, 0, 1, 1], [], []>} : vector<64x80xbf16>, vector<80x128xbf16>, vector<64x128xf32> -> vector<64x128xf32>
    %c0_3 = arith.constant 0 : index
    %c0_4 = arith.constant 0 : index
    %3 = vector.load %arg4[%c0_3, %c0_4] : memref<2x128xf32, #tpu.memory_space<vmem>>, vector<1x128xf32>
    %4 = vector.broadcast %3 : vector<1x128xf32> to vector<64x128xf32>
    %5 = arith.mulf %2, %4 : vector<64x128xf32>
    %c1 = arith.constant 1 : index
    %c0_5 = arith.constant 0 : index
    %6 = vector.load %arg4[%c1, %c0_5] : memref<2x128xf32, #tpu.memory_space<vmem>>, vector<1x128xf32>
    %7 = vector.broadcast %6 : vector<1x128xf32> to vector<64x128xf32>
    %8 = arith.addf %5, %7 : vector<64x128xf32>
    %cst_6 = arith.constant 0.000000e+00 : f32
    %9 = vector.broadcast %cst_6 : f32 to vector<64x128xf32>
    %10 = arith.maximumf %8, %9 : vector<64x128xf32>
    %11 = arith.truncf %10 : vector<64x128xf32> to vector<64x128xbf16>
    %c0_7 = arith.constant 0 : index
    %c0_8 = arith.constant 0 : index
    %12 = vector.load %arg5[%c0_7, %c0_8] : memref<64x128xbf16, #tpu.memory_space<vmem>>, vector<64x128xbf16>
    tpu.vector_store %arg5[%c0_7, %c0_8], %11 {strides = array<i32>} : memref<64x128xbf16, #tpu.memory_space<vmem>>, vector<64x128xbf16>,
    return
  }
  func.func @transform_0(%arg0: i32, %arg1: i32) -> (i32, i32) {
    %c0_i32 = arith.constant 0 : i32
    %c0_i32_0 = arith.constant 0 : i32
    return %arg0, %c0_i32 : i32, i32
  }
  func.func @transform_1(%arg0: i32, %arg1: i32) -> (i32, i32) {
    %c0_i32 = arith.constant 0 : i32
    %c0_i32_0 = arith.constant 0 : i32
    return %c0_i32, %arg1 : i32, i32
  }
  func.func @transform_2(%arg0: i32, %arg1: i32) -> (i32, i32) {
    %c0_i32 = arith.constant 0 : i32
    %c0_i32_0 = arith.constant 0 : i32
    return %c0_i32, %arg1 : i32, i32
  }
  func.func @transform_3(%arg0: i32, %arg1: i32) -> (i32, i32) {
    %c0_i32 = arith.constant 0 : i32
    return %arg0, %arg1 : i32, i32
  }
}

module attributes {stable_mosaic.version = 11 : i64} {
  func.func @_conv_mm_res_kernel(%arg0: i32, %arg1: i32, %arg2: memref<64x80xbf16, #tpu.memory_space<vmem>>, %arg3: memref<80x128xbf16, #tpu.memory_space<vmem>>, %arg4: memref<2x128xf32, #tpu.memory_space<vmem>>, %arg5: memref<64x128xbf16, #tpu.memory_space<vmem>>, %arg6: memref<64x128xbf16, #tpu.memory_space<vmem>>) attributes {dimension_semantics = [#tpu.dimension_semantics<parallel>, #tpu.dimension_semantics<parallel>], iteration_bounds = array<i64: 2, 1>, scalar_prefetch = 0 : i64, scratch_operands = 0 : i64, tpu.core_type = #tpu.core_type<tc>, window_params = [{transform_indices = @transform_0, window_bounds = array<i64: 64, 80>}, {transform_indices = @transform_1, window_bounds = array<i64: 80, 128>}, {transform_indices = @transform_2, window_bounds = array<i64: 2, 128>}, {transform_indices = @transform_3, window_bounds = array<i64: 64, 128>}, {transform_indices = @transform_4, window_bounds = array<i64: 64, 128>}]} {
    %c0 = arith.constant 0 : index
    %c0_0 = arith.constant 0 : index
    %0 = vector.load %arg2[%c0, %c0_0] : memref<64x80xbf16, #tpu.memory_space<vmem>>, vector<64x80xbf16>
    %c0_1 = arith.constant 0 : index
    %c0_2 = arith.constant 0 : index
    %1 = vector.load %arg3[%c0_1, %c0_2] : memref<80x128xbf16, #tpu.memory_space<vmem>>, vector<80x128xbf16>
    %cst = arith.constant dense<0.000000e+00> : vector<64x128xf32>
    %2 = tpu.matmul %0, %1, %cst {dimension_numbers = #tpu.dot_dimension_numbers<[1], [0], [0], [1], [0, 0, 1, 1], [], []>} : vector<64x80xbf16>, vector<80x128xbf16>, vector<64x128xf32> -> vector<64x128xf32>
    %c0_3 = arith.constant 0 : index
    %c0_4 = arith.constant 0 : index
    %3 = vector.load %arg4[%c0_3, %c0_4] : memref<2x128xf32, #tpu.memory_space<vmem>>, vector<1x128xf32>
    %4 = vector.broadcast %3 : vector<1x128xf32> to vector<64x128xf32>
    %5 = arith.mulf %2, %4 : vector<64x128xf32>
    %c1 = arith.constant 1 : index
    %c0_5 = arith.constant 0 : index
    %6 = vector.load %arg4[%c1, %c0_5] : memref<2x128xf32, #tpu.memory_space<vmem>>, vector<1x128xf32>
    %7 = vector.broadcast %6 : vector<1x128xf32> to vector<64x128xf32>
    %8 = arith.addf %5, %7 : vector<64x128xf32>
    %c0_6 = arith.constant 0 : index
    %c0_7 = arith.constant 0 : index
    %9 = vector.load %arg5[%c0_6, %c0_7] : memref<64x128xbf16, #tpu.memory_space<vmem>>, vector<64x128xbf16>
    %10 = arith.extf %9 : vector<64x128xbf16> to vector<64x128xf32>
    %11 = arith.addf %8, %10 : vector<64x128xf32>
    %cst_8 = arith.constant 0.000000e+00 : f32
    %12 = vector.broadcast %cst_8 : f32 to vector<64x128xf32>
    %13 = arith.maximumf %11, %12 : vector<64x128xf32>
    %14 = arith.truncf %13 : vector<64x128xf32> to vector<64x128xbf16>
    %c0_9 = arith.constant 0 : index
    %c0_10 = arith.constant 0 : index
    %15 = vector.load %arg6[%c0_9, %c0_10] : memref<64x128xbf16, #tpu.memory_space<vmem>>, vector<64x128xbf16>
    tpu.vector_store %arg6[%c0_9, %c0_10], %14 {strides = array<i32>} : memref<64x128xbf16, #tpu.memory_space<vmem>>, vector<64x128xbf16>,
    return
  }
  func.func @transform_0(%arg0: i32, %arg1: i32) -> (i32, i32) {
    %c0_i32 = arith.constant 0 : i32
    %c0_i32_0 = arith.constant 0 : i32
    return %arg0, %c0_i32 : i32, i32
  }
  func.func @transform_1(%arg0: i32, %arg1: i32) -> (i32, i32) {
    %c0_i32 = arith.constant 0 : i32
    %c0_i32_0 = arith.constant 0 : i32
    return %c0_i32, %arg1 : i32, i32
  }
  func.func @transform_2(%arg0: i32, %arg1: i32) -> (i32, i32) {
    %c0_i32 = arith.constant 0 : i32
    %c0_i32_0 = arith.constant 0 : i32
    return %c0_i32, %arg1 : i32, i32
  }
  func.func @transform_3(%arg0: i32, %arg1: i32) -> (i32, i32) {
    %c0_i32 = arith.constant 0 : i32
    return %arg0, %arg1 : i32, i32
  }
  func.func @transform_4(%arg0: i32, %arg1: i32) -> (i32, i32) {
    %c0_i32 = arith.constant 0 : i32
    return %arg0, %arg1 : i32, i32
  }
}

module attributes {stable_mosaic.version = 11 : i64} {
  func.func @_conv_mm_kernel(%arg0: i32, %arg1: i32, %arg2: memref<32x80xbf16, #tpu.memory_space<vmem>>, %arg3: memref<80x128xbf16, #tpu.memory_space<vmem>>, %arg4: memref<2x128xf32, #tpu.memory_space<vmem>>, %arg5: memref<32x128xbf16, #tpu.memory_space<vmem>>) attributes {dimension_semantics = [#tpu.dimension_semantics<parallel>, #tpu.dimension_semantics<parallel>], iteration_bounds = array<i64: 1, 1>, scalar_prefetch = 0 : i64, scratch_operands = 0 : i64, tpu.core_type = #tpu.core_type<tc>, window_params = [{transform_indices = @transform_0, window_bounds = array<i64: 32, 80>}, {transform_indices = @transform_1, window_bounds = array<i64: 80, 128>}, {transform_indices = @transform_2, window_bounds = array<i64: 2, 128>}, {transform_indices = @transform_3, window_bounds = array<i64: 32, 128>}]} {
    %c0 = arith.constant 0 : index
    %c0_0 = arith.constant 0 : index
    %0 = vector.load %arg2[%c0, %c0_0] : memref<32x80xbf16, #tpu.memory_space<vmem>>, vector<32x80xbf16>
    %c0_1 = arith.constant 0 : index
    %c0_2 = arith.constant 0 : index
    %1 = vector.load %arg3[%c0_1, %c0_2] : memref<80x128xbf16, #tpu.memory_space<vmem>>, vector<80x128xbf16>
    %cst = arith.constant dense<0.000000e+00> : vector<32x128xf32>
    %2 = tpu.matmul %0, %1, %cst {dimension_numbers = #tpu.dot_dimension_numbers<[1], [0], [0], [1], [0, 0, 1, 1], [], []>} : vector<32x80xbf16>, vector<80x128xbf16>, vector<32x128xf32> -> vector<32x128xf32>
    %c0_3 = arith.constant 0 : index
    %c0_4 = arith.constant 0 : index
    %3 = vector.load %arg4[%c0_3, %c0_4] : memref<2x128xf32, #tpu.memory_space<vmem>>, vector<1x128xf32>
    %4 = vector.broadcast %3 : vector<1x128xf32> to vector<32x128xf32>
    %5 = arith.mulf %2, %4 : vector<32x128xf32>
    %c1 = arith.constant 1 : index
    %c0_5 = arith.constant 0 : index
    %6 = vector.load %arg4[%c1, %c0_5] : memref<2x128xf32, #tpu.memory_space<vmem>>, vector<1x128xf32>
    %7 = vector.broadcast %6 : vector<1x128xf32> to vector<32x128xf32>
    %8 = arith.addf %5, %7 : vector<32x128xf32>
    %cst_6 = arith.constant 0.000000e+00 : f32
    %9 = vector.broadcast %cst_6 : f32 to vector<32x128xf32>
    %10 = arith.maximumf %8, %9 : vector<32x128xf32>
    %11 = arith.truncf %10 : vector<32x128xf32> to vector<32x128xbf16>
    %c0_7 = arith.constant 0 : index
    %c0_8 = arith.constant 0 : index
    %12 = vector.load %arg5[%c0_7, %c0_8] : memref<32x128xbf16, #tpu.memory_space<vmem>>, vector<32x128xbf16>
    tpu.vector_store %arg5[%c0_7, %c0_8], %11 {strides = array<i32>} : memref<32x128xbf16, #tpu.memory_space<vmem>>, vector<32x128xbf16>,
    return
  }
  func.func @transform_0(%arg0: i32, %arg1: i32) -> (i32, i32) {
    %c0_i32 = arith.constant 0 : i32
    %c0_i32_0 = arith.constant 0 : i32
    return %arg0, %c0_i32 : i32, i32
  }
  func.func @transform_1(%arg0: i32, %arg1: i32) -> (i32, i32) {
    %c0_i32 = arith.constant 0 : i32
    %c0_i32_0 = arith.constant 0 : i32
    return %c0_i32, %arg1 : i32, i32
  }
  func.func @transform_2(%arg0: i32, %arg1: i32) -> (i32, i32) {
    %c0_i32 = arith.constant 0 : i32
    %c0_i32_0 = arith.constant 0 : i32
    return %c0_i32, %arg1 : i32, i32
  }
  func.func @transform_3(%arg0: i32, %arg1: i32) -> (i32, i32) {
    %c0_i32 = arith.constant 0 : i32
    return %arg0, %arg1 : i32, i32
  }
}

module attributes {stable_mosaic.version = 11 : i64} {
  func.func @_conv_mm_kernel(%arg0: i32, %arg1: i32, %arg2: memref<32x16xbf16, #tpu.memory_space<vmem>>, %arg3: memref<16x128xbf16, #tpu.memory_space<vmem>>, %arg4: memref<2x128xf32, #tpu.memory_space<vmem>>, %arg5: memref<32x128xbf16, #tpu.memory_space<vmem>>) attributes {dimension_semantics = [#tpu.dimension_semantics<parallel>, #tpu.dimension_semantics<parallel>], iteration_bounds = array<i64: 1, 1>, scalar_prefetch = 0 : i64, scratch_operands = 0 : i64, tpu.core_type = #tpu.core_type<tc>, window_params = [{transform_indices = @transform_0, window_bounds = array<i64: 32, 16>}, {transform_indices = @transform_1, window_bounds = array<i64: 16, 128>}, {transform_indices = @transform_2, window_bounds = array<i64: 2, 128>}, {transform_indices = @transform_3, window_bounds = array<i64: 32, 128>}]} {
    %c0 = arith.constant 0 : index
    %c0_0 = arith.constant 0 : index
    %0 = vector.load %arg2[%c0, %c0_0] : memref<32x16xbf16, #tpu.memory_space<vmem>>, vector<32x16xbf16>
    %c0_1 = arith.constant 0 : index
    %c0_2 = arith.constant 0 : index
    %1 = vector.load %arg3[%c0_1, %c0_2] : memref<16x128xbf16, #tpu.memory_space<vmem>>, vector<16x128xbf16>
    %cst = arith.constant dense<0.000000e+00> : vector<32x128xf32>
    %2 = tpu.matmul %0, %1, %cst {dimension_numbers = #tpu.dot_dimension_numbers<[1], [0], [0], [1], [0, 0, 1, 1], [], []>} : vector<32x16xbf16>, vector<16x128xbf16>, vector<32x128xf32> -> vector<32x128xf32>
    %c0_3 = arith.constant 0 : index
    %c0_4 = arith.constant 0 : index
    %3 = vector.load %arg4[%c0_3, %c0_4] : memref<2x128xf32, #tpu.memory_space<vmem>>, vector<1x128xf32>
    %4 = vector.broadcast %3 : vector<1x128xf32> to vector<32x128xf32>
    %5 = arith.mulf %2, %4 : vector<32x128xf32>
    %c1 = arith.constant 1 : index
    %c0_5 = arith.constant 0 : index
    %6 = vector.load %arg4[%c1, %c0_5] : memref<2x128xf32, #tpu.memory_space<vmem>>, vector<1x128xf32>
    %7 = vector.broadcast %6 : vector<1x128xf32> to vector<32x128xf32>
    %8 = arith.addf %5, %7 : vector<32x128xf32>
    %9 = arith.truncf %8 : vector<32x128xf32> to vector<32x128xbf16>
    %c0_6 = arith.constant 0 : index
    %c0_7 = arith.constant 0 : index
    %10 = vector.load %arg5[%c0_6, %c0_7] : memref<32x128xbf16, #tpu.memory_space<vmem>>, vector<32x128xbf16>
    tpu.vector_store %arg5[%c0_6, %c0_7], %9 {strides = array<i32>} : memref<32x128xbf16, #tpu.memory_space<vmem>>, vector<32x128xbf16>,
    return
  }
  func.func @transform_0(%arg0: i32, %arg1: i32) -> (i32, i32) {
    %c0_i32 = arith.constant 0 : i32
    %c0_i32_0 = arith.constant 0 : i32
    return %arg0, %c0_i32 : i32, i32
  }
  func.func @transform_1(%arg0: i32, %arg1: i32) -> (i32, i32) {
    %c0_i32 = arith.constant 0 : i32
    %c0_i32_0 = arith.constant 0 : i32
    return %c0_i32, %arg1 : i32, i32
  }
  func.func @transform_2(%arg0: i32, %arg1: i32) -> (i32, i32) {
    %c0_i32 = arith.constant 0 : i32
    %c0_i32_0 = arith.constant 0 : i32
    return %c0_i32, %arg1 : i32, i32
  }
  func.func @transform_3(%arg0: i32, %arg1: i32) -> (i32, i32) {
    %c0_i32 = arith.constant 0 : i32
    return %arg0, %arg1 : i32, i32
  }
}

module attributes {stable_mosaic.version = 11 : i64} {
  func.func @_conv_mm_res_kernel(%arg0: i32, %arg1: i32, %arg2: memref<32x144xbf16, #tpu.memory_space<vmem>>, %arg3: memref<144x128xbf16, #tpu.memory_space<vmem>>, %arg4: memref<2x128xf32, #tpu.memory_space<vmem>>, %arg5: memref<32x128xbf16, #tpu.memory_space<vmem>>, %arg6: memref<32x128xbf16, #tpu.memory_space<vmem>>) attributes {dimension_semantics = [#tpu.dimension_semantics<parallel>, #tpu.dimension_semantics<parallel>], iteration_bounds = array<i64: 1, 1>, scalar_prefetch = 0 : i64, scratch_operands = 0 : i64, tpu.core_type = #tpu.core_type<tc>, window_params = [{transform_indices = @transform_0, window_bounds = array<i64: 32, 144>}, {transform_indices = @transform_1, window_bounds = array<i64: 144, 128>}, {transform_indices = @transform_2, window_bounds = array<i64: 2, 128>}, {transform_indices = @transform_3, window_bounds = array<i64: 32, 128>}, {transform_indices = @transform_4, window_bounds = array<i64: 32, 128>}]} {
    %c0 = arith.constant 0 : index
    %c0_0 = arith.constant 0 : index
    %0 = vector.load %arg2[%c0, %c0_0] : memref<32x144xbf16, #tpu.memory_space<vmem>>, vector<32x144xbf16>
    %c0_1 = arith.constant 0 : index
    %c0_2 = arith.constant 0 : index
    %1 = vector.load %arg3[%c0_1, %c0_2] : memref<144x128xbf16, #tpu.memory_space<vmem>>, vector<144x128xbf16>
    %cst = arith.constant dense<0.000000e+00> : vector<32x128xf32>
    %2 = tpu.matmul %0, %1, %cst {dimension_numbers = #tpu.dot_dimension_numbers<[1], [0], [0], [1], [0, 0, 1, 1], [], []>} : vector<32x144xbf16>, vector<144x128xbf16>, vector<32x128xf32> -> vector<32x128xf32>
    %c0_3 = arith.constant 0 : index
    %c0_4 = arith.constant 0 : index
    %3 = vector.load %arg4[%c0_3, %c0_4] : memref<2x128xf32, #tpu.memory_space<vmem>>, vector<1x128xf32>
    %4 = vector.broadcast %3 : vector<1x128xf32> to vector<32x128xf32>
    %5 = arith.mulf %2, %4 : vector<32x128xf32>
    %c1 = arith.constant 1 : index
    %c0_5 = arith.constant 0 : index
    %6 = vector.load %arg4[%c1, %c0_5] : memref<2x128xf32, #tpu.memory_space<vmem>>, vector<1x128xf32>
    %7 = vector.broadcast %6 : vector<1x128xf32> to vector<32x128xf32>
    %8 = arith.addf %5, %7 : vector<32x128xf32>
    %c0_6 = arith.constant 0 : index
    %c0_7 = arith.constant 0 : index
    %9 = vector.load %arg5[%c0_6, %c0_7] : memref<32x128xbf16, #tpu.memory_space<vmem>>, vector<32x128xbf16>
    %10 = arith.extf %9 : vector<32x128xbf16> to vector<32x128xf32>
    %11 = arith.addf %8, %10 : vector<32x128xf32>
    %cst_8 = arith.constant 0.000000e+00 : f32
    %12 = vector.broadcast %cst_8 : f32 to vector<32x128xf32>
    %13 = arith.maximumf %11, %12 : vector<32x128xf32>
    %14 = arith.truncf %13 : vector<32x128xf32> to vector<32x128xbf16>
    %c0_9 = arith.constant 0 : index
    %c0_10 = arith.constant 0 : index
    %15 = vector.load %arg6[%c0_9, %c0_10] : memref<32x128xbf16, #tpu.memory_space<vmem>>, vector<32x128xbf16>
    tpu.vector_store %arg6[%c0_9, %c0_10], %14 {strides = array<i32>} : memref<32x128xbf16, #tpu.memory_space<vmem>>, vector<32x128xbf16>,
    return
  }
  func.func @transform_0(%arg0: i32, %arg1: i32) -> (i32, i32) {
    %c0_i32 = arith.constant 0 : i32
    %c0_i32_0 = arith.constant 0 : i32
    return %arg0, %c0_i32 : i32, i32
  }
  func.func @transform_1(%arg0: i32, %arg1: i32) -> (i32, i32) {
    %c0_i32 = arith.constant 0 : i32
    %c0_i32_0 = arith.constant 0 : i32
    return %c0_i32, %arg1 : i32, i32
  }
  func.func @transform_2(%arg0: i32, %arg1: i32) -> (i32, i32) {
    %c0_i32 = arith.constant 0 : i32
    %c0_i32_0 = arith.constant 0 : i32
    return %c0_i32, %arg1 : i32, i32
  }
  func.func @transform_3(%arg0: i32, %arg1: i32) -> (i32, i32) {
    %c0_i32 = arith.constant 0 : i32
    return %arg0, %arg1 : i32, i32
  }
  func.func @transform_4(%arg0: i32, %arg1: i32) -> (i32, i32) {
    %c0_i32 = arith.constant 0 : i32
    return %arg0, %arg1 : i32, i32
  }
}

module attributes {stable_mosaic.version = 11 : i64} {
  func.func @_conv_mm_kernel(%arg0: i32, %arg1: i32, %arg2: memref<32x144xbf16, #tpu.memory_space<vmem>>, %arg3: memref<144x128xbf16, #tpu.memory_space<vmem>>, %arg4: memref<2x128xf32, #tpu.memory_space<vmem>>, %arg5: memref<32x128xbf16, #tpu.memory_space<vmem>>) attributes {dimension_semantics = [#tpu.dimension_semantics<parallel>, #tpu.dimension_semantics<parallel>], iteration_bounds = array<i64: 1, 1>, scalar_prefetch = 0 : i64, scratch_operands = 0 : i64, tpu.core_type = #tpu.core_type<tc>, window_params = [{transform_indices = @transform_0, window_bounds = array<i64: 32, 144>}, {transform_indices = @transform_1, window_bounds = array<i64: 144, 128>}, {transform_indices = @transform_2, window_bounds = array<i64: 2, 128>}, {transform_indices = @transform_3, window_bounds = array<i64: 32, 128>}]} {
    %c0 = arith.constant 0 : index
    %c0_0 = arith.constant 0 : index
    %0 = vector.load %arg2[%c0, %c0_0] : memref<32x144xbf16, #tpu.memory_space<vmem>>, vector<32x144xbf16>
    %c0_1 = arith.constant 0 : index
    %c0_2 = arith.constant 0 : index
    %1 = vector.load %arg3[%c0_1, %c0_2] : memref<144x128xbf16, #tpu.memory_space<vmem>>, vector<144x128xbf16>
    %cst = arith.constant dense<0.000000e+00> : vector<32x128xf32>
    %2 = tpu.matmul %0, %1, %cst {dimension_numbers = #tpu.dot_dimension_numbers<[1], [0], [0], [1], [0, 0, 1, 1], [], []>} : vector<32x144xbf16>, vector<144x128xbf16>, vector<32x128xf32> -> vector<32x128xf32>
    %c0_3 = arith.constant 0 : index
    %c0_4 = arith.constant 0 : index
    %3 = vector.load %arg4[%c0_3, %c0_4] : memref<2x128xf32, #tpu.memory_space<vmem>>, vector<1x128xf32>
    %4 = vector.broadcast %3 : vector<1x128xf32> to vector<32x128xf32>
    %5 = arith.mulf %2, %4 : vector<32x128xf32>
    %c1 = arith.constant 1 : index
    %c0_5 = arith.constant 0 : index
    %6 = vector.load %arg4[%c1, %c0_5] : memref<2x128xf32, #tpu.memory_space<vmem>>, vector<1x128xf32>
    %7 = vector.broadcast %6 : vector<1x128xf32> to vector<32x128xf32>
    %8 = arith.addf %5, %7 : vector<32x128xf32>
    %cst_6 = arith.constant 0.000000e+00 : f32
    %9 = vector.broadcast %cst_6 : f32 to vector<32x128xf32>
    %10 = arith.maximumf %8, %9 : vector<32x128xf32>
    %11 = arith.truncf %10 : vector<32x128xf32> to vector<32x128xbf16>
    %c0_7 = arith.constant 0 : index
    %c0_8 = arith.constant 0 : index
    %12 = vector.load %arg5[%c0_7, %c0_8] : memref<32x128xbf16, #tpu.memory_space<vmem>>, vector<32x128xbf16>
    tpu.vector_store %arg5[%c0_7, %c0_8], %11 {strides = array<i32>} : memref<32x128xbf16, #tpu.memory_space<vmem>>, vector<32x128xbf16>,
    return
  }
  func.func @transform_0(%arg0: i32, %arg1: i32) -> (i32, i32) {
    %c0_i32 = arith.constant 0 : i32
    %c0_i32_0 = arith.constant 0 : i32
    return %arg0, %c0_i32 : i32, i32
  }
  func.func @transform_1(%arg0: i32, %arg1: i32) -> (i32, i32) {
    %c0_i32 = arith.constant 0 : i32
    %c0_i32_0 = arith.constant 0 : i32
    return %c0_i32, %arg1 : i32, i32
  }
  func.func @transform_2(%arg0: i32, %arg1: i32) -> (i32, i32) {
    %c0_i32 = arith.constant 0 : i32
    %c0_i32_0 = arith.constant 0 : i32
    return %c0_i32, %arg1 : i32, i32
  }
  func.func @transform_3(%arg0: i32, %arg1: i32) -> (i32, i32) {
    %c0_i32 = arith.constant 0 : i32
    return %arg0, %arg1 : i32, i32
  }
}

module attributes {stable_mosaic.version = 11 : i64} {
  func.func @_conv_mm_kernel(%arg0: i32, %arg1: i32, %arg2: memref<8x144xbf16, #tpu.memory_space<vmem>>, %arg3: memref<144x128xbf16, #tpu.memory_space<vmem>>, %arg4: memref<2x128xf32, #tpu.memory_space<vmem>>, %arg5: memref<8x128xbf16, #tpu.memory_space<vmem>>) attributes {dimension_semantics = [#tpu.dimension_semantics<parallel>, #tpu.dimension_semantics<parallel>], iteration_bounds = array<i64: 1, 1>, scalar_prefetch = 0 : i64, scratch_operands = 0 : i64, tpu.core_type = #tpu.core_type<tc>, window_params = [{transform_indices = @transform_0, window_bounds = array<i64: 8, 144>}, {transform_indices = @transform_1, window_bounds = array<i64: 144, 128>}, {transform_indices = @transform_2, window_bounds = array<i64: 2, 128>}, {transform_indices = @transform_3, window_bounds = array<i64: 8, 128>}]} {
    %c0 = arith.constant 0 : index
    %c0_0 = arith.constant 0 : index
    %0 = vector.load %arg2[%c0, %c0_0] : memref<8x144xbf16, #tpu.memory_space<vmem>>, vector<8x144xbf16>
    %c0_1 = arith.constant 0 : index
    %c0_2 = arith.constant 0 : index
    %1 = vector.load %arg3[%c0_1, %c0_2] : memref<144x128xbf16, #tpu.memory_space<vmem>>, vector<144x128xbf16>
    %cst = arith.constant dense<0.000000e+00> : vector<8x128xf32>
    %2 = tpu.matmul %0, %1, %cst {dimension_numbers = #tpu.dot_dimension_numbers<[1], [0], [0], [1], [0, 0, 1, 1], [], []>} : vector<8x144xbf16>, vector<144x128xbf16>, vector<8x128xf32> -> vector<8x128xf32>
    %c0_3 = arith.constant 0 : index
    %c0_4 = arith.constant 0 : index
    %3 = vector.load %arg4[%c0_3, %c0_4] : memref<2x128xf32, #tpu.memory_space<vmem>>, vector<1x128xf32>
    %4 = vector.broadcast %3 : vector<1x128xf32> to vector<8x128xf32>
    %5 = arith.mulf %2, %4 : vector<8x128xf32>
    %c1 = arith.constant 1 : index
    %c0_5 = arith.constant 0 : index
    %6 = vector.load %arg4[%c1, %c0_5] : memref<2x128xf32, #tpu.memory_space<vmem>>, vector<1x128xf32>
    %7 = vector.broadcast %6 : vector<1x128xf32> to vector<8x128xf32>
    %8 = arith.addf %5, %7 : vector<8x128xf32>
    %cst_6 = arith.constant 0.000000e+00 : f32
    %9 = vector.broadcast %cst_6 : f32 to vector<8x128xf32>
    %10 = arith.maximumf %8, %9 : vector<8x128xf32>
    %11 = arith.truncf %10 : vector<8x128xf32> to vector<8x128xbf16>
    %c0_7 = arith.constant 0 : index
    %c0_8 = arith.constant 0 : index
    %12 = vector.load %arg5[%c0_7, %c0_8] : memref<8x128xbf16, #tpu.memory_space<vmem>>, vector<8x128xbf16>
    tpu.vector_store %arg5[%c0_7, %c0_8], %11 {strides = array<i32>} : memref<8x128xbf16, #tpu.memory_space<vmem>>, vector<8x128xbf16>,
    return
  }
  func.func @transform_0(%arg0: i32, %arg1: i32) -> (i32, i32) {
    %c0_i32 = arith.constant 0 : i32
    %c0_i32_0 = arith.constant 0 : i32
    return %arg0, %c0_i32 : i32, i32
  }
  func.func @transform_1(%arg0: i32, %arg1: i32) -> (i32, i32) {
    %c0_i32 = arith.constant 0 : i32
    %c0_i32_0 = arith.constant 0 : i32
    return %c0_i32, %arg1 : i32, i32
  }
  func.func @transform_2(%arg0: i32, %arg1: i32) -> (i32, i32) {
    %c0_i32 = arith.constant 0 : i32
    %c0_i32_0 = arith.constant 0 : i32
    return %c0_i32, %arg1 : i32, i32
  }
  func.func @transform_3(%arg0: i32, %arg1: i32) -> (i32, i32) {
    %c0_i32 = arith.constant 0 : i32
    return %arg0, %arg1 : i32, i32
  }
}

module attributes {stable_mosaic.version = 11 : i64} {
  func.func @_conv_mm_kernel(%arg0: i32, %arg1: i32, %arg2: memref<8x16xbf16, #tpu.memory_space<vmem>>, %arg3: memref<16x128xbf16, #tpu.memory_space<vmem>>, %arg4: memref<2x128xf32, #tpu.memory_space<vmem>>, %arg5: memref<8x128xbf16, #tpu.memory_space<vmem>>) attributes {dimension_semantics = [#tpu.dimension_semantics<parallel>, #tpu.dimension_semantics<parallel>], iteration_bounds = array<i64: 1, 1>, scalar_prefetch = 0 : i64, scratch_operands = 0 : i64, tpu.core_type = #tpu.core_type<tc>, window_params = [{transform_indices = @transform_0, window_bounds = array<i64: 8, 16>}, {transform_indices = @transform_1, window_bounds = array<i64: 16, 128>}, {transform_indices = @transform_2, window_bounds = array<i64: 2, 128>}, {transform_indices = @transform_3, window_bounds = array<i64: 8, 128>}]} {
    %c0 = arith.constant 0 : index
    %c0_0 = arith.constant 0 : index
    %0 = vector.load %arg2[%c0, %c0_0] : memref<8x16xbf16, #tpu.memory_space<vmem>>, vector<8x16xbf16>
    %c0_1 = arith.constant 0 : index
    %c0_2 = arith.constant 0 : index
    %1 = vector.load %arg3[%c0_1, %c0_2] : memref<16x128xbf16, #tpu.memory_space<vmem>>, vector<16x128xbf16>
    %cst = arith.constant dense<0.000000e+00> : vector<8x128xf32>
    %2 = tpu.matmul %0, %1, %cst {dimension_numbers = #tpu.dot_dimension_numbers<[1], [0], [0], [1], [0, 0, 1, 1], [], []>} : vector<8x16xbf16>, vector<16x128xbf16>, vector<8x128xf32> -> vector<8x128xf32>
    %c0_3 = arith.constant 0 : index
    %c0_4 = arith.constant 0 : index
    %3 = vector.load %arg4[%c0_3, %c0_4] : memref<2x128xf32, #tpu.memory_space<vmem>>, vector<1x128xf32>
    %4 = vector.broadcast %3 : vector<1x128xf32> to vector<8x128xf32>
    %5 = arith.mulf %2, %4 : vector<8x128xf32>
    %c1 = arith.constant 1 : index
    %c0_5 = arith.constant 0 : index
    %6 = vector.load %arg4[%c1, %c0_5] : memref<2x128xf32, #tpu.memory_space<vmem>>, vector<1x128xf32>
    %7 = vector.broadcast %6 : vector<1x128xf32> to vector<8x128xf32>
    %8 = arith.addf %5, %7 : vector<8x128xf32>
    %9 = arith.truncf %8 : vector<8x128xf32> to vector<8x128xbf16>
    %c0_6 = arith.constant 0 : index
    %c0_7 = arith.constant 0 : index
    %10 = vector.load %arg5[%c0_6, %c0_7] : memref<8x128xbf16, #tpu.memory_space<vmem>>, vector<8x128xbf16>
    tpu.vector_store %arg5[%c0_6, %c0_7], %9 {strides = array<i32>} : memref<8x128xbf16, #tpu.memory_space<vmem>>, vector<8x128xbf16>,
    return
  }
  func.func @transform_0(%arg0: i32, %arg1: i32) -> (i32, i32) {
    %c0_i32 = arith.constant 0 : i32
    %c0_i32_0 = arith.constant 0 : i32
    return %arg0, %c0_i32 : i32, i32
  }
  func.func @transform_1(%arg0: i32, %arg1: i32) -> (i32, i32) {
    %c0_i32 = arith.constant 0 : i32
    %c0_i32_0 = arith.constant 0 : i32
    return %c0_i32, %arg1 : i32, i32
  }
  func.func @transform_2(%arg0: i32, %arg1: i32) -> (i32, i32) {
    %c0_i32 = arith.constant 0 : i32
    %c0_i32_0 = arith.constant 0 : i32
    return %c0_i32, %arg1 : i32, i32
  }
  func.func @transform_3(%arg0: i32, %arg1: i32) -> (i32, i32) {
    %c0_i32 = arith.constant 0 : i32
    return %arg0, %arg1 : i32, i32
  }
}

module attributes {stable_mosaic.version = 11 : i64} {
  func.func @_conv_mm_res_kernel(%arg0: i32, %arg1: i32, %arg2: memref<8x288xbf16, #tpu.memory_space<vmem>>, %arg3: memref<288x128xbf16, #tpu.memory_space<vmem>>, %arg4: memref<2x128xf32, #tpu.memory_space<vmem>>, %arg5: memref<8x128xbf16, #tpu.memory_space<vmem>>, %arg6: memref<8x128xbf16, #tpu.memory_space<vmem>>) attributes {dimension_semantics = [#tpu.dimension_semantics<parallel>, #tpu.dimension_semantics<parallel>], iteration_bounds = array<i64: 1, 1>, scalar_prefetch = 0 : i64, scratch_operands = 0 : i64, tpu.core_type = #tpu.core_type<tc>, window_params = [{transform_indices = @transform_0, window_bounds = array<i64: 8, 288>}, {transform_indices = @transform_1, window_bounds = array<i64: 288, 128>}, {transform_indices = @transform_2, window_bounds = array<i64: 2, 128>}, {transform_indices = @transform_3, window_bounds = array<i64: 8, 128>}, {transform_indices = @transform_4, window_bounds = array<i64: 8, 128>}]} {
    %c0 = arith.constant 0 : index
    %c0_0 = arith.constant 0 : index
    %0 = vector.load %arg2[%c0, %c0_0] : memref<8x288xbf16, #tpu.memory_space<vmem>>, vector<8x288xbf16>
    %c0_1 = arith.constant 0 : index
    %c0_2 = arith.constant 0 : index
    %1 = vector.load %arg3[%c0_1, %c0_2] : memref<288x128xbf16, #tpu.memory_space<vmem>>, vector<288x128xbf16>
    %cst = arith.constant dense<0.000000e+00> : vector<8x128xf32>
    %2 = tpu.matmul %0, %1, %cst {dimension_numbers = #tpu.dot_dimension_numbers<[1], [0], [0], [1], [0, 0, 1, 1], [], []>} : vector<8x288xbf16>, vector<288x128xbf16>, vector<8x128xf32> -> vector<8x128xf32>
    %c0_3 = arith.constant 0 : index
    %c0_4 = arith.constant 0 : index
    %3 = vector.load %arg4[%c0_3, %c0_4] : memref<2x128xf32, #tpu.memory_space<vmem>>, vector<1x128xf32>
    %4 = vector.broadcast %3 : vector<1x128xf32> to vector<8x128xf32>
    %5 = arith.mulf %2, %4 : vector<8x128xf32>
    %c1 = arith.constant 1 : index
    %c0_5 = arith.constant 0 : index
    %6 = vector.load %arg4[%c1, %c0_5] : memref<2x128xf32, #tpu.memory_space<vmem>>, vector<1x128xf32>
    %7 = vector.broadcast %6 : vector<1x128xf32> to vector<8x128xf32>
    %8 = arith.addf %5, %7 : vector<8x128xf32>
    %c0_6 = arith.constant 0 : index
    %c0_7 = arith.constant 0 : index
    %9 = vector.load %arg5[%c0_6, %c0_7] : memref<8x128xbf16, #tpu.memory_space<vmem>>, vector<8x128xbf16>
    %10 = arith.extf %9 : vector<8x128xbf16> to vector<8x128xf32>
    %11 = arith.addf %8, %10 : vector<8x128xf32>
    %cst_8 = arith.constant 0.000000e+00 : f32
    %12 = vector.broadcast %cst_8 : f32 to vector<8x128xf32>
    %13 = arith.maximumf %11, %12 : vector<8x128xf32>
    %14 = arith.truncf %13 : vector<8x128xf32> to vector<8x128xbf16>
    %c0_9 = arith.constant 0 : index
    %c0_10 = arith.constant 0 : index
    %15 = vector.load %arg6[%c0_9, %c0_10] : memref<8x128xbf16, #tpu.memory_space<vmem>>, vector<8x128xbf16>
    tpu.vector_store %arg6[%c0_9, %c0_10], %14 {strides = array<i32>} : memref<8x128xbf16, #tpu.memory_space<vmem>>, vector<8x128xbf16>,
    return
  }
  func.func @transform_0(%arg0: i32, %arg1: i32) -> (i32, i32) {
    %c0_i32 = arith.constant 0 : i32
    %c0_i32_0 = arith.constant 0 : i32
    return %arg0, %c0_i32 : i32, i32
  }
  func.func @transform_1(%arg0: i32, %arg1: i32) -> (i32, i32) {
    %c0_i32 = arith.constant 0 : i32
    %c0_i32_0 = arith.constant 0 : i32
    return %c0_i32, %arg1 : i32, i32
  }
  func.func @transform_2(%arg0: i32, %arg1: i32) -> (i32, i32) {
    %c0_i32 = arith.constant 0 : i32
    %c0_i32_0 = arith.constant 0 : i32
    return %c0_i32, %arg1 : i32, i32
  }
  func.func @transform_3(%arg0: i32, %arg1: i32) -> (i32, i32) {
    %c0_i32 = arith.constant 0 : i32
    return %arg0, %arg1 : i32, i32
  }
  func.func @transform_4(%arg0: i32, %arg1: i32) -> (i32, i32) {
    %c0_i32 = arith.constant 0 : i32
    return %arg0, %arg1 : i32, i32
  }
}

module attributes {stable_mosaic.version = 11 : i64} {
  func.func @_conv_mm_kernel(%arg0: i32, %arg1: i32, %arg2: memref<8x288xbf16, #tpu.memory_space<vmem>>, %arg3: memref<288x128xbf16, #tpu.memory_space<vmem>>, %arg4: memref<2x128xf32, #tpu.memory_space<vmem>>, %arg5: memref<8x128xbf16, #tpu.memory_space<vmem>>) attributes {dimension_semantics = [#tpu.dimension_semantics<parallel>, #tpu.dimension_semantics<parallel>], iteration_bounds = array<i64: 1, 1>, scalar_prefetch = 0 : i64, scratch_operands = 0 : i64, tpu.core_type = #tpu.core_type<tc>, window_params = [{transform_indices = @transform_0, window_bounds = array<i64: 8, 288>}, {transform_indices = @transform_1, window_bounds = array<i64: 288, 128>}, {transform_indices = @transform_2, window_bounds = array<i64: 2, 128>}, {transform_indices = @transform_3, window_bounds = array<i64: 8, 128>}]} {
    %c0 = arith.constant 0 : index
    %c0_0 = arith.constant 0 : index
    %0 = vector.load %arg2[%c0, %c0_0] : memref<8x288xbf16, #tpu.memory_space<vmem>>, vector<8x288xbf16>
    %c0_1 = arith.constant 0 : index
    %c0_2 = arith.constant 0 : index
    %1 = vector.load %arg3[%c0_1, %c0_2] : memref<288x128xbf16, #tpu.memory_space<vmem>>, vector<288x128xbf16>
    %cst = arith.constant dense<0.000000e+00> : vector<8x128xf32>
    %2 = tpu.matmul %0, %1, %cst {dimension_numbers = #tpu.dot_dimension_numbers<[1], [0], [0], [1], [0, 0, 1, 1], [], []>} : vector<8x288xbf16>, vector<288x128xbf16>, vector<8x128xf32> -> vector<8x128xf32>
    %c0_3 = arith.constant 0 : index
    %c0_4 = arith.constant 0 : index
    %3 = vector.load %arg4[%c0_3, %c0_4] : memref<2x128xf32, #tpu.memory_space<vmem>>, vector<1x128xf32>
    %4 = vector.broadcast %3 : vector<1x128xf32> to vector<8x128xf32>
    %5 = arith.mulf %2, %4 : vector<8x128xf32>
    %c1 = arith.constant 1 : index
    %c0_5 = arith.constant 0 : index
    %6 = vector.load %arg4[%c1, %c0_5] : memref<2x128xf32, #tpu.memory_space<vmem>>, vector<1x128xf32>
    %7 = vector.broadcast %6 : vector<1x128xf32> to vector<8x128xf32>
    %8 = arith.addf %5, %7 : vector<8x128xf32>
    %cst_6 = arith.constant 0.000000e+00 : f32
    %9 = vector.broadcast %cst_6 : f32 to vector<8x128xf32>
    %10 = arith.maximumf %8, %9 : vector<8x128xf32>
    %11 = arith.truncf %10 : vector<8x128xf32> to vector<8x128xbf16>
    %c0_7 = arith.constant 0 : index
    %c0_8 = arith.constant 0 : index
    %12 = vector.load %arg5[%c0_7, %c0_8] : memref<8x128xbf16, #tpu.memory_space<vmem>>, vector<8x128xbf16>
    tpu.vector_store %arg5[%c0_7, %c0_8], %11 {strides = array<i32>} : memref<8x128xbf16, #tpu.memory_space<vmem>>, vector<8x128xbf16>,
    return
  }
  func.func @transform_0(%arg0: i32, %arg1: i32) -> (i32, i32) {
    %c0_i32 = arith.constant 0 : i32
    %c0_i32_0 = arith.constant 0 : i32
    return %arg0, %c0_i32 : i32, i32
  }
  func.func @transform_1(%arg0: i32, %arg1: i32) -> (i32, i32) {
    %c0_i32 = arith.constant 0 : i32
    %c0_i32_0 = arith.constant 0 : i32
    return %c0_i32, %arg1 : i32, i32
  }
  func.func @transform_2(%arg0: i32, %arg1: i32) -> (i32, i32) {
    %c0_i32 = arith.constant 0 : i32
    %c0_i32_0 = arith.constant 0 : i32
    return %c0_i32, %arg1 : i32, i32
  }
  func.func @transform_3(%arg0: i32, %arg1: i32) -> (i32, i32) {
    %c0_i32 = arith.constant 0 : i32
    return %arg0, %arg1 : i32, i32
  }
}

module attributes {stable_mosaic.version = 11 : i64} {
  func.func @_conv_mm_kernel(%arg0: i32, %arg1: i32, %arg2: memref<8x32xbf16, #tpu.memory_space<vmem>>, %arg3: memref<32x128xbf16, #tpu.memory_space<vmem>>, %arg4: memref<2x128xf32, #tpu.memory_space<vmem>>, %arg5: memref<8x128xbf16, #tpu.memory_space<vmem>>) attributes {dimension_semantics = [#tpu.dimension_semantics<parallel>, #tpu.dimension_semantics<parallel>], iteration_bounds = array<i64: 1, 1>, scalar_prefetch = 0 : i64, scratch_operands = 0 : i64, tpu.core_type = #tpu.core_type<tc>, window_params = [{transform_indices = @transform_0, window_bounds = array<i64: 8, 32>}, {transform_indices = @transform_1, window_bounds = array<i64: 32, 128>}, {transform_indices = @transform_2, window_bounds = array<i64: 2, 128>}, {transform_indices = @transform_3, window_bounds = array<i64: 8, 128>}]} {
    %c0 = arith.constant 0 : index
    %c0_0 = arith.constant 0 : index
    %0 = vector.load %arg2[%c0, %c0_0] : memref<8x32xbf16, #tpu.memory_space<vmem>>, vector<8x32xbf16>
    %c0_1 = arith.constant 0 : index
    %c0_2 = arith.constant 0 : index
    %1 = vector.load %arg3[%c0_1, %c0_2] : memref<32x128xbf16, #tpu.memory_space<vmem>>, vector<32x128xbf16>
    %cst = arith.constant dense<0.000000e+00> : vector<8x128xf32>
    %2 = tpu.matmul %0, %1, %cst {dimension_numbers = #tpu.dot_dimension_numbers<[1], [0], [0], [1], [0, 0, 1, 1], [], []>} : vector<8x32xbf16>, vector<32x128xbf16>, vector<8x128xf32> -> vector<8x128xf32>
    %c0_3 = arith.constant 0 : index
    %c0_4 = arith.constant 0 : index
    %3 = vector.load %arg4[%c0_3, %c0_4] : memref<2x128xf32, #tpu.memory_space<vmem>>, vector<1x128xf32>
    %4 = vector.broadcast %3 : vector<1x128xf32> to vector<8x128xf32>
    %5 = arith.mulf %2, %4 : vector<8x128xf32>
    %c1 = arith.constant 1 : index
    %c0_5 = arith.constant 0 : index
    %6 = vector.load %arg4[%c1, %c0_5] : memref<2x128xf32, #tpu.memory_space<vmem>>, vector<1x128xf32>
    %7 = vector.broadcast %6 : vector<1x128xf32> to vector<8x128xf32>
    %8 = arith.addf %5, %7 : vector<8x128xf32>
    %9 = arith.truncf %8 : vector<8x128xf32> to vector<8x128xbf16>
    %c0_6 = arith.constant 0 : index
    %c0_7 = arith.constant 0 : index
    %10 = vector.load %arg5[%c0_6, %c0_7] : memref<8x128xbf16, #tpu.memory_space<vmem>>, vector<8x128xbf16>
    tpu.vector_store %arg5[%c0_6, %c0_7], %9 {strides = array<i32>} : memref<8x128xbf16, #tpu.memory_space<vmem>>, vector<8x128xbf16>,
    return
  }
  func.func @transform_0(%arg0: i32, %arg1: i32) -> (i32, i32) {
    %c0_i32 = arith.constant 0 : i32
    %c0_i32_0 = arith.constant 0 : i32
    return %arg0, %c0_i32 : i32, i32
  }
  func.func @transform_1(%arg0: i32, %arg1: i32) -> (i32, i32) {
    %c0_i32 = arith.constant 0 : i32
    %c0_i32_0 = arith.constant 0 : i32
    return %c0_i32, %arg1 : i32, i32
  }
  func.func @transform_2(%arg0: i32, %arg1: i32) -> (i32, i32) {
    %c0_i32 = arith.constant 0 : i32
    %c0_i32_0 = arith.constant 0 : i32
    return %c0_i32, %arg1 : i32, i32
  }
  func.func @transform_3(%arg0: i32, %arg1: i32) -> (i32, i32) {
    %c0_i32 = arith.constant 0 : i32
    return %arg0, %arg1 : i32, i32
  }
}

module attributes {stable_mosaic.version = 11 : i64} {
  func.func @_conv_mm_res_kernel(%arg0: i32, %arg1: i32, %arg2: memref<8x576xbf16, #tpu.memory_space<vmem>>, %arg3: memref<576x128xbf16, #tpu.memory_space<vmem>>, %arg4: memref<2x128xf32, #tpu.memory_space<vmem>>, %arg5: memref<8x128xbf16, #tpu.memory_space<vmem>>, %arg6: memref<8x128xbf16, #tpu.memory_space<vmem>>) attributes {dimension_semantics = [#tpu.dimension_semantics<parallel>, #tpu.dimension_semantics<parallel>], iteration_bounds = array<i64: 1, 1>, scalar_prefetch = 0 : i64, scratch_operands = 0 : i64, tpu.core_type = #tpu.core_type<tc>, window_params = [{transform_indices = @transform_0, window_bounds = array<i64: 8, 576>}, {transform_indices = @transform_1, window_bounds = array<i64: 576, 128>}, {transform_indices = @transform_2, window_bounds = array<i64: 2, 128>}, {transform_indices = @transform_3, window_bounds = array<i64: 8, 128>}, {transform_indices = @transform_4, window_bounds = array<i64: 8, 128>}]} {
    %c0 = arith.constant 0 : index
    %c0_0 = arith.constant 0 : index
    %0 = vector.load %arg2[%c0, %c0_0] : memref<8x576xbf16, #tpu.memory_space<vmem>>, vector<8x576xbf16>
    %c0_1 = arith.constant 0 : index
    %c0_2 = arith.constant 0 : index
    %1 = vector.load %arg3[%c0_1, %c0_2] : memref<576x128xbf16, #tpu.memory_space<vmem>>, vector<576x128xbf16>
    %cst = arith.constant dense<0.000000e+00> : vector<8x128xf32>
    %2 = tpu.matmul %0, %1, %cst {dimension_numbers = #tpu.dot_dimension_numbers<[1], [0], [0], [1], [0, 0, 1, 1], [], []>} : vector<8x576xbf16>, vector<576x128xbf16>, vector<8x128xf32> -> vector<8x128xf32>
    %c0_3 = arith.constant 0 : index
    %c0_4 = arith.constant 0 : index
    %3 = vector.load %arg4[%c0_3, %c0_4] : memref<2x128xf32, #tpu.memory_space<vmem>>, vector<1x128xf32>
    %4 = vector.broadcast %3 : vector<1x128xf32> to vector<8x128xf32>
    %5 = arith.mulf %2, %4 : vector<8x128xf32>
    %c1 = arith.constant 1 : index
    %c0_5 = arith.constant 0 : index
    %6 = vector.load %arg4[%c1, %c0_5] : memref<2x128xf32, #tpu.memory_space<vmem>>, vector<1x128xf32>
    %7 = vector.broadcast %6 : vector<1x128xf32> to vector<8x128xf32>
    %8 = arith.addf %5, %7 : vector<8x128xf32>
    %c0_6 = arith.constant 0 : index
    %c0_7 = arith.constant 0 : index
    %9 = vector.load %arg5[%c0_6, %c0_7] : memref<8x128xbf16, #tpu.memory_space<vmem>>, vector<8x128xbf16>
    %10 = arith.extf %9 : vector<8x128xbf16> to vector<8x128xf32>
    %11 = arith.addf %8, %10 : vector<8x128xf32>
    %cst_8 = arith.constant 0.000000e+00 : f32
    %12 = vector.broadcast %cst_8 : f32 to vector<8x128xf32>
    %13 = arith.maximumf %11, %12 : vector<8x128xf32>
    %14 = arith.truncf %13 : vector<8x128xf32> to vector<8x128xbf16>
    %c0_9 = arith.constant 0 : index
    %c0_10 = arith.constant 0 : index
    %15 = vector.load %arg6[%c0_9, %c0_10] : memref<8x128xbf16, #tpu.memory_space<vmem>>, vector<8x128xbf16>
    tpu.vector_store %arg6[%c0_9, %c0_10], %14 {strides = array<i32>} : memref<8x128xbf16, #tpu.memory_space<vmem>>, vector<8x128xbf16>,
    return
  }
  func.func @transform_0(%arg0: i32, %arg1: i32) -> (i32, i32) {
    %c0_i32 = arith.constant 0 : i32
    %c0_i32_0 = arith.constant 0 : i32
    return %arg0, %c0_i32 : i32, i32
  }
  func.func @transform_1(%arg0: i32, %arg1: i32) -> (i32, i32) {
    %c0_i32 = arith.constant 0 : i32
    %c0_i32_0 = arith.constant 0 : i32
    return %c0_i32, %arg1 : i32, i32
  }
  func.func @transform_2(%arg0: i32, %arg1: i32) -> (i32, i32) {
    %c0_i32 = arith.constant 0 : i32
    %c0_i32_0 = arith.constant 0 : i32
    return %c0_i32, %arg1 : i32, i32
  }
  func.func @transform_3(%arg0: i32, %arg1: i32) -> (i32, i32) {
    %c0_i32 = arith.constant 0 : i32
    return %arg0, %arg1 : i32, i32
  }
  func.func @transform_4(%arg0: i32, %arg1: i32) -> (i32, i32) {
    %c0_i32 = arith.constant 0 : i32
    return %arg0, %arg1 : i32, i32
  }
}

module attributes {stable_mosaic.version = 11 : i64} {
  func.func @_conv_mm_kernel(%arg0: i32, %arg1: i32, %arg2: memref<8x576xbf16, #tpu.memory_space<vmem>>, %arg3: memref<576x128xbf16, #tpu.memory_space<vmem>>, %arg4: memref<2x128xf32, #tpu.memory_space<vmem>>, %arg5: memref<8x128xbf16, #tpu.memory_space<vmem>>) attributes {dimension_semantics = [#tpu.dimension_semantics<parallel>, #tpu.dimension_semantics<parallel>], iteration_bounds = array<i64: 1, 1>, scalar_prefetch = 0 : i64, scratch_operands = 0 : i64, tpu.core_type = #tpu.core_type<tc>, window_params = [{transform_indices = @transform_0, window_bounds = array<i64: 8, 576>}, {transform_indices = @transform_1, window_bounds = array<i64: 576, 128>}, {transform_indices = @transform_2, window_bounds = array<i64: 2, 128>}, {transform_indices = @transform_3, window_bounds = array<i64: 8, 128>}]} {
    %c0 = arith.constant 0 : index
    %c0_0 = arith.constant 0 : index
    %0 = vector.load %arg2[%c0, %c0_0] : memref<8x576xbf16, #tpu.memory_space<vmem>>, vector<8x576xbf16>
    %c0_1 = arith.constant 0 : index
    %c0_2 = arith.constant 0 : index
    %1 = vector.load %arg3[%c0_1, %c0_2] : memref<576x128xbf16, #tpu.memory_space<vmem>>, vector<576x128xbf16>
    %cst = arith.constant dense<0.000000e+00> : vector<8x128xf32>
    %2 = tpu.matmul %0, %1, %cst {dimension_numbers = #tpu.dot_dimension_numbers<[1], [0], [0], [1], [0, 0, 1, 1], [], []>} : vector<8x576xbf16>, vector<576x128xbf16>, vector<8x128xf32> -> vector<8x128xf32>
    %c0_3 = arith.constant 0 : index
    %c0_4 = arith.constant 0 : index
    %3 = vector.load %arg4[%c0_3, %c0_4] : memref<2x128xf32, #tpu.memory_space<vmem>>, vector<1x128xf32>
    %4 = vector.broadcast %3 : vector<1x128xf32> to vector<8x128xf32>
    %5 = arith.mulf %2, %4 : vector<8x128xf32>
    %c1 = arith.constant 1 : index
    %c0_5 = arith.constant 0 : index
    %6 = vector.load %arg4[%c1, %c0_5] : memref<2x128xf32, #tpu.memory_space<vmem>>, vector<1x128xf32>
    %7 = vector.broadcast %6 : vector<1x128xf32> to vector<8x128xf32>
    %8 = arith.addf %5, %7 : vector<8x128xf32>
    %cst_6 = arith.constant 0.000000e+00 : f32
    %9 = vector.broadcast %cst_6 : f32 to vector<8x128xf32>
    %10 = arith.maximumf %8, %9 : vector<8x128xf32>
    %11 = arith.truncf %10 : vector<8x128xf32> to vector<8x128xbf16>
    %c0_7 = arith.constant 0 : index
    %c0_8 = arith.constant 0 : index
    %12 = vector.load %arg5[%c0_7, %c0_8] : memref<8x128xbf16, #tpu.memory_space<vmem>>, vector<8x128xbf16>
    tpu.vector_store %arg5[%c0_7, %c0_8], %11 {strides = array<i32>} : memref<8x128xbf16, #tpu.memory_space<vmem>>, vector<8x128xbf16>,
    return
  }
  func.func @transform_0(%arg0: i32, %arg1: i32) -> (i32, i32) {
    %c0_i32 = arith.constant 0 : i32
    %c0_i32_0 = arith.constant 0 : i32
    return %arg0, %c0_i32 : i32, i32
  }
  func.func @transform_1(%arg0: i32, %arg1: i32) -> (i32, i32) {
    %c0_i32 = arith.constant 0 : i32
    %c0_i32_0 = arith.constant 0 : i32
    return %c0_i32, %arg1 : i32, i32
  }
  func.func @transform_2(%arg0: i32, %arg1: i32) -> (i32, i32) {
    %c0_i32 = arith.constant 0 : i32
    %c0_i32_0 = arith.constant 0 : i32
    return %c0_i32, %arg1 : i32, i32
  }
  func.func @transform_3(%arg0: i32, %arg1: i32) -> (i32, i32) {
    %c0_i32 = arith.constant 0 : i32
    return %arg0, %arg1 : i32, i32
  }
}

</mosaic_0001>

<llo_original>
// kernel: _lambda_.36
$region0: #{_lambda_.36}
  #allocation0 [shape = 'u32[]', space=smem, size = 0x4, offset = 0x4, fixed_abs, tag = 'smem constant byte address 0x4 - core index']
  #allocation1 [shape = 'u32[144,128]{1,0:T(1,128)}', space=vmem, size = 0x12000, scoped, tag = 'internal scratch']
  %s0 = inlined_call_operand.vmem [shape: bf16[512,160], index: 0, kind: input, shape index: {}]
  %s1 = inlined_call_operand.vmem [shape: bf16[160,128], index: 1, kind: input, shape index: {}]
  %s2 = inlined_call_operand.vmem [shape: f32[2,128], index: 2, kind: input, shape index: {}]
  %s3 = inlined_call_operand.vmem [shape: bf16[512,128], index: 3, kind: output, shape index: {}]
  %s4 = sld [smem:[#allocation0]]
  $region45: #{_lambda_.36} parent=0
    _
  %s6 = ssub.s32 1, %s4
  %s7 = scalar_select 0, %s6, %s4
  loop: start=0, step=1, limit=4
  $region2: #{_lambda_.36} parent=0 // loop_pre_header
    _
  $region3: #{_lambda_.36} parent=0 // loop_header
    %s9 = sphi 0, %s13
    %p10 = scmp.ge.s32.totalorder %s9, 4
    %s16 = sphi 0, %s28
    %s17 = sphi 0, %s24
    %s18 = sphi 0, %s16
    %s19 = sphi 0, %s17
    %s20 = sphi 0, %s18
    %s21 = sphi 0, %s19
    %s31 = sphi 0, %s33
    %s34 = sphi 0, %s31
    %s35 = sphi 0, %s34
    %s51 = sphi 0, %s35
    %s57 = sphi 0, %s59
    %s60 = sphi 0, %s57
    %s61 = sphi 0, %s60
    %s77 = sphi 0, %s61
    %s83 = sphi 0, %s85
    %s86 = sphi 0, %s83
    %s87 = sphi 0, %s86
    %s103 = sphi 0, %s87
    %s111 = sphi 0, %s113
    %s114 = sphi 0, %s111
    %s115 = sphi 0, %s114
    %s131 = sphi 0, %s115
  $region4: #{_lambda_.36} parent=0 // loop_header_branch
    %12 = sbr.rel (%p10) target = $region8
  $region5: #{_lambda_.36} parent=0 // loop_body
    %s14 = ssub.s32 %s9, 1
    %s15 = ssub.s32 %s9, 2
    %s22 = sadd.s32 1, %s17
    %p23 = scmp.ge.s32.totalorder %s22, 1
    %s24 = scalar_select %p23, 0, %s22
    %s25 = sadd.s32 1, %s16
    %s26 = scalar_select %p23, %s25, %s16
    %p27 = scmp.ge.s32.totalorder %s26, 2
    %s28 = scalar_select %p27, 0, %s26
    %s29 = ssub.s32 %s16, %s28
    %p30 = scmp.eq.s32.totalorder %s29, 0
    %s32 = sadd.s32 %s31, 1
    %s33 = scalar_select %p30, %s31, %s32
    %p36 = pneg %p30
    %p37 = scmp.eq.s32.totalorder %s9, 1
    %p38 = por %p36, %p37
    %p39 = scmp.ne.s32.totalorder %s31, %s34
    %p40 = scmp.eq.s32.totalorder %s9, 0
    %p41 = por %p39, %p40
    %p42 = scmp.ne.s32.totalorder %s31, %s34
    %p43 = scmp.eq.s32.totalorder %s14, 1
    %p44 = por %p42, %p43
    %p45 = scmp.ne.s32.totalorder %s34, %s35
    %p46 = scmp.eq.s32.totalorder %s14, 0
    %p47 = por %p45, %p46
    %p48 = scmp.ne.s32.totalorder %s34, %s35
    %p49 = scmp.eq.s32.totalorder %s15, 1
    %p50 = por %p48, %p49
    %p52 = scmp.ne.s32.totalorder %s35, %s51
    %p53 = scmp.eq.s32.totalorder %s15, 0
    %p54 = por %p52, %p53
    %s55 = ssub.s32 %s17, %s24
    %p56 = scmp.eq.s32.totalorder %s55, 0
    %s58 = sadd.s32 %s57, 1
    %s59 = scalar_select %p56, %s57, %s58
    %p62 = pneg %p56
    %p63 = scmp.eq.s32.totalorder %s9, 1
    %p64 = por %p62, %p63
    %p65 = scmp.ne.s32.totalorder %s57, %s60
    %p66 = scmp.eq.s32.totalorder %s9, 0
    %p67 = por %p65, %p66
    %p68 = scmp.ne.s32.totalorder %s57, %s60
    %p69 = scmp.eq.s32.totalorder %s14, 1
    %p70 = por %p68, %p69
    %p71 = scmp.ne.s32.totalorder %s60, %s61
    %p72 = scmp.eq.s32.totalorder %s14, 0
    %p73 = por %p71, %p72
    %p74 = scmp.ne.s32.totalorder %s60, %s61
    %p75 = scmp.eq.s32.totalorder %s15, 1
    %p76 = por %p74, %p75
    %p78 = scmp.ne.s32.totalorder %s61, %s77
    %p79 = scmp.eq.s32.totalorder %s15, 0
    %p80 = por %p78, %p79
    %s81 = ssub.s32 %s17, %s24
    %p82 = scmp.eq.s32.totalorder %s81, 0
    %s84 = sadd.s32 %s83, 1
    %s85 = scalar_select %p82, %s83, %s84
    %p88 = pneg %p82
    %p89 = scmp.eq.s32.totalorder %s9, 1
    %p90 = por %p88, %p89
    %p91 = scmp.ne.s32.totalorder %s83, %s86
    %p92 = scmp.eq.s32.totalorder %s9, 0
    %p93 = por %p91, %p92
    %p94 = scmp.ne.s32.totalorder %s83, %s86
    %p95 = scmp.eq.s32.totalorder %s14, 1
    %p96 = por %p94, %p95
    %p97 = scmp.ne.s32.totalorder %s86, %s87
    %p98 = scmp.eq.s32.totalorder %s14, 0
    %p99 = por %p97, %p98
    %p100 = scmp.ne.s32.totalorder %s86, %s87
    %p101 = scmp.eq.s32.totalorder %s15, 1
    %p102 = por %p100, %p101
    %p104 = scmp.ne.s32.totalorder %s87, %s103
    %p105 = scmp.eq.s32.totalorder %s15, 0
    %p106 = por %p104, %p105
    %s107 = ssub.s32 %s16, %s28
    %s108 = ssub.s32 %s17, %s24
    %s109 = sor.u32 %s107, %s108
    %p110 = scmp.eq.s32.totalorder %s109, 0
    %s112 = sadd.s32 %s111, 1
    %s113 = scalar_select %p110, %s111, %s112
    %p116 = pneg %p110
    %p117 = scmp.eq.s32.totalorder %s9, 1
    %p118 = por %p116, %p117
    %p119 = scmp.ne.s32.totalorder %s111, %s114
    %p120 = scmp.eq.s32.totalorder %s9, 0
    %p121 = por %p119, %p120
    %p122 = scmp.ne.s32.totalorder %s111, %s114
    %p123 = scmp.eq.s32.totalorder %s14, 1
    %p124 = por %p122, %p123
    %p125 = scmp.ne.s32.totalorder %s114, %s115
    %p126 = scmp.eq.s32.totalorder %s14, 0
    %p127 = por %p125, %p126
    %p128 = scmp.ne.s32.totalorder %s114, %s115
    %p129 = scmp.eq.s32.totalorder %s15, 1
    %p130 = por %p128, %p129
    %p132 = scmp.ne.s32.totalorder %s115, %s131
    %p133 = scmp.eq.s32.totalorder %s15, 0
    %p134 = por %p132, %p133
    %p135 = scmp.le.s32.totalorder 1, %s9
    %p136 = scmp.lt.s32.totalorder %s9, 3
    %p137 = pnand %p135, %p136
    %p138 = pneg %p137
    // Predicated region
    $region9: #{_lambda_.36} parent=5 // pred_check
      _
    $region10: #{_lambda_.36} parent=5 // pred_check_branch
      %140 = sbr.rel (%p137) target = $region12
    $region11: #{_lambda_.36} parent=5 // pred_region
      %s141 = ssub.s32 %s9, 1
      // Predicated region
      $region13: #{_lambda_.36} parent=11 // pred_check
        %p142 = pneg %p73
      $region14: #{_lambda_.36} parent=11 // pred_check_branch
        %144 = sbr.rel (%p142) target = $region16
      $region15: #{_lambda_.36} parent=11 // pred_region
        %p145 = scmp.lt.s32.totalorder %s19, 0
        %s146 = scalar_select %p145, %s19, 0
        %s147 = smul.addr %s146, 4
        %s148 = scalar_lea.vmem %s1, %s147
      $region16: #{_lambda_.36} parent=11 // pred_fallthru
        _
      // Predicated region
      $region17: #{_lambda_.36} parent=11 // pred_check
        %p149 = pneg %p99
      $region18: #{_lambda_.36} parent=11 // pred_check_branch
        %151 = sbr.rel (%p149) target = $region20
      $region19: #{_lambda_.36} parent=11 // pred_region
        %p152 = scmp.lt.s32.totalorder %s19, 0
        %s153 = scalar_select %p152, %s19, 0
        %s154 = smul.addr %s153, 2
        %s155 = scalar_lea.vmem %s2, %s154
      $region20: #{_lambda_.36} parent=11 // pred_fallthru
        _
    $region12: #{_lambda_.36} parent=5 // pred_fallthru
      _
    %p156 = scmp.lt.s32.totalorder %s9, 2
    // Predicated region
    $region21: #{_lambda_.36} parent=5 // pred_check
      %p157 = pneg %p156
    $region22: #{_lambda_.36} parent=5 // pred_check_branch
      %159 = sbr.rel (%p157) target = $region24
    $region23: #{_lambda_.36} parent=5 // pred_region
      // Predicated region
      $region25: #{_lambda_.36} parent=23 // pred_check
        %p160 = pneg %p41
      $region26: #{_lambda_.36} parent=23 // pred_check_branch
        %162 = sbr.rel (%p160) target = $region28
      $region27: #{_lambda_.36} parent=23 // pred_region
        %s163 = smul.u32 32, %s16
        %p164 = scmp.lt.s32.totalorder %s163, 63
        %s165 = scalar_select %p164, %s163, 63
        %s166 = smul.addr %s165, 2
        %s167 = smul.addr %s166, 4
        %s168 = scalar_lea.vmem %s0, %s167
        %s169 = smul.u32 32, %s16
      $region28: #{_lambda_.36} parent=23 // pred_fallthru
        _
    $region24: #{_lambda_.36} parent=5 // pred_fallthru
      _
    %p170 = scmp.le.s32.totalorder 1, %s9
    %p171 = scmp.lt.s32.totalorder %s9, 3
    %p172 = pnand %p170, %p171
    %p173 = pneg %p172
    // Predicated region
    $region29: #{_lambda_.36} parent=5 // pred_check
      _
    $region30: #{_lambda_.36} parent=5 // pred_check_branch
      %175 = sbr.rel (%p172) target = $region32
    $region31: #{_lambda_.36} parent=5 // pred_region
      %s176 = ssub.s32 %s9, 1
      %s177 = smul.u32 32, %s18
      %p178 = scmp.lt.s32.totalorder %s177, 63
      %s179 = scalar_select %p178, %s177, 63
      %s180 = smul.addr %s179, 2
      %s181 = smul.addr %s180, 4
      %s182 = scalar_lea.vmem %s0, %s181
      %p183 = pneg %p47
      %p184 = pneg %p44
      %p185 = scmp.lt.s32.totalorder %s19, 0
      %s186 = scalar_select %p185, %s19, 0
      %s187 = smul.addr %s186, 4
      %s188 = scalar_lea.vmem %s1, %s187
      %p189 = pneg %p73
      %p190 = pneg %p70
      %p191 = scmp.lt.s32.totalorder %s19, 0
      %s192 = scalar_select %p191, %s19, 0
      %s193 = smul.addr %s192, 2
      %s194 = scalar_lea.vmem %s2, %s193
      %p195 = pneg %p99
      %p196 = pneg %p96
      %p197 = pneg %p127
      %p198 = pneg %p124
      %s199 = smul.u32 32, %s18
      %p200 = scmp.lt.s32.totalorder %s199, 63
      %s201 = scalar_select %p200, %s199, 63
      %p202 = scmp.lt.s32.totalorder %s19, 0
      %s203 = scalar_select %p202, %s19, 0
      %s204 = sadd.s32 %s203, %s201
      %s205 = smul.addr %s204, 4
      %s206 = scalar_lea.vmem %s3, %s205
      %s207 = smul.u32 32, %s18
      %p208 = scmp.lt.s32.totalorder %s207, 63
      %s209 = scalar_select %p208, %s207, 63
      %s210 = smul.addr %s209, 2
      %s211 = smul.addr %s210, 4
      %s212 = scalar_lea.vmem %s0, %s211
      %s213 = smul.u32 32, %s18
      %p214 = scmp.lt.s32.totalorder %s19, 0
      %s215 = scalar_select %p214, %s19, 0
      %s216 = smul.addr %s215, 4
      %s217 = scalar_lea.vmem %s1, %s216
      %p218 = scmp.lt.s32.totalorder %s19, 0
      %s219 = scalar_select %p218, %s19, 0
      %s220 = smul.addr %s219, 2
      %s221 = scalar_lea.vmem %s2, %s220
      %s222 = smul.u32 32, %s18
      %p223 = scmp.lt.s32.totalorder %s222, 63
      %s224 = scalar_select %p223, %s222, 63
      %p225 = scmp.lt.s32.totalorder %s19, 0
      %s226 = scalar_select %p225, %s19, 0
      %s227 = sadd.s32 %s226, %s224
      %s228 = smul.addr %s227, 4
      %s229 = scalar_lea.vmem %s3, %s228
      %s230 = smul.u32 32, %s18
      %v232 = vld [vmem:[%s212] sm:$0xff]
      %v233 = vld [vmem:[%s212 + $0x8] sm:$0xff]
      %v234 = vld [vmem:[%s212 + $0x10] sm:$0xff]
      %v235 = vld [vmem:[%s212 + $0x18] sm:$0xff]
      %v236 = vld [vmem:[%s212 + $0x20] sm:$0xff]
      %v237 = vld [vmem:[%s212 + $0x28] sm:$0xff]
      %v238 = vld [vmem:[%s212 + $0x30] sm:$0xff]
      %v239 = vld [vmem:[%s212 + $0x38] sm:$0xff]
      %v240 = vld [vmem:[%s212 + $0x40] sm:$0xff]
      %v241 = vld [vmem:[%s212 + $0x48] sm:$0xff]
      %v242 = vld [vmem:[%s212 + $0x50] sm:$0xff]
      %v243 = vld [vmem:[%s212 + $0x58] sm:$0xff]
      %v244 = vld [vmem:[%s212 + $0x60] sm:$0xff]
      %v245 = vld [vmem:[%s212 + $0x68] sm:$0xff]
      %v246 = vld [vmem:[%s212 + $0x70] sm:$0xff]
      %v247 = vld [vmem:[%s212 + $0x78] sm:$0xff]
      %v248 = vld [vmem:[%s212 + $0x80] sm:$0xff]
      %v249 = vld [vmem:[%s212 + $0x88] sm:$0xff]
      %v250 = vld [vmem:[%s212 + $0x90] sm:$0xff]
      %v251 = vld [vmem:[%s212 + $0x98] sm:$0xff]
      %v252 = vld [vmem:[%s212 + $0xa0] sm:$0xff]
      %v253 = vld [vmem:[%s212 + $0xa8] sm:$0xff]
      %v254 = vld [vmem:[%s212 + $0xb0] sm:$0xff]
      %v255 = vld [vmem:[%s212 + $0xb8] sm:$0xff]
      %v256 = vld [vmem:[%s212 + $0xc0] sm:$0xff]
      %v257 = vld [vmem:[%s212 + $0xc8] sm:$0xff]
      %v258 = vld [vmem:[%s212 + $0xd0] sm:$0xff]
      %v259 = vld [vmem:[%s212 + $0xd8] sm:$0xff]
      %v260 = vld [vmem:[%s212 + $0xe0] sm:$0xff]
      %v261 = vld [vmem:[%s212 + $0xe8] sm:$0xff]
      %v262 = vld [vmem:[%s212 + $0xf0] sm:$0xff]
      %v263 = vld [vmem:[%s212 + $0xf8] sm:$0xff]
      %v264 = vld [vmem:[%s217] sm:$0xf]
      %v265 = vld [vmem:[%s217 + $0x4] sm:$0xf]
      %v266 = vld [vmem:[%s217 + $0x8] sm:$0xf]
      %v267 = vld [vmem:[%s217 + $0xc] sm:$0xf]
      %v268 = vld [vmem:[%s217 + $0x10] sm:$0xf]
      %v269 = vld [vmem:[%s217 + $0x14] sm:$0xf]
      %v270 = vld [vmem:[%s217 + $0x18] sm:$0xf]
      %v271 = vld [vmem:[%s217 + $0x1c] sm:$0xf]
      %v272 = vld [vmem:[%s217 + $0x20] sm:$0xf]
      %v273 = vld [vmem:[%s217 + $0x24] sm:$0xf]
      %v274 = vld [vmem:[%s217 + $0x28] sm:$0xf]
      %v275 = vld [vmem:[%s217 + $0x2c] sm:$0xf]
      %v276 = vld [vmem:[%s217 + $0x30] sm:$0xf]
      %v277 = vld [vmem:[%s217 + $0x34] sm:$0xf]
      %v278 = vld [vmem:[%s217 + $0x38] sm:$0xf]
      %v279 = vld [vmem:[%s217 + $0x3c] sm:$0xf]
      %v280 = vld [vmem:[%s217 + $0x40] sm:$0xf]
      %v281 = vld [vmem:[%s217 + $0x44] sm:$0xf]
      %v282 = vld [vmem:[%s217 + $0x48] sm:$0xf]
      %v283 = vld [vmem:[%s217 + $0x4c] sm:$0xf]
      %v316 = vunpack.c.l.b16 %v232
      %v317 = vunpack.c.h.b16 %v232
      %v318 = vunpack.c.l.b16 %v233
      %v319 = vunpack.c.h.b16 %v233
      %v320 = vunpack.c.l.b16 %v234
      %v321 = vunpack.c.h.b16 %v234
      %v322 = vunpack.c.l.b16 %v235
      %v323 = vunpack.c.h.b16 %v235
      %v324 = vunpack.c.l.b16 %v236
      %v325 = vunpack.c.h.b16 %v236
      %v326 = vunpack.c.l.b16 %v237
      %v327 = vunpack.c.h.b16 %v237
      %v328 = vunpack.c.l.b16 %v238
      %v329 = vunpack.c.h.b16 %v238
      %v330 = vunpack.c.l.b16 %v239
      %v331 = vunpack.c.h.b16 %v239
      %v332 = vunpack.c.l.b16 %v240
      %v333 = vunpack.c.h.b16 %v240
      %v334 = vunpack.c.l.b16 %v241
      %v335 = vunpack.c.h.b16 %v241
      %v336 = vunpack.c.l.b16 %v242
      %v337 = vunpack.c.h.b16 %v242
      %v338 = vunpack.c.l.b16 %v243
      %v339 = vunpack.c.h.b16 %v243
      %v340 = vunpack.c.l.b16 %v244
      %v341 = vunpack.c.h.b16 %v244
      %v342 = vunpack.c.l.b16 %v245
      %v343 = vunpack.c.h.b16 %v245
      %v344 = vunpack.c.l.b16 %v246
      %v345 = vunpack.c.h.b16 %v246
      %v346 = vunpack.c.l.b16 %v247
      %v347 = vunpack.c.h.b16 %v247
      %v348 = vunpack.c.l.b16 %v248
      %v349 = vunpack.c.h.b16 %v248
      %v350 = vunpack.c.l.b16 %v249
      %v351 = vunpack.c.h.b16 %v249
      %v352 = vunpack.c.l.b16 %v250
      %v353 = vunpack.c.h.b16 %v250
      %v354 = vunpack.c.l.b16 %v251
      %v355 = vunpack.c.h.b16 %v251
      %v356 = vunpack.c.l.b16 %v252
      %v357 = vunpack.c.h.b16 %v252
      %v358 = vunpack.c.l.b16 %v253
      %v359 = vunpack.c.h.b16 %v253
      %v360 = vunpack.c.l.b16 %v254
      %v361 = vunpack.c.h.b16 %v254
      %v362 = vunpack.c.l.b16 %v255
      %v363 = vunpack.c.h.b16 %v255
      %v364 = vunpack.c.l.b16 %v256
      %v365 = vunpack.c.h.b16 %v256
      %v366 = vunpack.c.l.b16 %v257
      %v367 = vunpack.c.h.b16 %v257
      %v368 = vunpack.c.l.b16 %v258
      %v369 = vunpack.c.h.b16 %v258
      %v370 = vunpack.c.l.b16 %v259
      %v371 = vunpack.c.h.b16 %v259
      %v372 = vunpack.c.l.b16 %v260
      %v373 = vunpack.c.h.b16 %v260
      %v374 = vunpack.c.l.b16 %v261
      %v375 = vunpack.c.h.b16 %v261
      %v376 = vunpack.c.l.b16 %v262
      %v377 = vunpack.c.h.b16 %v262
      %v378 = vunpack.c.l.b16 %v263
      %v379 = vunpack.c.h.b16 %v263
      %v380 = vpack.c.b16 %v318, %v316
      %v381 = vpack.c.b16 %v319, %v317
      %v382 = vpack.c.b16 %v322, %v320
      %v383 = vpack.c.b16 %v323, %v321
      %v384 = vpack.c.b16 %v326, %v324
      %v385 = vpack.c.b16 %v327, %v325
      %v386 = vpack.c.b16 %v330, %v328
      %v387 = vpack.c.b16 %v331, %v329
      %v388 = vpack.c.b16 %v334, %v332
      %v389 = vpack.c.b16 %v335, %v333
      %v390 = vpack.c.b16 %v338, %v336
      %v391 = vpack.c.b16 %v339, %v337
      %v392 = vpack.c.b16 %v342, %v340
      %v393 = vpack.c.b16 %v343, %v341
      %v394 = vpack.c.b16 %v346, %v344
      %v395 = vpack.c.b16 %v347, %v345
      %v396 = vpack.c.b16 %v350, %v348
      %v397 = vpack.c.b16 %v351, %v349
      %v398 = vpack.c.b16 %v354, %v352
      %v399 = vpack.c.b16 %v355, %v353
      %v400 = vpack.c.b16 %v358, %v356
      %v401 = vpack.c.b16 %v359, %v357
      %v402 = vpack.c.b16 %v362, %v360
      %v403 = vpack.c.b16 %v363, %v361
      %v404 = vpack.c.b16 %v366, %v364
      %v405 = vpack.c.b16 %v367, %v365
      %v406 = vpack.c.b16 %v370, %v368
      %v407 = vpack.c.b16 %v371, %v369
      %v408 = vpack.c.b16 %v374, %v372
      %v409 = vpack.c.b16 %v375, %v373
      %v410 = vpack.c.b16 %v378, %v376
      %v411 = vpack.c.b16 %v379, %v377
      %v448 = vunpack.c.l.b16 %v264
      %v449 = vunpack.c.l.b16 %v265
      %v450 = vunpack.c.l.b16 %v266
      %v451 = vunpack.c.l.b16 %v267
      %v452 = vunpack.c.l.b16 %v268
      %v453 = vunpack.c.l.b16 %v269
      %v454 = vunpack.c.l.b16 %v270
      %v455 = vunpack.c.l.b16 %v271
      %v456 = vunpack.c.l.b16 %v272
      %v457 = vunpack.c.l.b16 %v273
      %v458 = vunpack.c.l.b16 %v274
      %v459 = vunpack.c.l.b16 %v275
      %v460 = vunpack.c.l.b16 %v276
      %v461 = vunpack.c.l.b16 %v277
      %v462 = vunpack.c.l.b16 %v278
      %v463 = vunpack.c.l.b16 %v279
      %v464 = vunpack.c.l.b16 %v280
      %v465 = vunpack.c.l.b16 %v281
      %v466 = vunpack.c.l.b16 %v282
      %v467 = vunpack.c.l.b16 %v283
      %v468 = vpack.c.b16 %v449, %v448
      %v469 = vpack.c.b16 %v451, %v450
      %v470 = vpack.c.b16 %v453, %v452
      %v471 = vpack.c.b16 %v455, %v454
      %v472 = vpack.c.b16 %v457, %v456
      %v473 = vpack.c.b16 %v459, %v458
      %v474 = vpack.c.b16 %v461, %v460
      %v475 = vpack.c.b16 %v463, %v462
      %v476 = vpack.c.b16 %v465, %v464
      %v477 = vpack.c.b16 %v467, %v466
      %vm488 = vcmask 261120
      %v490 = vsel %vm488, %v381, 0
      %v493 = vsel %vm488, %v383, 0
      %v496 = vsel %vm488, %v385, 0
      %v499 = vsel %vm488, %v387, 0
      %v502 = vsel %vm488, %v389, 0
      %v505 = vsel %vm488, %v391, 0
      %v508 = vsel %vm488, %v393, 0
      %v511 = vsel %vm488, %v395, 0
      %v514 = vsel %vm488, %v397, 0
      %v517 = vsel %vm488, %v399, 0
      %v520 = vsel %vm488, %v401, 0
      %v523 = vsel %vm488, %v403, 0
      %v526 = vsel %vm488, %v405, 0
      %v529 = vsel %vm488, %v407, 0
      %v532 = vsel %vm488, %v409, 0
      %v535 = vsel %vm488, %v411, 0
      %537 = vmatprep.subr.bf16.mxu0 0
      %538 = vmatpush1.bf16.msra.mxu0 %v475
      %539 = vmatprep.subr.bf16.mxu0 0
      %540 = vmatpush1.bf16.msra.mxu0 %v474
      %541 = vmatprep.subr.bf16.mxu0 0
      %542 = vmatpush1.bf16.msra.mxu0 %v473
      %543 = vmatprep.subr.bf16.mxu0 0
      %544 = vmatpush1.bf16.msra.mxu0 %v472
      %545 = vmatprep.subr.bf16.mxu0 0
      %546 = vmatpush1.bf16.msra.mxu0 %v471
      %547 = vmatprep.subr.bf16.mxu0 0
      %548 = vmatpush1.bf16.msra.mxu0 %v470
      %549 = vmatprep.subr.bf16.mxu0 0
      %550 = vmatpush1.bf16.msra.mxu0 %v469
      %551 = vmatprep.subr.bf16.mxu0 0
      %552 = vmatpush1.bf16.msra.mxu0 %v468
      %553 = vmatprep.subr.bf16.mxu0 0
      %554 = vmatpush2.bf16.msra.mxu0 0
      %555 = vmatprep.subr.bf16.mxu0 0
      %556 = vmatpush2.bf16.msra.mxu0 0
      %557 = vmatprep.subr.bf16.mxu0 0
      %558 = vmatpush2.bf16.msra.mxu0 0
      %559 = vmatprep.subr.bf16.mxu0 0
      %560 = vmatpush2.bf16.msra.mxu0 0
      %561 = vmatprep.subr.bf16.mxu0 0
      %562 = vmatpush2.bf16.msra.mxu0 0
      %563 = vmatprep.subr.bf16.mxu0 0
      %564 = vmatpush2.bf16.msra.mxu0 0
      %565 = vmatprep.subr.bf16.mxu0 0
      %566 = vmatpush2.bf16.msra.mxu0 %v477
      %567 = vmatprep.subr.bf16.mxu0 0
      %568 = vmatpush2.bf16.msra.mxu0 %v476
      %569 = vmatprep.mubr.bf16.mxu0 %v490
      %570 = vmatmul.mubr.bf16.gmra.mxu0 %v380
      %v571 = vpop.f32.mrf.mxu0
      %v572 = vadd.f32 0.0, %v571
      %v573 = vpop.f32.mrf.mxu0
      %v574 = vpop.f32.mrf.mxu0
      %v575 = vadd.f32 0.0, %v574
      %v576 = vpop.f32.mrf.mxu0
      %577 = vmatprep.mubr.bf16.mxu0 %v493
      %578 = vmatmul.mubr.bf16.gmra.mxu0 %v382
      %v579 = vpop.f32.mrf.mxu0
      %v580 = vadd.f32 0.0, %v579
      %v581 = vpop.f32.mrf.mxu0
      %v582 = vpop.f32.mrf.mxu0
      %v583 = vadd.f32 0.0, %v582
      %v584 = vpop.f32.mrf.mxu0
      %585 = vmatprep.mubr.bf16.mxu0 %v496
      %586 = vmatmul.mubr.bf16.gmra.mxu0 %v384
      %v587 = vpop.f32.mrf.mxu0
      %v588 = vadd.f32 0.0, %v587
      %v589 = vpop.f32.mrf.mxu0
      %v590 = vpop.f32.mrf.mxu0
      %v591 = vadd.f32 0.0, %v590
      %v592 = vpop.f32.mrf.mxu0
      %593 = vmatprep.mubr.bf16.mxu0 %v499
      %594 = vmatmul.mubr.bf16.gmra.mxu0 %v386
      %v595 = vpop.f32.mrf.mxu0
      %v596 = vadd.f32 0.0, %v595
      %v597 = vpop.f32.mrf.mxu0
      %v598 = vpop.f32.mrf.mxu0
      %v599 = vadd.f32 0.0, %v598
      %v600 = vpop.f32.mrf.mxu0
      %601 = vmatprep.mubr.bf16.mxu0 %v502
      %602 = vmatmul.mubr.bf16.gmra.mxu0 %v388
      %v603 = vpop.f32.mrf.mxu0
      %v604 = vadd.f32 0.0, %v603
      %v605 = vpop.f32.mrf.mxu0
      %v606 = vpop.f32.mrf.mxu0
      %v607 = vadd.f32 0.0, %v606
      %v608 = vpop.f32.mrf.mxu0
      %609 = vmatprep.mubr.bf16.mxu0 %v505
      %610 = vmatmul.mubr.bf16.gmra.mxu0 %v390
      %v611 = vpop.f32.mrf.mxu0
      %v612 = vadd.f32 0.0, %v611
      %v613 = vpop.f32.mrf.mxu0
      %v614 = vpop.f32.mrf.mxu0
      %v615 = vadd.f32 0.0, %v614
      %v616 = vpop.f32.mrf.mxu0
      %617 = vmatprep.mubr.bf16.mxu0 %v508
      %618 = vmatmul.mubr.bf16.gmra.mxu0 %v392
      %v619 = vpop.f32.mrf.mxu0
      %v620 = vadd.f32 0.0, %v619
      %v621 = vpop.f32.mrf.mxu0
      %v622 = vpop.f32.mrf.mxu0
      %v623 = vadd.f32 0.0, %v622
      %v624 = vpop.f32.mrf.mxu0
      %625 = vmatprep.mubr.bf16.mxu0 %v511
      %626 = vmatmul.mubr.bf16.gmra.mxu0 %v394
      %v627 = vpop.f32.mrf.mxu0
      %v628 = vadd.f32 0.0, %v627
      %v629 = vpop.f32.mrf.mxu0
      %v630 = vpop.f32.mrf.mxu0
      %v631 = vadd.f32 0.0, %v630
      %v632 = vpop.f32.mrf.mxu0
      %633 = vmatprep.mubr.bf16.mxu0 %v514
      %634 = vmatmul.mubr.bf16.gmra.mxu0 %v396
      %v635 = vpop.f32.mrf.mxu0
      %v636 = vadd.f32 0.0, %v635
      %v637 = vpop.f32.mrf.mxu0
      %v638 = vpop.f32.mrf.mxu0
      %v639 = vadd.f32 0.0, %v638
      %v640 = vpop.f32.mrf.mxu0
      %641 = vmatprep.mubr.bf16.mxu0 %v517
      %642 = vmatmul.mubr.bf16.gmra.mxu0 %v398
      %v643 = vpop.f32.mrf.mxu0
      %v644 = vadd.f32 0.0, %v643
      %v645 = vpop.f32.mrf.mxu0
      %v646 = vpop.f32.mrf.mxu0
      %v647 = vadd.f32 0.0, %v646
      %v648 = vpop.f32.mrf.mxu0
      %649 = vmatprep.mubr.bf16.mxu0 %v520
      %650 = vmatmul.mubr.bf16.gmra.mxu0 %v400
      %v651 = vpop.f32.mrf.mxu0
      %v652 = vadd.f32 0.0, %v651
      %v653 = vpop.f32.mrf.mxu0
      %v654 = vpop.f32.mrf.mxu0
      %v655 = vadd.f32 0.0, %v654
      %v656 = vpop.f32.mrf.mxu0
      %657 = vmatprep.mubr.bf16.mxu0 %v523
      %658 = vmatmul.mubr.bf16.gmra.mxu0 %v402
      %v659 = vpop.f32.mrf.mxu0
      %v660 = vadd.f32 0.0, %v659
      %v661 = vpop.f32.mrf.mxu0
      %v662 = vpop.f32.mrf.mxu0
      %v663 = vadd.f32 0.0, %v662
      %v664 = vpop.f32.mrf.mxu0
      %665 = vmatprep.mubr.bf16.mxu0 %v526
      %666 = vmatmul.mubr.bf16.gmra.mxu0 %v404
      %v667 = vpop.f32.mrf.mxu0
      %v668 = vadd.f32 0.0, %v667
      %v669 = vpop.f32.mrf.mxu0
      %v670 = vpop.f32.mrf.mxu0
      %v671 = vadd.f32 0.0, %v670
      %v672 = vpop.f32.mrf.mxu0
      %673 = vmatprep.mubr.bf16.mxu0 %v529
      %674 = vmatmul.mubr.bf16.gmra.mxu0 %v406
      %v675 = vpop.f32.mrf.mxu0
      %v676 = vadd.f32 0.0, %v675
      %v677 = vpop.f32.mrf.mxu0
      %v678 = vpop.f32.mrf.mxu0
      %v679 = vadd.f32 0.0, %v678
      %v680 = vpop.f32.mrf.mxu0
      %681 = vmatprep.mubr.bf16.mxu0 %v532
      %682 = vmatmul.mubr.bf16.gmra.mxu0 %v408
      %v683 = vpop.f32.mrf.mxu0
      %v684 = vadd.f32 0.0, %v683
      %v685 = vpop.f32.mrf.mxu0
      %v686 = vpop.f32.mrf.mxu0
      %v687 = vadd.f32 0.0, %v686
      %v688 = vpop.f32.mrf.mxu0
      %689 = vmatprep.mubr.bf16.mxu0 %v535
      %690 = vmatmul.mubr.bf16.gmra.mxu0 %v410
      %v691 = vpop.f32.mrf.mxu0
      %v692 = vadd.f32 0.0, %v691
      %v693 = vpop.f32.mrf.mxu0
      %v694 = vpop.f32.mrf.mxu0
      %v695 = vadd.f32 0.0, %v694
      %v696 = vpop.f32.mrf.mxu0
      %697 = vdwg.mxu0
      %v698 = vld [vmem:[%s221] sm:$0x1]
      %v699 = vlaneseq
      %v700 = vshrl.u32 %v699, 7
      %v701 = vsub.s32 0, %v700
      %v702 = vrot.slane %v698, %v701
      %v703 = vmul.f32 %v572, %v702
      %v704 = vmul.f32 %v575, %v702
      %v705 = vmul.f32 %v580, %v702
      %v706 = vmul.f32 %v583, %v702
      %v707 = vmul.f32 %v588, %v702
      %v708 = vmul.f32 %v591, %v702
      %v709 = vmul.f32 %v596, %v702
      %v710 = vmul.f32 %v599, %v702
      %v711 = vmul.f32 %v604, %v702
      %v712 = vmul.f32 %v607, %v702
      %v713 = vmul.f32 %v612, %v702
      %v714 = vmul.f32 %v615, %v702
      %v715 = vmul.f32 %v620, %v702
      %v716 = vmul.f32 %v623, %v702
      %v717 = vmul.f32 %v628, %v702
      %v718 = vmul.f32 %v631, %v702
      %v719 = vmul.f32 %v636, %v702
      %v720 = vmul.f32 %v639, %v702
      %v721 = vmul.f32 %v644, %v702
      %v722 = vmul.f32 %v647, %v702
      %v723 = vmul.f32 %v652, %v702
      %v724 = vmul.f32 %v655, %v702
      %v725 = vmul.f32 %v660, %v702
      %v726 = vmul.f32 %v663, %v702
      %v727 = vmul.f32 %v668, %v702
      %v728 = vmul.f32 %v671, %v702
      %v729 = vmul.f32 %v676, %v702
      %v730 = vmul.f32 %v679, %v702
      %v731 = vmul.f32 %v684, %v702
      %v732 = vmul.f32 %v687, %v702
      %v733 = vmul.f32 %v692, %v702
      %v734 = vmul.f32 %v695, %v702
      %v735 = vld [vmem:[%s221 + $0x1] sm:$0x1]
      %v736 = vlaneseq
      %v737 = vshrl.u32 %v736, 7
      %v738 = vsub.s32 0, %v737
      %v739 = vrot.slane %v735, %v738
      %v740 = vadd.f32 %v703, %v739
      %v741 = vadd.f32 %v704, %v739
      %v742 = vadd.f32 %v705, %v739
      %v743 = vadd.f32 %v706, %v739
      %v744 = vadd.f32 %v707, %v739
      %v745 = vadd.f32 %v708, %v739
      %v746 = vadd.f32 %v709, %v739
      %v747 = vadd.f32 %v710, %v739
      %v748 = vadd.f32 %v711, %v739
      %v749 = vadd.f32 %v712, %v739
      %v750 = vadd.f32 %v713, %v739
      %v751 = vadd.f32 %v714, %v739
      %v752 = vadd.f32 %v715, %v739
      %v753 = vadd.f32 %v716, %v739
      %v754 = vadd.f32 %v717, %v739
      %v755 = vadd.f32 %v718, %v739
      %v756 = vadd.f32 %v719, %v739
      %v757 = vadd.f32 %v720, %v739
      %v758 = vadd.f32 %v721, %v739
      %v759 = vadd.f32 %v722, %v739
      %v760 = vadd.f32 %v723, %v739
      %v761 = vadd.f32 %v724, %v739
      %v762 = vadd.f32 %v725, %v739
      %v763 = vadd.f32 %v726, %v739
      %v764 = vadd.f32 %v727, %v739
      %v765 = vadd.f32 %v728, %v739
      %v766 = vadd.f32 %v729, %v739
      %v767 = vadd.f32 %v730, %v739
      %v768 = vadd.f32 %v731, %v739
      %v769 = vadd.f32 %v732, %v739
      %v770 = vadd.f32 %v733, %v739
      %v771 = vadd.f32 %v734, %v739
      %v772 = vmax.f32 %v740, 0.0
      %v773 = vmax.f32 %v741, 0.0
      %v774 = vmax.f32 %v742, 0.0
      %v775 = vmax.f32 %v743, 0.0
      %v776 = vmax.f32 %v744, 0.0
      %v777 = vmax.f32 %v745, 0.0
      %v778 = vmax.f32 %v746, 0.0
      %v779 = vmax.f32 %v747, 0.0
      %v780 = vmax.f32 %v748, 0.0
      %v781 = vmax.f32 %v749, 0.0
      %v782 = vmax.f32 %v750, 0.0
      %v783 = vmax.f32 %v751, 0.0
      %v784 = vmax.f32 %v752, 0.0
      %v785 = vmax.f32 %v753, 0.0
      %v786 = vmax.f32 %v754, 0.0
      %v787 = vmax.f32 %v755, 0.0
      %v788 = vmax.f32 %v756, 0.0
      %v789 = vmax.f32 %v757, 0.0
      %v790 = vmax.f32 %v758, 0.0
      %v791 = vmax.f32 %v759, 0.0
      %v792 = vmax.f32 %v760, 0.0
      %v793 = vmax.f32 %v761, 0.0
      %v794 = vmax.f32 %v762, 0.0
      %v795 = vmax.f32 %v763, 0.0
      %v796 = vmax.f32 %v764, 0.0
      %v797 = vmax.f32 %v765, 0.0
      %v798 = vmax.f32 %v766, 0.0
      %v799 = vmax.f32 %v767, 0.0
      %v800 = vmax.f32 %v768, 0.0
      %v801 = vmax.f32 %v769, 0.0
      %v802 = vmax.f32 %v770, 0.0
      %v803 = vmax.f32 %v771, 0.0
      %v804 = vpack.c.bf16 %v773, %v772
      %v805 = vpack.c.bf16 %v775, %v774
      %v806 = vpack.c.bf16 %v777, %v776
      %v807 = vpack.c.bf16 %v779, %v778
      %v808 = vpack.c.bf16 %v781, %v780
      %v809 = vpack.c.bf16 %v783, %v782
      %v810 = vpack.c.bf16 %v785, %v784
      %v811 = vpack.c.bf16 %v787, %v786
      %v812 = vpack.c.bf16 %v789, %v788
      %v813 = vpack.c.bf16 %v791, %v790
      %v814 = vpack.c.bf16 %v793, %v792
      %v815 = vpack.c.bf16 %v795, %v794
      %v816 = vpack.c.bf16 %v797, %v796
      %v817 = vpack.c.bf16 %v799, %v798
      %v818 = vpack.c.bf16 %v801, %v800
      %v819 = vpack.c.bf16 %v803, %v802
      %v836 = vunpack.c.l.b16 %v804
      %v837 = vunpack.c.h.b16 %v804
      %v838 = vunpack.c.l.b16 %v805
      %v839 = vunpack.c.h.b16 %v805
      %v840 = vunpack.c.l.b16 %v806
      %v841 = vunpack.c.h.b16 %v806
      %v842 = vunpack.c.l.b16 %v807
      %v843 = vunpack.c.h.b16 %v807
      %v844 = vunpack.c.l.b16 %v808
      %v845 = vunpack.c.h.b16 %v808
      %v846 = vunpack.c.l.b16 %v809
      %v847 = vunpack.c.h.b16 %v809
      %v848 = vunpack.c.l.b16 %v810
      %v849 = vunpack.c.h.b16 %v810
      %v850 = vunpack.c.l.b16 %v811
      %v851 = vunpack.c.h.b16 %v811
      %v852 = vunpack.c.l.b16 %v812
      %v853 = vunpack.c.h.b16 %v812
      %v854 = vunpack.c.l.b16 %v813
      %v855 = vunpack.c.h.b16 %v813
      %v856 = vunpack.c.l.b16 %v814
      %v857 = vunpack.c.h.b16 %v814
      %v858 = vunpack.c.l.b16 %v815
      %v859 = vunpack.c.h.b16 %v815
      %v860 = vunpack.c.l.b16 %v816
      %v861 = vunpack.c.h.b16 %v816
      %v862 = vunpack.c.l.b16 %v817
      %v863 = vunpack.c.h.b16 %v817
      %v864 = vunpack.c.l.b16 %v818
      %v865 = vunpack.c.h.b16 %v818
      %v866 = vunpack.c.l.b16 %v819
      %v867 = vunpack.c.h.b16 %v819
      %v868 = vpack.c.b16 %v836, %v836
      %v869 = vpack.c.b16 %v837, %v837
      %v870 = vpack.c.b16 %v838, %v838
      %v871 = vpack.c.b16 %v839, %v839
      %v872 = vpack.c.b16 %v840, %v840
      %v873 = vpack.c.b16 %v841, %v841
      %v874 = vpack.c.b16 %v842, %v842
      %v875 = vpack.c.b16 %v843, %v843
      %v876 = vpack.c.b16 %v844, %v844
      %v877 = vpack.c.b16 %v845, %v845
      %v878 = vpack.c.b16 %v846, %v846
      %v879 = vpack.c.b16 %v847, %v847
      %v880 = vpack.c.b16 %v848, %v848
      %v881 = vpack.c.b16 %v849, %v849
      %v882 = vpack.c.b16 %v850, %v850
      %v883 = vpack.c.b16 %v851, %v851
      %v884 = vpack.c.b16 %v852, %v852
      %v885 = vpack.c.b16 %v853, %v853
      %v886 = vpack.c.b16 %v854, %v854
      %v887 = vpack.c.b16 %v855, %v855
      %v888 = vpack.c.b16 %v856, %v856
      %v889 = vpack.c.b16 %v857, %v857
      %v890 = vpack.c.b16 %v858, %v858
      %v891 = vpack.c.b16 %v859, %v859
      %v892 = vpack.c.b16 %v860, %v860
      %v893 = vpack.c.b16 %v861, %v861
      %v894 = vpack.c.b16 %v862, %v862
      %v895 = vpack.c.b16 %v863, %v863
      %v896 = vpack.c.b16 %v864, %v864
      %v897 = vpack.c.b16 %v865, %v865
      %v898 = vpack.c.b16 %v866, %v866
      %v899 = vpack.c.b16 %v867, %v867
      %932 = vst [vmem:[%s229] sm:$0xf] %v868
      %933 = vst [vmem:[%s229 + $0x4] sm:$0xf] %v869
      %934 = vst [vmem:[%s229 + $0x8] sm:$0xf] %v870
      %935 = vst [vmem:[%s229 + $0xc] sm:$0xf] %v871
      %936 = vst [vmem:[%s229 + $0x10] sm:$0xf] %v872
      %937 = vst [vmem:[%s229 + $0x14] sm:$0xf] %v873
      %938 = vst [vmem:[%s229 + $0x18] sm:$0xf] %v874
      %939 = vst [vmem:[%s229 + $0x1c] sm:$0xf] %v875
      %940 = vst [vmem:[%s229 + $0x20] sm:$0xf] %v876
      %941 = vst [vmem:[%s229 + $0x24] sm:$0xf] %v877
      %942 = vst [vmem:[%s229 + $0x28] sm:$0xf] %v878
      %943 = vst [vmem:[%s229 + $0x2c] sm:$0xf] %v879
      %944 = vst [vmem:[%s229 + $0x30] sm:$0xf] %v880
      %945 = vst [vmem:[%s229 + $0x34] sm:$0xf] %v881
      %946 = vst [vmem:[%s229 + $0x38] sm:$0xf] %v882
      %947 = vst [vmem:[%s229 + $0x3c] sm:$0xf] %v883
      %948 = vst [vmem:[%s229 + $0x40] sm:$0xf] %v884
      %949 = vst [vmem:[%s229 + $0x44] sm:$0xf] %v885
      %950 = vst [vmem:[%s229 + $0x48] sm:$0xf] %v886
      %951 = vst [vmem:[%s229 + $0x4c] sm:$0xf] %v887
      %952 = vst [vmem:[%s229 + $0x50] sm:$0xf] %v888
      %953 = vst [vmem:[%s229 + $0x54] sm:$0xf] %v889
      %954 = vst [vmem:[%s229 + $0x58] sm:$0xf] %v890
      %955 = vst [vmem:[%s229 + $0x5c] sm:$0xf] %v891
      %956 = vst [vmem:[%s229 + $0x60] sm:$0xf] %v892
      %957 = vst [vmem:[%s229 + $0x64] sm:$0xf] %v893
      %958 = vst [vmem:[%s229 + $0x68] sm:$0xf] %v894
      %959 = vst [vmem:[%s229 + $0x6c] sm:$0xf] %v895
      %960 = vst [vmem:[%s229 + $0x70] sm:$0xf] %v896
      %961 = vst [vmem:[%s229 + $0x74] sm:$0xf] %v897
      %962 = vst [vmem:[%s229 + $0x78] sm:$0xf] %v898
      %963 = vst [vmem:[%s229 + $0x7c] sm:$0xf] %v899
      %s964 = smul.u32 32, %s18
      %p965 = scmp.lt.s32.totalorder %s964, 63
      %s966 = scalar_select %p965, %s964, 63
      %p967 = scmp.lt.s32.totalorder %s19, 0
      %s968 = scalar_select %p967, %s19, 0
      %s969 = sadd.s32 %s968, %s966
      %s970 = smul.addr %s969, 4
      %s971 = scalar_lea.vmem %s3, %s970
      // Predicated region
      $region33: #{_lambda_.36} parent=31 // pred_check
        %p972 = pneg %p124
      $region34: #{_lambda_.36} parent=31 // pred_check_branch
        %974 = sbr.rel (%p972) target = $region36
      $region35: #{_lambda_.36} parent=31 // pred_region
        %s975 = smul.u32 32, %s18
      $region36: #{_lambda_.36} parent=31 // pred_fallthru
        _
    $region32: #{_lambda_.36} parent=5 // pred_fallthru
      _
    %p976 = scmp.le.s32.totalorder 2, %s9
    // Predicated region
    $region37: #{_lambda_.36} parent=5 // pred_check
      %p977 = pneg %p976
    $region38: #{_lambda_.36} parent=5 // pred_check_branch
      %979 = sbr.rel (%p977) target = $region40
    $region39: #{_lambda_.36} parent=5 // pred_region
      %s980 = ssub.s32 %s9, 2
      // Predicated region
      $region41: #{_lambda_.36} parent=39 // pred_check
        %p981 = pneg %p130
      $region42: #{_lambda_.36} parent=39 // pred_check_branch
        %983 = sbr.rel (%p981) target = $region44
      $region43: #{_lambda_.36} parent=39 // pred_region
        %s984 = smul.u32 32, %s20
        %p985 = scmp.lt.s32.totalorder %s984, 63
        %s986 = scalar_select %p985, %s984, 63
        %p987 = scmp.lt.s32.totalorder %s21, 0
        %s988 = scalar_select %p987, %s21, 0
        %s989 = sadd.s32 %s988, %s986
        %s990 = smul.addr %s989, 4
        %s991 = scalar_lea.vmem %s3, %s990
      $region44: #{_lambda_.36} parent=39 // pred_fallthru
        _
    $region40: #{_lambda_.36} parent=5 // pred_fallthru
      _
  $region6: #{_lambda_.36} parent=0 // loop_footer
    %s13 = sadd.s32 1, %s9
  $region7: #{_lambda_.36} parent=0 // loop_footer_branch
    %8 = sbr.rel target = $region3
  $region8: #{_lambda_.36} parent=0 // loop_exit
    _

// kernel: _lambda_.37
$region0: #{_lambda_.37}
  #allocation0 [shape = 'u32[]', space=smem, size = 0x4, offset = 0x4, fixed_abs, tag = 'smem constant byte address 0x4 - core index']
  #allocation1 [shape = 'u32[144,128]{1,0:T(1,128)}', space=vmem, size = 0x12000, scoped, tag = 'internal scratch']
  %s0 = inlined_call_operand.vmem [shape: bf16[128,80], index: 0, kind: input, shape index: {}]
  %s1 = inlined_call_operand.vmem [shape: bf16[80,128], index: 1, kind: input, shape index: {}]
  %s2 = inlined_call_operand.vmem [shape: f32[2,128], index: 2, kind: input, shape index: {}]
  %s3 = inlined_call_operand.vmem [shape: bf16[128,128], index: 3, kind: output, shape index: {}]
  %s4 = sld [smem:[#allocation0]]
  $region45: #{_lambda_.37} parent=0
    _
  %s6 = ssub.s32 1, %s4
  %s7 = scalar_select 0, %s6, %s4
  loop: start=0, step=1, limit=4
  $region2: #{_lambda_.37} parent=0 // loop_pre_header
    _
  $region3: #{_lambda_.37} parent=0 // loop_header
    %s9 = sphi 0, %s13
    %p10 = scmp.ge.s32.totalorder %s9, 4
    %s16 = sphi 0, %s28
    %s17 = sphi 0, %s24
    %s18 = sphi 0, %s16
    %s19 = sphi 0, %s17
    %s20 = sphi 0, %s18
    %s21 = sphi 0, %s19
    %s31 = sphi 0, %s33
    %s34 = sphi 0, %s31
    %s35 = sphi 0, %s34
    %s51 = sphi 0, %s35
    %s57 = sphi 0, %s59
    %s60 = sphi 0, %s57
    %s61 = sphi 0, %s60
    %s77 = sphi 0, %s61
    %s83 = sphi 0, %s85
    %s86 = sphi 0, %s83
    %s87 = sphi 0, %s86
    %s103 = sphi 0, %s87
    %s111 = sphi 0, %s113
    %s114 = sphi 0, %s111
    %s115 = sphi 0, %s114
    %s131 = sphi 0, %s115
  $region4: #{_lambda_.37} parent=0 // loop_header_branch
    %12 = sbr.rel (%p10) target = $region8
  $region5: #{_lambda_.37} parent=0 // loop_body
    %s14 = ssub.s32 %s9, 1
    %s15 = ssub.s32 %s9, 2
    %s22 = sadd.s32 1, %s17
    %p23 = scmp.ge.s32.totalorder %s22, 1
    %s24 = scalar_select %p23, 0, %s22
    %s25 = sadd.s32 1, %s16
    %s26 = scalar_select %p23, %s25, %s16
    %p27 = scmp.ge.s32.totalorder %s26, 2
    %s28 = scalar_select %p27, 0, %s26
    %s29 = ssub.s32 %s16, %s28
    %p30 = scmp.eq.s32.totalorder %s29, 0
    %s32 = sadd.s32 %s31, 1
    %s33 = scalar_select %p30, %s31, %s32
    %p36 = pneg %p30
    %p37 = scmp.eq.s32.totalorder %s9, 1
    %p38 = por %p36, %p37
    %p39 = scmp.ne.s32.totalorder %s31, %s34
    %p40 = scmp.eq.s32.totalorder %s9, 0
    %p41 = por %p39, %p40
    %p42 = scmp.ne.s32.totalorder %s31, %s34
    %p43 = scmp.eq.s32.totalorder %s14, 1
    %p44 = por %p42, %p43
    %p45 = scmp.ne.s32.totalorder %s34, %s35
    %p46 = scmp.eq.s32.totalorder %s14, 0
    %p47 = por %p45, %p46
    %p48 = scmp.ne.s32.totalorder %s34, %s35
    %p49 = scmp.eq.s32.totalorder %s15, 1
    %p50 = por %p48, %p49
    %p52 = scmp.ne.s32.totalorder %s35, %s51
    %p53 = scmp.eq.s32.totalorder %s15, 0
    %p54 = por %p52, %p53
    %s55 = ssub.s32 %s17, %s24
    %p56 = scmp.eq.s32.totalorder %s55, 0
    %s58 = sadd.s32 %s57, 1
    %s59 = scalar_select %p56, %s57, %s58
    %p62 = pneg %p56
    %p63 = scmp.eq.s32.totalorder %s9, 1
    %p64 = por %p62, %p63
    %p65 = scmp.ne.s32.totalorder %s57, %s60
    %p66 = scmp.eq.s32.totalorder %s9, 0
    %p67 = por %p65, %p66
    %p68 = scmp.ne.s32.totalorder %s57, %s60
    %p69 = scmp.eq.s32.totalorder %s14, 1
    %p70 = por %p68, %p69
    %p71 = scmp.ne.s32.totalorder %s60, %s61
    %p72 = scmp.eq.s32.totalorder %s14, 0
    %p73 = por %p71, %p72
    %p74 = scmp.ne.s32.totalorder %s60, %s61
    %p75 = scmp.eq.s32.totalorder %s15, 1
    %p76 = por %p74, %p75
    %p78 = scmp.ne.s32.totalorder %s61, %s77
    %p79 = scmp.eq.s32.totalorder %s15, 0
    %p80 = por %p78, %p79
    %s81 = ssub.s32 %s17, %s24
    %p82 = scmp.eq.s32.totalorder %s81, 0
    %s84 = sadd.s32 %s83, 1
    %s85 = scalar_select %p82, %s83, %s84
    %p88 = pneg %p82
    %p89 = scmp.eq.s32.totalorder %s9, 1
    %p90 = por %p88, %p89
    %p91 = scmp.ne.s32.totalorder %s83, %s86
    %p92 = scmp.eq.s32.totalorder %s9, 0
    %p93 = por %p91, %p92
    %p94 = scmp.ne.s32.totalorder %s83, %s86
    %p95 = scmp.eq.s32.totalorder %s14, 1
    %p96 = por %p94, %p95
    %p97 = scmp.ne.s32.totalorder %s86, %s87
    %p98 = scmp.eq.s32.totalorder %s14, 0
    %p99 = por %p97, %p98
    %p100 = scmp.ne.s32.totalorder %s86, %s87
    %p101 = scmp.eq.s32.totalorder %s15, 1
    %p102 = por %p100, %p101
    %p104 = scmp.ne.s32.totalorder %s87, %s103
    %p105 = scmp.eq.s32.totalorder %s15, 0
    %p106 = por %p104, %p105
    %s107 = ssub.s32 %s16, %s28
    %s108 = ssub.s32 %s17, %s24
    %s109 = sor.u32 %s107, %s108
    %p110 = scmp.eq.s32.totalorder %s109, 0
    %s112 = sadd.s32 %s111, 1
    %s113 = scalar_select %p110, %s111, %s112
    %p116 = pneg %p110
    %p117 = scmp.eq.s32.totalorder %s9, 1
    %p118 = por %p116, %p117
    %p119 = scmp.ne.s32.totalorder %s111, %s114
    %p120 = scmp.eq.s32.totalorder %s9, 0
    %p121 = por %p119, %p120
    %p122 = scmp.ne.s32.totalorder %s111, %s114
    %p123 = scmp.eq.s32.totalorder %s14, 1
    %p124 = por %p122, %p123
    %p125 = scmp.ne.s32.totalorder %s114, %s115
    %p126 = scmp.eq.s32.totalorder %s14, 0
    %p127 = por %p125, %p126
    %p128 = scmp.ne.s32.totalorder %s114, %s115
    %p129 = scmp.eq.s32.totalorder %s15, 1
    %p130 = por %p128, %p129
    %p132 = scmp.ne.s32.totalorder %s115, %s131
    %p133 = scmp.eq.s32.totalorder %s15, 0
    %p134 = por %p132, %p133
    %p135 = scmp.le.s32.totalorder 1, %s9
    %p136 = scmp.lt.s32.totalorder %s9, 3
    %p137 = pnand %p135, %p136
    %p138 = pneg %p137
    // Predicated region
    $region9: #{_lambda_.37} parent=5 // pred_check
      _
    $region10: #{_lambda_.37} parent=5 // pred_check_branch
      %140 = sbr.rel (%p137) target = $region12
    $region11: #{_lambda_.37} parent=5 // pred_region
      %s141 = ssub.s32 %s9, 1
      // Predicated region
      $region13: #{_lambda_.37} parent=11 // pred_check
        %p142 = pneg %p73
      $region14: #{_lambda_.37} parent=11 // pred_check_branch
        %144 = sbr.rel (%p142) target = $region16
      $region15: #{_lambda_.37} parent=11 // pred_region
        %p145 = scmp.lt.s32.totalorder %s19, 0
        %s146 = scalar_select %p145, %s19, 0
        %s147 = smul.addr %s146, 4
        %s148 = scalar_lea.vmem %s1, %s147
      $region16: #{_lambda_.37} parent=11 // pred_fallthru
        _
      // Predicated region
      $region17: #{_lambda_.37} parent=11 // pred_check
        %p149 = pneg %p99
      $region18: #{_lambda_.37} parent=11 // pred_check_branch
        %151 = sbr.rel (%p149) target = $region20
      $region19: #{_lambda_.37} parent=11 // pred_region
        %p152 = scmp.lt.s32.totalorder %s19, 0
        %s153 = scalar_select %p152, %s19, 0
        %s154 = smul.addr %s153, 2
        %s155 = scalar_lea.vmem %s2, %s154
      $region20: #{_lambda_.37} parent=11 // pred_fallthru
        _
    $region12: #{_lambda_.37} parent=5 // pred_fallthru
      _
    %p156 = scmp.lt.s32.totalorder %s9, 2
    // Predicated region
    $region21: #{_lambda_.37} parent=5 // pred_check
      %p157 = pneg %p156
    $region22: #{_lambda_.37} parent=5 // pred_check_branch
      %159 = sbr.rel (%p157) target = $region24
    $region23: #{_lambda_.37} parent=5 // pred_region
      // Predicated region
      $region25: #{_lambda_.37} parent=23 // pred_check
        %p160 = pneg %p41
      $region26: #{_lambda_.37} parent=23 // pred_check_branch
        %162 = sbr.rel (%p160) target = $region28
      $region27: #{_lambda_.37} parent=23 // pred_region
        %s163 = smul.u32 8, %s16
        %p164 = scmp.lt.s32.totalorder %s163, 15
        %s165 = scalar_select %p164, %s163, 15
        %s166 = smul.addr %s165, 4
        %s167 = scalar_lea.vmem %s0, %s166
        %s168 = smul.u32 8, %s16
      $region28: #{_lambda_.37} parent=23 // pred_fallthru
        _
    $region24: #{_lambda_.37} parent=5 // pred_fallthru
      _
    %p169 = scmp.le.s32.totalorder 1, %s9
    %p170 = scmp.lt.s32.totalorder %s9, 3
    %p171 = pnand %p169, %p170
    %p172 = pneg %p171
    // Predicated region
    $region29: #{_lambda_.37} parent=5 // pred_check
      _
    $region30: #{_lambda_.37} parent=5 // pred_check_branch
      %174 = sbr.rel (%p171) target = $region32
    $region31: #{_lambda_.37} parent=5 // pred_region
      %s175 = ssub.s32 %s9, 1
      %s176 = smul.u32 8, %s18
      %p177 = scmp.lt.s32.totalorder %s176, 15
      %s178 = scalar_select %p177, %s176, 15
      %s179 = smul.addr %s178, 4
      %s180 = scalar_lea.vmem %s0, %s179
      %p181 = pneg %p47
      %p182 = pneg %p44
      %p183 = scmp.lt.s32.totalorder %s19, 0
      %s184 = scalar_select %p183, %s19, 0
      %s185 = smul.addr %s184, 4
      %s186 = scalar_lea.vmem %s1, %s185
      %p187 = pneg %p73
      %p188 = pneg %p70
      %p189 = scmp.lt.s32.totalorder %s19, 0
      %s190 = scalar_select %p189, %s19, 0
      %s191 = smul.addr %s190, 2
      %s192 = scalar_lea.vmem %s2, %s191
      %p193 = pneg %p99
      %p194 = pneg %p96
      %p195 = pneg %p127
      %p196 = pneg %p124
      %s197 = smul.u32 8, %s18
      %p198 = scmp.lt.s32.totalorder %s197, 15
      %s199 = scalar_select %p198, %s197, 15
      %p200 = scmp.lt.s32.totalorder %s19, 0
      %s201 = scalar_select %p200, %s19, 0
      %s202 = sadd.s32 %s201, %s199
      %s203 = smul.addr %s202, 4
      %s204 = scalar_lea.vmem %s3, %s203
      %s205 = smul.u32 8, %s18
      %p206 = scmp.lt.s32.totalorder %s205, 15
      %s207 = scalar_select %p206, %s205, 15
      %s208 = smul.addr %s207, 4
      %s209 = scalar_lea.vmem %s0, %s208
      %s210 = smul.u32 8, %s18
      %p211 = scmp.lt.s32.totalorder %s19, 0
      %s212 = scalar_select %p211, %s19, 0
      %s213 = smul.addr %s212, 4
      %s214 = scalar_lea.vmem %s1, %s213
      %p215 = scmp.lt.s32.totalorder %s19, 0
      %s216 = scalar_select %p215, %s19, 0
      %s217 = smul.addr %s216, 2
      %s218 = scalar_lea.vmem %s2, %s217
      %s219 = smul.u32 8, %s18
      %p220 = scmp.lt.s32.totalorder %s219, 15
      %s221 = scalar_select %p220, %s219, 15
      %p222 = scmp.lt.s32.totalorder %s19, 0
      %s223 = scalar_select %p222, %s19, 0
      %s224 = sadd.s32 %s223, %s221
      %s225 = smul.addr %s224, 4
      %s226 = scalar_lea.vmem %s3, %s225
      %s227 = smul.u32 8, %s18
      %v229 = vld [vmem:[%s209] sm:$0xf]
      %v230 = vld [vmem:[%s209 + $0x4] sm:$0xf]
      %v231 = vld [vmem:[%s209 + $0x8] sm:$0xf]
      %v232 = vld [vmem:[%s209 + $0xc] sm:$0xf]
      %v233 = vld [vmem:[%s209 + $0x10] sm:$0xf]
      %v234 = vld [vmem:[%s209 + $0x14] sm:$0xf]
      %v235 = vld [vmem:[%s209 + $0x18] sm:$0xf]
      %v236 = vld [vmem:[%s209 + $0x1c] sm:$0xf]
      %v237 = vld [vmem:[%s214] sm:$0xf]
      %v238 = vld [vmem:[%s214 + $0x4] sm:$0xf]
      %v239 = vld [vmem:[%s214 + $0x8] sm:$0xf]
      %v240 = vld [vmem:[%s214 + $0xc] sm:$0xf]
      %v241 = vld [vmem:[%s214 + $0x10] sm:$0xf]
      %v242 = vld [vmem:[%s214 + $0x14] sm:$0xf]
      %v243 = vld [vmem:[%s214 + $0x18] sm:$0xf]
      %v244 = vld [vmem:[%s214 + $0x1c] sm:$0xf]
      %v245 = vld [vmem:[%s214 + $0x20] sm:$0xf]
      %v246 = vld [vmem:[%s214 + $0x24] sm:$0xf]
      %v255 = vunpack.c.l.b16 %v229
      %v256 = vunpack.c.l.b16 %v230
      %v257 = vunpack.c.l.b16 %v231
      %v258 = vunpack.c.l.b16 %v232
      %v259 = vunpack.c.l.b16 %v233
      %v260 = vunpack.c.l.b16 %v234
      %v261 = vunpack.c.l.b16 %v235
      %v262 = vunpack.c.l.b16 %v236
      %v263 = vpack.c.b16 %v256, %v255
      %v264 = vpack.c.b16 %v258, %v257
      %v265 = vpack.c.b16 %v260, %v259
      %v266 = vpack.c.b16 %v262, %v261
      %v277 = vunpack.c.l.b16 %v237
      %v278 = vunpack.c.l.b16 %v238
      %v279 = vunpack.c.l.b16 %v239
      %v280 = vunpack.c.l.b16 %v240
      %v281 = vunpack.c.l.b16 %v241
      %v282 = vunpack.c.l.b16 %v242
      %v283 = vunpack.c.l.b16 %v243
      %v284 = vunpack.c.l.b16 %v244
      %v285 = vunpack.c.l.b16 %v245
      %v286 = vunpack.c.l.b16 %v246
      %v287 = vpack.c.b16 %v278, %v277
      %v288 = vpack.c.b16 %v280, %v279
      %v289 = vpack.c.b16 %v282, %v281
      %v290 = vpack.c.b16 %v284, %v283
      %v291 = vpack.c.b16 %v286, %v285
      %vm297 = vcmask 654336
      %v299 = vsel %vm297, %v263, 0
      %v302 = vsel %vm297, %v264, 0
      %v305 = vsel %vm297, %v265, 0
      %v308 = vsel %vm297, %v266, 0
      %310 = vmatprep.subr.bf16.mxu0 0
      %311 = vmatpush1.bf16.msra.mxu0 0
      %312 = vmatprep.subr.bf16.mxu0 0
      %313 = vmatpush1.bf16.msra.mxu0 0
      %314 = vmatprep.subr.bf16.mxu0 0
      %315 = vmatpush1.bf16.msra.mxu0 0
      %316 = vmatprep.subr.bf16.mxu0 0
      %317 = vmatpush1.bf16.msra.mxu0 %v291
      %318 = vmatprep.subr.bf16.mxu0 0
      %319 = vmatpush1.bf16.msra.mxu0 %v290
      %320 = vmatprep.subr.bf16.mxu0 0
      %321 = vmatpush1.bf16.msra.mxu0 %v289
      %322 = vmatprep.subr.bf16.mxu0 0
      %323 = vmatpush1.bf16.msra.mxu0 %v288
      %324 = vmatprep.subr.bf16.mxu0 0
      %325 = vmatpush1.bf16.msra.mxu0 %v287
      %326 = vmatprep.subr.bf16.mxu0 0
      %327 = vmatpush2.bf16.msra.mxu0 0
      %328 = vmatprep.subr.bf16.mxu0 0
      %329 = vmatpush2.bf16.msra.mxu0 0
      %330 = vmatprep.subr.bf16.mxu0 0
      %331 = vmatpush2.bf16.msra.mxu0 0
      %332 = vmatprep.subr.bf16.mxu0 0
      %333 = vmatpush2.bf16.msra.mxu0 0
      %334 = vmatprep.subr.bf16.mxu0 0
      %335 = vmatpush2.bf16.msra.mxu0 0
      %336 = vmatprep.subr.bf16.mxu0 0
      %337 = vmatpush2.bf16.msra.mxu0 0
      %338 = vmatprep.subr.bf16.mxu0 0
      %339 = vmatpush2.bf16.msra.mxu0 0
      %340 = vmatprep.subr.bf16.mxu0 0
      %341 = vmatpush2.bf16.msra.mxu0 0
      %342 = vmatprep.mubr.bf16.mxu0 0
      %343 = vmatmul.mubr.bf16.gmra.mxu0 %v299
      %v344 = vpop.f32.mrf.mxu0
      %v345 = vadd.f32 0.0, %v344
      %v346 = vpop.f32.mrf.mxu0
      %v347 = vpop.f32.mrf.mxu0
      %v348 = vadd.f32 0.0, %v347
      %v349 = vpop.f32.mrf.mxu0
      %350 = vmatprep.mubr.bf16.mxu0 0
      %351 = vmatmul.mubr.bf16.gmra.mxu0 %v302
      %v352 = vpop.f32.mrf.mxu0
      %v353 = vadd.f32 0.0, %v352
      %v354 = vpop.f32.mrf.mxu0
      %v355 = vpop.f32.mrf.mxu0
      %v356 = vadd.f32 0.0, %v355
      %v357 = vpop.f32.mrf.mxu0
      %358 = vmatprep.mubr.bf16.mxu0 0
      %359 = vmatmul.mubr.bf16.gmra.mxu0 %v305
      %v360 = vpop.f32.mrf.mxu0
      %v361 = vadd.f32 0.0, %v360
      %v362 = vpop.f32.mrf.mxu0
      %v363 = vpop.f32.mrf.mxu0
      %v364 = vadd.f32 0.0, %v363
      %v365 = vpop.f32.mrf.mxu0
      %366 = vmatprep.mubr.bf16.mxu0 0
      %367 = vmatmul.mubr.bf16.gmra.mxu0 %v308
      %v368 = vpop.f32.mrf.mxu0
      %v369 = vadd.f32 0.0, %v368
      %v370 = vpop.f32.mrf.mxu0
      %v371 = vpop.f32.mrf.mxu0
      %v372 = vadd.f32 0.0, %v371
      %v373 = vpop.f32.mrf.mxu0
      %374 = vdwg.mxu0
      %v375 = vld [vmem:[%s218] sm:$0x1]
      %v376 = vlaneseq
      %v377 = vshrl.u32 %v376, 7
      %v378 = vsub.s32 0, %v377
      %v379 = vrot.slane %v375, %v378
      %v380 = vmul.f32 %v345, %v379
      %v381 = vmul.f32 %v348, %v379
      %v382 = vmul.f32 %v353, %v379
      %v383 = vmul.f32 %v356, %v379
      %v384 = vmul.f32 %v361, %v379
      %v385 = vmul.f32 %v364, %v379
      %v386 = vmul.f32 %v369, %v379
      %v387 = vmul.f32 %v372, %v379
      %v388 = vld [vmem:[%s218 + $0x1] sm:$0x1]
      %v389 = vlaneseq
      %v390 = vshrl.u32 %v389, 7
      %v391 = vsub.s32 0, %v390
      %v392 = vrot.slane %v388, %v391
      %v393 = vadd.f32 %v380, %v392
      %v394 = vadd.f32 %v381, %v392
      %v395 = vadd.f32 %v382, %v392
      %v396 = vadd.f32 %v383, %v392
      %v397 = vadd.f32 %v384, %v392
      %v398 = vadd.f32 %v385, %v392
      %v399 = vadd.f32 %v386, %v392
      %v400 = vadd.f32 %v387, %v392
      %v401 = vmax.f32 %v393, 0.0
      %v402 = vmax.f32 %v394, 0.0
      %v403 = vmax.f32 %v395, 0.0
      %v404 = vmax.f32 %v396, 0.0
      %v405 = vmax.f32 %v397, 0.0
      %v406 = vmax.f32 %v398, 0.0
      %v407 = vmax.f32 %v399, 0.0
      %v408 = vmax.f32 %v400, 0.0
      %v409 = vpack.c.bf16 %v402, %v401
      %v410 = vpack.c.bf16 %v404, %v403
      %v411 = vpack.c.bf16 %v406, %v405
      %v412 = vpack.c.bf16 %v408, %v407
      %v417 = vunpack.c.l.b16 %v409
      %v418 = vunpack.c.h.b16 %v409
      %v419 = vunpack.c.l.b16 %v410
      %v420 = vunpack.c.h.b16 %v410
      %v421 = vunpack.c.l.b16 %v411
      %v422 = vunpack.c.h.b16 %v411
      %v423 = vunpack.c.l.b16 %v412
      %v424 = vunpack.c.h.b16 %v412
      %v425 = vpack.c.b16 %v417, %v417
      %v426 = vpack.c.b16 %v418, %v418
      %v427 = vpack.c.b16 %v419, %v419
      %v428 = vpack.c.b16 %v420, %v420
      %v429 = vpack.c.b16 %v421, %v421
      %v430 = vpack.c.b16 %v422, %v422
      %v431 = vpack.c.b16 %v423, %v423
      %v432 = vpack.c.b16 %v424, %v424
      %441 = vst [vmem:[%s226] sm:$0xf] %v425
      %442 = vst [vmem:[%s226 + $0x4] sm:$0xf] %v426
      %443 = vst [vmem:[%s226 + $0x8] sm:$0xf] %v427
      %444 = vst [vmem:[%s226 + $0xc] sm:$0xf] %v428
      %445 = vst [vmem:[%s226 + $0x10] sm:$0xf] %v429
      %446 = vst [vmem:[%s226 + $0x14] sm:$0xf] %v430
      %447 = vst [vmem:[%s226 + $0x18] sm:$0xf] %v431
      %448 = vst [vmem:[%s226 + $0x1c] sm:$0xf] %v432
      %s449 = smul.u32 8, %s18
      %p450 = scmp.lt.s32.totalorder %s449, 15
      %s451 = scalar_select %p450, %s449, 15
      %p452 = scmp.lt.s32.totalorder %s19, 0
      %s453 = scalar_select %p452, %s19, 0
      %s454 = sadd.s32 %s453, %s451
      %s455 = smul.addr %s454, 4
      %s456 = scalar_lea.vmem %s3, %s455
      // Predicated region
      $region33: #{_lambda_.37} parent=31 // pred_check
        %p457 = pneg %p124
      $region34: #{_lambda_.37} parent=31 // pred_check_branch
        %459 = sbr.rel (%p457) target = $region36
      $region35: #{_lambda_.37} parent=31 // pred_region
        %s460 = smul.u32 8, %s18
      $region36: #{_lambda_.37} parent=31 // pred_fallthru
        _
    $region32: #{_lambda_.37} parent=5 // pred_fallthru
      _
    %p461 = scmp.le.s32.totalorder 2, %s9
    // Predicated region
    $region37: #{_lambda_.37} parent=5 // pred_check
      %p462 = pneg %p461
    $region38: #{_lambda_.37} parent=5 // pred_check_branch
      %464 = sbr.rel (%p462) target = $region40
    $region39: #{_lambda_.37} parent=5 // pred_region
      %s465 = ssub.s32 %s9, 2
      // Predicated region
      $region41: #{_lambda_.37} parent=39 // pred_check
        %p466 = pneg %p130
      $region42: #{_lambda_.37} parent=39 // pred_check_branch
        %468 = sbr.rel (%p466) target = $region44
      $region43: #{_lambda_.37} parent=39 // pred_region
        %s469 = smul.u32 8, %s20
        %p470 = scmp.lt.s32.totalorder %s469, 15
        %s471 = scalar_select %p470, %s469, 15
        %p472 = scmp.lt.s32.totalorder %s21, 0
        %s473 = scalar_select %p472, %s21, 0
        %s474 = sadd.s32 %s473, %s471
        %s475 = smul.addr %s474, 4
        %s476 = scalar_lea.vmem %s3, %s475
      $region44: #{_lambda_.37} parent=39 // pred_fallthru
        _
    $region40: #{_lambda_.37} parent=5 // pred_fallthru
      _
  $region6: #{_lambda_.37} parent=0 // loop_footer
    %s13 = sadd.s32 1, %s9
  $region7: #{_lambda_.37} parent=0 // loop_footer_branch
    %8 = sbr.rel target = $region3
  $region8: #{_lambda_.37} parent=0 // loop_exit
    _

// kernel: _lambda_.38
$region0: #{_lambda_.38}
  #allocation0 [shape = 'u32[]', space=smem, size = 0x4, offset = 0x4, fixed_abs, tag = 'smem constant byte address 0x4 - core index']
  #allocation1 [shape = 'u32[144,128]{1,0:T(1,128)}', space=vmem, size = 0x12000, scoped, tag = 'internal scratch']
  %s0 = inlined_call_operand.vmem [shape: bf16[128,80], index: 0, kind: input, shape index: {}]
  %s1 = inlined_call_operand.vmem [shape: bf16[80,128], index: 1, kind: input, shape index: {}]
  %s2 = inlined_call_operand.vmem [shape: f32[2,128], index: 2, kind: input, shape index: {}]
  %s3 = inlined_call_operand.vmem [shape: bf16[128,128], index: 3, kind: input, shape index: {}]
  %s4 = inlined_call_operand.vmem [shape: bf16[128,128], index: 4, kind: output, shape index: {}]
  %s5 = sld [smem:[#allocation0]]
  $region49: #{_lambda_.38} parent=0
    _
  %s7 = ssub.s32 1, %s5
  %s8 = scalar_select 0, %s7, %s5
  loop: start=0, step=1, limit=4
  $region2: #{_lambda_.38} parent=0 // loop_pre_header
    _
  $region3: #{_lambda_.38} parent=0 // loop_header
    %s10 = sphi 0, %s14
    %p11 = scmp.ge.s32.totalorder %s10, 4
    %s17 = sphi 0, %s29
    %s18 = sphi 0, %s25
    %s19 = sphi 0, %s17
    %s20 = sphi 0, %s18
    %s21 = sphi 0, %s19
    %s22 = sphi 0, %s20
    %s32 = sphi 0, %s34
    %s35 = sphi 0, %s32
    %s36 = sphi 0, %s35
    %s52 = sphi 0, %s36
    %s58 = sphi 0, %s60
    %s61 = sphi 0, %s58
    %s62 = sphi 0, %s61
    %s78 = sphi 0, %s62
    %s84 = sphi 0, %s86
    %s87 = sphi 0, %s84
    %s88 = sphi 0, %s87
    %s104 = sphi 0, %s88
    %s112 = sphi 0, %s114
    %s115 = sphi 0, %s112
    %s116 = sphi 0, %s115
    %s132 = sphi 0, %s116
    %s140 = sphi 0, %s142
    %s143 = sphi 0, %s140
    %s144 = sphi 0, %s143
    %s160 = sphi 0, %s144
  $region4: #{_lambda_.38} parent=0 // loop_header_branch
    %13 = sbr.rel (%p11) target = $region8
  $region5: #{_lambda_.38} parent=0 // loop_body
    %s15 = ssub.s32 %s10, 1
    %s16 = ssub.s32 %s10, 2
    %s23 = sadd.s32 1, %s18
    %p24 = scmp.ge.s32.totalorder %s23, 1
    %s25 = scalar_select %p24, 0, %s23
    %s26 = sadd.s32 1, %s17
    %s27 = scalar_select %p24, %s26, %s17
    %p28 = scmp.ge.s32.totalorder %s27, 2
    %s29 = scalar_select %p28, 0, %s27
    %s30 = ssub.s32 %s17, %s29
    %p31 = scmp.eq.s32.totalorder %s30, 0
    %s33 = sadd.s32 %s32, 1
    %s34 = scalar_select %p31, %s32, %s33
    %p37 = pneg %p31
    %p38 = scmp.eq.s32.totalorder %s10, 1
    %p39 = por %p37, %p38
    %p40 = scmp.ne.s32.totalorder %s32, %s35
    %p41 = scmp.eq.s32.totalorder %s10, 0
    %p42 = por %p40, %p41
    %p43 = scmp.ne.s32.totalorder %s32, %s35
    %p44 = scmp.eq.s32.totalorder %s15, 1
    %p45 = por %p43, %p44
    %p46 = scmp.ne.s32.totalorder %s35, %s36
    %p47 = scmp.eq.s32.totalorder %s15, 0
    %p48 = por %p46, %p47
    %p49 = scmp.ne.s32.totalorder %s35, %s36
    %p50 = scmp.eq.s32.totalorder %s16, 1
    %p51 = por %p49, %p50
    %p53 = scmp.ne.s32.totalorder %s36, %s52
    %p54 = scmp.eq.s32.totalorder %s16, 0
    %p55 = por %p53, %p54
    %s56 = ssub.s32 %s18, %s25
    %p57 = scmp.eq.s32.totalorder %s56, 0
    %s59 = sadd.s32 %s58, 1
    %s60 = scalar_select %p57, %s58, %s59
    %p63 = pneg %p57
    %p64 = scmp.eq.s32.totalorder %s10, 1
    %p65 = por %p63, %p64
    %p66 = scmp.ne.s32.totalorder %s58, %s61
    %p67 = scmp.eq.s32.totalorder %s10, 0
    %p68 = por %p66, %p67
    %p69 = scmp.ne.s32.totalorder %s58, %s61
    %p70 = scmp.eq.s32.totalorder %s15, 1
    %p71 = por %p69, %p70
    %p72 = scmp.ne.s32.totalorder %s61, %s62
    %p73 = scmp.eq.s32.totalorder %s15, 0
    %p74 = por %p72, %p73
    %p75 = scmp.ne.s32.totalorder %s61, %s62
    %p76 = scmp.eq.s32.totalorder %s16, 1
    %p77 = por %p75, %p76
    %p79 = scmp.ne.s32.totalorder %s62, %s78
    %p80 = scmp.eq.s32.totalorder %s16, 0
    %p81 = por %p79, %p80
    %s82 = ssub.s32 %s18, %s25
    %p83 = scmp.eq.s32.totalorder %s82, 0
    %s85 = sadd.s32 %s84, 1
    %s86 = scalar_select %p83, %s84, %s85
    %p89 = pneg %p83
    %p90 = scmp.eq.s32.totalorder %s10, 1
    %p91 = por %p89, %p90
    %p92 = scmp.ne.s32.totalorder %s84, %s87
    %p93 = scmp.eq.s32.totalorder %s10, 0
    %p94 = por %p92, %p93
    %p95 = scmp.ne.s32.totalorder %s84, %s87
    %p96 = scmp.eq.s32.totalorder %s15, 1
    %p97 = por %p95, %p96
    %p98 = scmp.ne.s32.totalorder %s87, %s88
    %p99 = scmp.eq.s32.totalorder %s15, 0
    %p100 = por %p98, %p99
    %p101 = scmp.ne.s32.totalorder %s87, %s88
    %p102 = scmp.eq.s32.totalorder %s16, 1
    %p103 = por %p101, %p102
    %p105 = scmp.ne.s32.totalorder %s88, %s104
    %p106 = scmp.eq.s32.totalorder %s16, 0
    %p107 = por %p105, %p106
    %s108 = ssub.s32 %s17, %s29
    %s109 = ssub.s32 %s18, %s25
    %s110 = sor.u32 %s108, %s109
    %p111 = scmp.eq.s32.totalorder %s110, 0
    %s113 = sadd.s32 %s112, 1
    %s114 = scalar_select %p111, %s112, %s113
    %p117 = pneg %p111
    %p118 = scmp.eq.s32.totalorder %s10, 1
    %p119 = por %p117, %p118
    %p120 = scmp.ne.s32.totalorder %s112, %s115
    %p121 = scmp.eq.s32.totalorder %s10, 0
    %p122 = por %p120, %p121
    %p123 = scmp.ne.s32.totalorder %s112, %s115
    %p124 = scmp.eq.s32.totalorder %s15, 1
    %p125 = por %p123, %p124
    %p126 = scmp.ne.s32.totalorder %s115, %s116
    %p127 = scmp.eq.s32.totalorder %s15, 0
    %p128 = por %p126, %p127
    %p129 = scmp.ne.s32.totalorder %s115, %s116
    %p130 = scmp.eq.s32.totalorder %s16, 1
    %p131 = por %p129, %p130
    %p133 = scmp.ne.s32.totalorder %s116, %s132
    %p134 = scmp.eq.s32.totalorder %s16, 0
    %p135 = por %p133, %p134
    %s136 = ssub.s32 %s17, %s29
    %s137 = ssub.s32 %s18, %s25
    %s138 = sor.u32 %s136, %s137
    %p139 = scmp.eq.s32.totalorder %s138, 0
    %s141 = sadd.s32 %s140, 1
    %s142 = scalar_select %p139, %s140, %s141
    %p145 = pneg %p139
    %p146 = scmp.eq.s32.totalorder %s10, 1
    %p147 = por %p145, %p146
    %p148 = scmp.ne.s32.totalorder %s140, %s143
    %p149 = scmp.eq.s32.totalorder %s10, 0
    %p150 = por %p148, %p149
    %p151 = scmp.ne.s32.totalorder %s140, %s143
    %p152 = scmp.eq.s32.totalorder %s15, 1
    %p153 = por %p151, %p152
    %p154 = scmp.ne.s32.totalorder %s143, %s144
    %p155 = scmp.eq.s32.totalorder %s15, 0
    %p156 = por %p154, %p155
    %p157 = scmp.ne.s32.totalorder %s143, %s144
    %p158 = scmp.eq.s32.totalorder %s16, 1
    %p159 = por %p157, %p158
    %p161 = scmp.ne.s32.totalorder %s144, %s160
    %p162 = scmp.eq.s32.totalorder %s16, 0
    %p163 = por %p161, %p162
    %p164 = scmp.le.s32.totalorder 1, %s10
    %p165 = scmp.lt.s32.totalorder %s10, 3
    %p166 = pnand %p164, %p165
    %p167 = pneg %p166
    // Predicated region
    $region9: #{_lambda_.38} parent=5 // pred_check
      _
    $region10: #{_lambda_.38} parent=5 // pred_check_branch
      %169 = sbr.rel (%p166) target = $region12
    $region11: #{_lambda_.38} parent=5 // pred_region
      %s170 = ssub.s32 %s10, 1
      // Predicated region
      $region13: #{_lambda_.38} parent=11 // pred_check
        %p171 = pneg %p74
      $region14: #{_lambda_.38} parent=11 // pred_check_branch
        %173 = sbr.rel (%p171) target = $region16
      $region15: #{_lambda_.38} parent=11 // pred_region
        %p174 = scmp.lt.s32.totalorder %s20, 0
        %s175 = scalar_select %p174, %s20, 0
        %s176 = smul.addr %s175, 4
        %s177 = scalar_lea.vmem %s1, %s176
      $region16: #{_lambda_.38} parent=11 // pred_fallthru
        _
      // Predicated region
      $region17: #{_lambda_.38} parent=11 // pred_check
        %p178 = pneg %p100
      $region18: #{_lambda_.38} parent=11 // pred_check_branch
        %180 = sbr.rel (%p178) target = $region20
      $region19: #{_lambda_.38} parent=11 // pred_region
        %p181 = scmp.lt.s32.totalorder %s20, 0
        %s182 = scalar_select %p181, %s20, 0
        %s183 = smul.addr %s182, 2
        %s184 = scalar_lea.vmem %s2, %s183
      $region20: #{_lambda_.38} parent=11 // pred_fallthru
        _
    $region12: #{_lambda_.38} parent=5 // pred_fallthru
      _
    %p185 = scmp.lt.s32.totalorder %s10, 2
    // Predicated region
    $region21: #{_lambda_.38} parent=5 // pred_check
      %p186 = pneg %p185
    $region22: #{_lambda_.38} parent=5 // pred_check_branch
      %188 = sbr.rel (%p186) target = $region24
    $region23: #{_lambda_.38} parent=5 // pred_region
      // Predicated region
      $region25: #{_lambda_.38} parent=23 // pred_check
        %p189 = pneg %p42
      $region26: #{_lambda_.38} parent=23 // pred_check_branch
        %191 = sbr.rel (%p189) target = $region28
      $region27: #{_lambda_.38} parent=23 // pred_region
        %s192 = smul.u32 8, %s17
        %p193 = scmp.lt.s32.totalorder %s192, 15
        %s194 = scalar_select %p193, %s192, 15
        %s195 = smul.addr %s194, 4
        %s196 = scalar_lea.vmem %s0, %s195
        %s197 = smul.u32 8, %s17
      $region28: #{_lambda_.38} parent=23 // pred_fallthru
        _
      // Predicated region
      $region29: #{_lambda_.38} parent=23 // pred_check
        %p198 = pneg %p122
      $region30: #{_lambda_.38} parent=23 // pred_check_branch
        %200 = sbr.rel (%p198) target = $region32
      $region31: #{_lambda_.38} parent=23 // pred_region
        %s201 = smul.u32 8, %s17
        %p202 = scmp.lt.s32.totalorder %s201, 15
        %s203 = scalar_select %p202, %s201, 15
        %p204 = scmp.lt.s32.totalorder %s18, 0
        %s205 = scalar_select %p204, %s18, 0
        %s206 = sadd.s32 %s205, %s203
        %s207 = smul.addr %s206, 4
        %s208 = scalar_lea.vmem %s3, %s207
        %s209 = smul.u32 8, %s17
      $region32: #{_lambda_.38} parent=23 // pred_fallthru
        _
    $region24: #{_lambda_.38} parent=5 // pred_fallthru
      _
    %p210 = scmp.le.s32.totalorder 1, %s10
    %p211 = scmp.lt.s32.totalorder %s10, 3
    %p212 = pnand %p210, %p211
    %p213 = pneg %p212
    // Predicated region
    $region33: #{_lambda_.38} parent=5 // pred_check
      _
    $region34: #{_lambda_.38} parent=5 // pred_check_branch
      %215 = sbr.rel (%p212) target = $region36
    $region35: #{_lambda_.38} parent=5 // pred_region
      %s216 = ssub.s32 %s10, 1
      %s217 = smul.u32 8, %s19
      %p218 = scmp.lt.s32.totalorder %s217, 15
      %s219 = scalar_select %p218, %s217, 15
      %s220 = smul.addr %s219, 4
      %s221 = scalar_lea.vmem %s0, %s220
      %p222 = pneg %p48
      %p223 = pneg %p45
      %p224 = scmp.lt.s32.totalorder %s20, 0
      %s225 = scalar_select %p224, %s20, 0
      %s226 = smul.addr %s225, 4
      %s227 = scalar_lea.vmem %s1, %s226
      %p228 = pneg %p74
      %p229 = pneg %p71
      %p230 = scmp.lt.s32.totalorder %s20, 0
      %s231 = scalar_select %p230, %s20, 0
      %s232 = smul.addr %s231, 2
      %s233 = scalar_lea.vmem %s2, %s232
      %p234 = pneg %p100
      %p235 = pneg %p97
      %s236 = smul.u32 8, %s19
      %p237 = scmp.lt.s32.totalorder %s236, 15
      %s238 = scalar_select %p237, %s236, 15
      %p239 = scmp.lt.s32.totalorder %s20, 0
      %s240 = scalar_select %p239, %s20, 0
      %s241 = sadd.s32 %s240, %s238
      %s242 = smul.addr %s241, 4
      %s243 = scalar_lea.vmem %s3, %s242
      %p244 = pneg %p128
      %p245 = pneg %p125
      %p246 = pneg %p156
      %p247 = pneg %p153
      %s248 = smul.u32 8, %s19
      %p249 = scmp.lt.s32.totalorder %s248, 15
      %s250 = scalar_select %p249, %s248, 15
      %p251 = scmp.lt.s32.totalorder %s20, 0
      %s252 = scalar_select %p251, %s20, 0
      %s253 = sadd.s32 %s252, %s250
      %s254 = smul.addr %s253, 4
      %s255 = scalar_lea.vmem %s4, %s254
      %s256 = smul.u32 8, %s19
      %p257 = scmp.lt.s32.totalorder %s256, 15
      %s258 = scalar_select %p257, %s256, 15
      %s259 = smul.addr %s258, 4
      %s260 = scalar_lea.vmem %s0, %s259
      %s261 = smul.u32 8, %s19
      %p262 = scmp.lt.s32.totalorder %s20, 0
      %s263 = scalar_select %p262, %s20, 0
      %s264 = smul.addr %s263, 4
      %s265 = scalar_lea.vmem %s1, %s264
      %p266 = scmp.lt.s32.totalorder %s20, 0
      %s267 = scalar_select %p266, %s20, 0
      %s268 = smul.addr %s267, 2
      %s269 = scalar_lea.vmem %s2, %s268
      %s270 = smul.u32 8, %s19
      %p271 = scmp.lt.s32.totalorder %s270, 15
      %s272 = scalar_select %p271, %s270, 15
      %p273 = scmp.lt.s32.totalorder %s20, 0
      %s274 = scalar_select %p273, %s20, 0
      %s275 = sadd.s32 %s274, %s272
      %s276 = smul.addr %s275, 4
      %s277 = scalar_lea.vmem %s3, %s276
      %s278 = smul.u32 8, %s19
      %s279 = smul.u32 8, %s19
      %p280 = scmp.lt.s32.totalorder %s279, 15
      %s281 = scalar_select %p280, %s279, 15
      %p282 = scmp.lt.s32.totalorder %s20, 0
      %s283 = scalar_select %p282, %s20, 0
      %s284 = sadd.s32 %s283, %s281
      %s285 = smul.addr %s284, 4
      %s286 = scalar_lea.vmem %s4, %s285
      %s287 = smul.u32 8, %s19
      %v289 = vld [vmem:[%s260] sm:$0xf]
      %v290 = vld [vmem:[%s260 + $0x4] sm:$0xf]
      %v291 = vld [vmem:[%s260 + $0x8] sm:$0xf]
      %v292 = vld [vmem:[%s260 + $0xc] sm:$0xf]
      %v293 = vld [vmem:[%s260 + $0x10] sm:$0xf]
      %v294 = vld [vmem:[%s260 + $0x14] sm:$0xf]
      %v295 = vld [vmem:[%s260 + $0x18] sm:$0xf]
      %v296 = vld [vmem:[%s260 + $0x1c] sm:$0xf]
      %v297 = vld [vmem:[%s265] sm:$0xf]
      %v298 = vld [vmem:[%s265 + $0x4] sm:$0xf]
      %v299 = vld [vmem:[%s265 + $0x8] sm:$0xf]
      %v300 = vld [vmem:[%s265 + $0xc] sm:$0xf]
      %v301 = vld [vmem:[%s265 + $0x10] sm:$0xf]
      %v302 = vld [vmem:[%s265 + $0x14] sm:$0xf]
      %v303 = vld [vmem:[%s265 + $0x18] sm:$0xf]
      %v304 = vld [vmem:[%s265 + $0x1c] sm:$0xf]
      %v305 = vld [vmem:[%s265 + $0x20] sm:$0xf]
      %v306 = vld [vmem:[%s265 + $0x24] sm:$0xf]
      %v315 = vunpack.c.l.b16 %v289
      %v316 = vunpack.c.l.b16 %v290
      %v317 = vunpack.c.l.b16 %v291
      %v318 = vunpack.c.l.b16 %v292
      %v319 = vunpack.c.l.b16 %v293
      %v320 = vunpack.c.l.b16 %v294
      %v321 = vunpack.c.l.b16 %v295
      %v322 = vunpack.c.l.b16 %v296
      %v323 = vpack.c.b16 %v316, %v315
      %v324 = vpack.c.b16 %v318, %v317
      %v325 = vpack.c.b16 %v320, %v319
      %v326 = vpack.c.b16 %v322, %v321
      %v337 = vunpack.c.l.b16 %v297
      %v338 = vunpack.c.l.b16 %v298
      %v339 = vunpack.c.l.b16 %v299
      %v340 = vunpack.c.l.b16 %v300
      %v341 = vunpack.c.l.b16 %v301
      %v342 = vunpack.c.l.b16 %v302
      %v343 = vunpack.c.l.b16 %v303
      %v344 = vunpack.c.l.b16 %v304
      %v345 = vunpack.c.l.b16 %v305
      %v346 = vunpack.c.l.b16 %v306
      %v347 = vpack.c.b16 %v338, %v337
      %v348 = vpack.c.b16 %v340, %v339
      %v349 = vpack.c.b16 %v342, %v341
      %v350 = vpack.c.b16 %v344, %v343
      %v351 = vpack.c.b16 %v346, %v345
      %vm357 = vcmask 654336
      %v359 = vsel %vm357, %v323, 0
      %v362 = vsel %vm357, %v324, 0
      %v365 = vsel %vm357, %v325, 0
      %v368 = vsel %vm357, %v326, 0
      %370 = vmatprep.subr.bf16.mxu0 0
      %371 = vmatpush1.bf16.msra.mxu0 0
      %372 = vmatprep.subr.bf16.mxu0 0
      %373 = vmatpush1.bf16.msra.mxu0 0
      %374 = vmatprep.subr.bf16.mxu0 0
      %375 = vmatpush1.bf16.msra.mxu0 0
      %376 = vmatprep.subr.bf16.mxu0 0
      %377 = vmatpush1.bf16.msra.mxu0 %v351
      %378 = vmatprep.subr.bf16.mxu0 0
      %379 = vmatpush1.bf16.msra.mxu0 %v350
      %380 = vmatprep.subr.bf16.mxu0 0
      %381 = vmatpush1.bf16.msra.mxu0 %v349
      %382 = vmatprep.subr.bf16.mxu0 0
      %383 = vmatpush1.bf16.msra.mxu0 %v348
      %384 = vmatprep.subr.bf16.mxu0 0
      %385 = vmatpush1.bf16.msra.mxu0 %v347
      %386 = vmatprep.subr.bf16.mxu0 0
      %387 = vmatpush2.bf16.msra.mxu0 0
      %388 = vmatprep.subr.bf16.mxu0 0
      %389 = vmatpush2.bf16.msra.mxu0 0
      %390 = vmatprep.subr.bf16.mxu0 0
      %391 = vmatpush2.bf16.msra.mxu0 0
      %392 = vmatprep.subr.bf16.mxu0 0
      %393 = vmatpush2.bf16.msra.mxu0 0
      %394 = vmatprep.subr.bf16.mxu0 0
      %395 = vmatpush2.bf16.msra.mxu0 0
      %396 = vmatprep.subr.bf16.mxu0 0
      %397 = vmatpush2.bf16.msra.mxu0 0
      %398 = vmatprep.subr.bf16.mxu0 0
      %399 = vmatpush2.bf16.msra.mxu0 0
      %400 = vmatprep.subr.bf16.mxu0 0
      %401 = vmatpush2.bf16.msra.mxu0 0
      %402 = vmatprep.mubr.bf16.mxu0 0
      %403 = vmatmul.mubr.bf16.gmra.mxu0 %v359
      %v404 = vpop.f32.mrf.mxu0
      %v405 = vadd.f32 0.0, %v404
      %v406 = vpop.f32.mrf.mxu0
      %v407 = vpop.f32.mrf.mxu0
      %v408 = vadd.f32 0.0, %v407
      %v409 = vpop.f32.mrf.mxu0
      %410 = vmatprep.mubr.bf16.mxu0 0
      %411 = vmatmul.mubr.bf16.gmra.mxu0 %v362
      %v412 = vpop.f32.mrf.mxu0
      %v413 = vadd.f32 0.0, %v412
      %v414 = vpop.f32.mrf.mxu0
      %v415 = vpop.f32.mrf.mxu0
      %v416 = vadd.f32 0.0, %v415
      %v417 = vpop.f32.mrf.mxu0
      %418 = vmatprep.mubr.bf16.mxu0 0
      %419 = vmatmul.mubr.bf16.gmra.mxu0 %v365
      %v420 = vpop.f32.mrf.mxu0
      %v421 = vadd.f32 0.0, %v420
      %v422 = vpop.f32.mrf.mxu0
      %v423 = vpop.f32.mrf.mxu0
      %v424 = vadd.f32 0.0, %v423
      %v425 = vpop.f32.mrf.mxu0
      %426 = vmatprep.mubr.bf16.mxu0 0
      %427 = vmatmul.mubr.bf16.gmra.mxu0 %v368
      %v428 = vpop.f32.mrf.mxu0
      %v429 = vadd.f32 0.0, %v428
      %v430 = vpop.f32.mrf.mxu0
      %v431 = vpop.f32.mrf.mxu0
      %v432 = vadd.f32 0.0, %v431
      %v433 = vpop.f32.mrf.mxu0
      %434 = vdwg.mxu0
      %v435 = vld [vmem:[%s269] sm:$0x1]
      %v436 = vlaneseq
      %v437 = vshrl.u32 %v436, 7
      %v438 = vsub.s32 0, %v437
      %v439 = vrot.slane %v435, %v438
      %v440 = vmul.f32 %v405, %v439
      %v441 = vmul.f32 %v408, %v439
      %v442 = vmul.f32 %v413, %v439
      %v443 = vmul.f32 %v416, %v439
      %v444 = vmul.f32 %v421, %v439
      %v445 = vmul.f32 %v424, %v439
      %v446 = vmul.f32 %v429, %v439
      %v447 = vmul.f32 %v432, %v439
      %v448 = vld [vmem:[%s269 + $0x1] sm:$0x1]
      %v449 = vlaneseq
      %v450 = vshrl.u32 %v449, 7
      %v451 = vsub.s32 0, %v450
      %v452 = vrot.slane %v448, %v451
      %v453 = vadd.f32 %v440, %v452
      %v454 = vadd.f32 %v441, %v452
      %v455 = vadd.f32 %v442, %v452
      %v456 = vadd.f32 %v443, %v452
      %v457 = vadd.f32 %v444, %v452
      %v458 = vadd.f32 %v445, %v452
      %v459 = vadd.f32 %v446, %v452
      %v460 = vadd.f32 %v447, %v452
      %v461 = vld [vmem:[%s277] sm:$0xf]
      %v462 = vld [vmem:[%s277 + $0x4] sm:$0xf]
      %v463 = vld [vmem:[%s277 + $0x8] sm:$0xf]
      %v464 = vld [vmem:[%s277 + $0xc] sm:$0xf]
      %v465 = vld [vmem:[%s277 + $0x10] sm:$0xf]
      %v466 = vld [vmem:[%s277 + $0x14] sm:$0xf]
      %v467 = vld [vmem:[%s277 + $0x18] sm:$0xf]
      %v468 = vld [vmem:[%s277 + $0x1c] sm:$0xf]
      %v469 = vunpack.c.l.bf16 %v461
      %v470 = vunpack.c.l.bf16 %v462
      %v471 = vunpack.c.l.bf16 %v463
      %v472 = vunpack.c.l.bf16 %v464
      %v473 = vunpack.c.l.bf16 %v465
      %v474 = vunpack.c.l.bf16 %v466
      %v475 = vunpack.c.l.bf16 %v467
      %v476 = vunpack.c.l.bf16 %v468
      %v477 = vadd.f32 %v453, %v469
      %v478 = vadd.f32 %v454, %v470
      %v479 = vadd.f32 %v455, %v471
      %v480 = vadd.f32 %v456, %v472
      %v481 = vadd.f32 %v457, %v473
      %v482 = vadd.f32 %v458, %v474
      %v483 = vadd.f32 %v459, %v475
      %v484 = vadd.f32 %v460, %v476
      %v485 = vmax.f32 %v477, 0.0
      %v486 = vmax.f32 %v478, 0.0
      %v487 = vmax.f32 %v479, 0.0
      %v488 = vmax.f32 %v480, 0.0
      %v489 = vmax.f32 %v481, 0.0
      %v490 = vmax.f32 %v482, 0.0
      %v491 = vmax.f32 %v483, 0.0
      %v492 = vmax.f32 %v484, 0.0
      %v493 = vpack.c.bf16 %v486, %v485
      %v494 = vpack.c.bf16 %v488, %v487
      %v495 = vpack.c.bf16 %v490, %v489
      %v496 = vpack.c.bf16 %v492, %v491
      %v501 = vunpack.c.l.b16 %v493
      %v502 = vunpack.c.h.b16 %v493
      %v503 = vunpack.c.l.b16 %v494
      %v504 = vunpack.c.h.b16 %v494
      %v505 = vunpack.c.l.b16 %v495
      %v506 = vunpack.c.h.b16 %v495
      %v507 = vunpack.c.l.b16 %v496
      %v508 = vunpack.c.h.b16 %v496
      %v509 = vpack.c.b16 %v501, %v501
      %v510 = vpack.c.b16 %v502, %v502
      %v511 = vpack.c.b16 %v503, %v503
      %v512 = vpack.c.b16 %v504, %v504
      %v513 = vpack.c.b16 %v505, %v505
      %v514 = vpack.c.b16 %v506, %v506
      %v515 = vpack.c.b16 %v507, %v507
      %v516 = vpack.c.b16 %v508, %v508
      %525 = vst [vmem:[%s286] sm:$0xf] %v509
      %526 = vst [vmem:[%s286 + $0x4] sm:$0xf] %v510
      %527 = vst [vmem:[%s286 + $0x8] sm:$0xf] %v511
      %528 = vst [vmem:[%s286 + $0xc] sm:$0xf] %v512
      %529 = vst [vmem:[%s286 + $0x10] sm:$0xf] %v513
      %530 = vst [vmem:[%s286 + $0x14] sm:$0xf] %v514
      %531 = vst [vmem:[%s286 + $0x18] sm:$0xf] %v515
      %532 = vst [vmem:[%s286 + $0x1c] sm:$0xf] %v516
      %s533 = smul.u32 8, %s19
      %p534 = scmp.lt.s32.totalorder %s533, 15
      %s535 = scalar_select %p534, %s533, 15
      %p536 = scmp.lt.s32.totalorder %s20, 0
      %s537 = scalar_select %p536, %s20, 0
      %s538 = sadd.s32 %s537, %s535
      %s539 = smul.addr %s538, 4
      %s540 = scalar_lea.vmem %s4, %s539
      // Predicated region
      $region37: #{_lambda_.38} parent=35 // pred_check
        %p541 = pneg %p153
      $region38: #{_lambda_.38} parent=35 // pred_check_branch
        %543 = sbr.rel (%p541) target = $region40
      $region39: #{_lambda_.38} parent=35 // pred_region
        %s544 = smul.u32 8, %s19
      $region40: #{_lambda_.38} parent=35 // pred_fallthru
        _
    $region36: #{_lambda_.38} parent=5 // pred_fallthru
      _
    %p545 = scmp.le.s32.totalorder 2, %s10
    // Predicated region
    $region41: #{_lambda_.38} parent=5 // pred_check
      %p546 = pneg %p545
    $region42: #{_lambda_.38} parent=5 // pred_check_branch
      %548 = sbr.rel (%p546) target = $region44
    $region43: #{_lambda_.38} parent=5 // pred_region
      %s549 = ssub.s32 %s10, 2
      // Predicated region
      $region45: #{_lambda_.38} parent=43 // pred_check
        %p550 = pneg %p159
      $region46: #{_lambda_.38} parent=43 // pred_check_branch
        %552 = sbr.rel (%p550) target = $region48
      $region47: #{_lambda_.38} parent=43 // pred_region
        %s553 = smul.u32 8, %s21
        %p554 = scmp.lt.s32.totalorder %s553, 15
        %s555 = scalar_select %p554, %s553, 15
        %p556 = scmp.lt.s32.totalorder %s22, 0
        %s557 = scalar_select %p556, %s22, 0
        %s558 = sadd.s32 %s557, %s555
        %s559 = smul.addr %s558, 4
        %s560 = scalar_lea.vmem %s4, %s559
      $region48: #{_lambda_.38} parent=43 // pred_fallthru
        _
    $region44: #{_lambda_.38} parent=5 // pred_fallthru
      _
  $region6: #{_lambda_.38} parent=0 // loop_footer
    %s14 = sadd.s32 1, %s10
  $region7: #{_lambda_.38} parent=0 // loop_footer_branch
    %9 = sbr.rel target = $region3
  $region8: #{_lambda_.38} parent=0 // loop_exit
    _

// kernel: _lambda_.44
$region0: #{_lambda_.44}
  #allocation0 [shape = 'u32[]', space=smem, size = 0x4, offset = 0x4, fixed_abs, tag = 'smem constant byte address 0x4 - core index']
  #allocation1 [shape = 'u32[144,128]{1,0:T(1,128)}', space=vmem, size = 0x12000, scoped, tag = 'internal scratch']
  %s0 = inlined_call_operand.vmem [shape: bf16[32,80], index: 0, kind: input, shape index: {}]
  %s1 = inlined_call_operand.vmem [shape: bf16[80,128], index: 1, kind: input, shape index: {}]
  %s2 = inlined_call_operand.vmem [shape: f32[2,128], index: 2, kind: input, shape index: {}]
  %s3 = inlined_call_operand.vmem [shape: bf16[32,128], index: 3, kind: output, shape index: {}]
  %s4 = sld [smem:[#allocation0]]
  $region22: #{_lambda_.44} parent=0
    _
  %s6 = ssub.s32 1, %s4
  %s7 = scalar_select 0, %s6, %s4
  // Predicated region
  $region2: #{_lambda_.44} parent=0 // pred_check
    _
  $region3: #{_lambda_.44} parent=0 // pred_check_branch
    %9 = sbr.rel (0) target = $region5
  $region4: #{_lambda_.44} parent=0 // pred_region
    _
  $region5: #{_lambda_.44} parent=0 // pred_fallthru
    _
  // Predicated region
  $region6: #{_lambda_.44} parent=0 // pred_check
    _
  $region7: #{_lambda_.44} parent=0 // pred_check_branch
    %11 = sbr.rel (0) target = $region9
  $region8: #{_lambda_.44} parent=0 // pred_region
    _
  $region9: #{_lambda_.44} parent=0 // pred_fallthru
    _
  // Predicated region
  $region10: #{_lambda_.44} parent=0 // pred_check
    _
  $region11: #{_lambda_.44} parent=0 // pred_check_branch
    %13 = sbr.rel (0) target = $region13
  $region12: #{_lambda_.44} parent=0 // pred_region
    _
  $region13: #{_lambda_.44} parent=0 // pred_fallthru
    _
  %v15 = vld [vmem:[%s0] sm:$0xf]
  %v16 = vld [vmem:[%s0 + $0x4] sm:$0xf]
  %v17 = vld [vmem:[%s0 + $0x8] sm:$0xf]
  %v18 = vld [vmem:[%s0 + $0xc] sm:$0xf]
  %v19 = vld [vmem:[%s1] sm:$0xf]
  %v20 = vld [vmem:[%s1 + $0x4] sm:$0xf]
  %v21 = vld [vmem:[%s1 + $0x8] sm:$0xf]
  %v22 = vld [vmem:[%s1 + $0xc] sm:$0xf]
  %v23 = vld [vmem:[%s1 + $0x10] sm:$0xf]
  %v24 = vld [vmem:[%s1 + $0x14] sm:$0xf]
  %v25 = vld [vmem:[%s1 + $0x18] sm:$0xf]
  %v26 = vld [vmem:[%s1 + $0x1c] sm:$0xf]
  %v27 = vld [vmem:[%s1 + $0x20] sm:$0xf]
  %v28 = vld [vmem:[%s1 + $0x24] sm:$0xf]
  %v33 = vunpack.c.l.b16 %v15
  %v34 = vunpack.c.l.b16 %v16
  %v35 = vunpack.c.l.b16 %v17
  %v36 = vunpack.c.l.b16 %v18
  %v37 = vpack.c.b16 %v34, %v33
  %v38 = vpack.c.b16 %v36, %v35
  %v49 = vunpack.c.l.b16 %v19
  %v50 = vunpack.c.l.b16 %v20
  %v51 = vunpack.c.l.b16 %v21
  %v52 = vunpack.c.l.b16 %v22
  %v53 = vunpack.c.l.b16 %v23
  %v54 = vunpack.c.l.b16 %v24
  %v55 = vunpack.c.l.b16 %v25
  %v56 = vunpack.c.l.b16 %v26
  %v57 = vunpack.c.l.b16 %v27
  %v58 = vunpack.c.l.b16 %v28
  %v59 = vpack.c.b16 %v50, %v49
  %v60 = vpack.c.b16 %v52, %v51
  %v61 = vpack.c.b16 %v54, %v53
  %v62 = vpack.c.b16 %v56, %v55
  %v63 = vpack.c.b16 %v58, %v57
  %vm69 = vcmask 654336
  %v71 = vsel %vm69, %v37, 0
  %v74 = vsel %vm69, %v38, 0
  %76 = vmatprep.subr.bf16.mxu0 0
  %77 = vmatpush1.bf16.msra.mxu0 0
  %78 = vmatprep.subr.bf16.mxu0 0
  %79 = vmatpush1.bf16.msra.mxu0 0
  %80 = vmatprep.subr.bf16.mxu0 0
  %81 = vmatpush1.bf16.msra.mxu0 0
  %82 = vmatprep.subr.bf16.mxu0 0
  %83 = vmatpush1.bf16.msra.mxu0 %v63
  %84 = vmatprep.subr.bf16.mxu0 0
  %85 = vmatpush1.bf16.msra.mxu0 %v62
  %86 = vmatprep.subr.bf16.mxu0 0
  %87 = vmatpush1.bf16.msra.mxu0 %v61
  %88 = vmatprep.subr.bf16.mxu0 0
  %89 = vmatpush1.bf16.msra.mxu0 %v60
  %90 = vmatprep.subr.bf16.mxu0 0
  %91 = vmatpush1.bf16.msra.mxu0 %v59
  %92 = vmatprep.subr.bf16.mxu0 0
  %93 = vmatpush2.bf16.msra.mxu0 0
  %94 = vmatprep.subr.bf16.mxu0 0
  %95 = vmatpush2.bf16.msra.mxu0 0
  %96 = vmatprep.subr.bf16.mxu0 0
  %97 = vmatpush2.bf16.msra.mxu0 0
  %98 = vmatprep.subr.bf16.mxu0 0
  %99 = vmatpush2.bf16.msra.mxu0 0
  %100 = vmatprep.subr.bf16.mxu0 0
  %101 = vmatpush2.bf16.msra.mxu0 0
  %102 = vmatprep.subr.bf16.mxu0 0
  %103 = vmatpush2.bf16.msra.mxu0 0
  %104 = vmatprep.subr.bf16.mxu0 0
  %105 = vmatpush2.bf16.msra.mxu0 0
  %106 = vmatprep.subr.bf16.mxu0 0
  %107 = vmatpush2.bf16.msra.mxu0 0
  %108 = vmatprep.mubr.bf16.mxu0 0
  %109 = vmatmul.mubr.bf16.gmra.mxu0 %v71
  %v110 = vpop.f32.mrf.mxu0
  %v111 = vadd.f32 0.0, %v110
  %v112 = vpop.f32.mrf.mxu0
  %v113 = vpop.f32.mrf.mxu0
  %v114 = vadd.f32 0.0, %v113
  %v115 = vpop.f32.mrf.mxu0
  %116 = vmatprep.mubr.bf16.mxu0 0
  %117 = vmatmul.mubr.bf16.gmra.mxu0 %v74
  %v118 = vpop.f32.mrf.mxu0
  %v119 = vadd.f32 0.0, %v118
  %v120 = vpop.f32.mrf.mxu0
  %v121 = vpop.f32.mrf.mxu0
  %v122 = vadd.f32 0.0, %v121
  %v123 = vpop.f32.mrf.mxu0
  %124 = vdwg.mxu0
  %v125 = vld [vmem:[%s2] sm:$0x1]
  %v126 = vlaneseq
  %v127 = vshrl.u32 %v126, 7
  %v128 = vsub.s32 0, %v127
  %v129 = vrot.slane %v125, %v128
  %v130 = vmul.f32 %v111, %v129
  %v131 = vmul.f32 %v114, %v129
  %v132 = vmul.f32 %v119, %v129
  %v133 = vmul.f32 %v122, %v129
  %v134 = vld [vmem:[%s2 + $0x1] sm:$0x1]
  %v135 = vlaneseq
  %v136 = vshrl.u32 %v135, 7
  %v137 = vsub.s32 0, %v136
  %v138 = vrot.slane %v134, %v137
  %v139 = vadd.f32 %v130, %v138
  %v140 = vadd.f32 %v131, %v138
  %v141 = vadd.f32 %v132, %v138
  %v142 = vadd.f32 %v133, %v138
  %v143 = vmax.f32 %v139, 0.0
  %v144 = vmax.f32 %v140, 0.0
  %v145 = vmax.f32 %v141, 0.0
  %v146 = vmax.f32 %v142, 0.0
  %v147 = vpack.c.bf16 %v144, %v143
  %v148 = vpack.c.bf16 %v146, %v145
  %v151 = vunpack.c.l.b16 %v147
  %v152 = vunpack.c.h.b16 %v147
  %v153 = vunpack.c.l.b16 %v148
  %v154 = vunpack.c.h.b16 %v148
  %v155 = vpack.c.b16 %v151, %v151
  %v156 = vpack.c.b16 %v152, %v152
  %v157 = vpack.c.b16 %v153, %v153
  %v158 = vpack.c.b16 %v154, %v154
  %163 = vst [vmem:[%s3] sm:$0xf] %v155
  %164 = vst [vmem:[%s3 + $0x4] sm:$0xf] %v156
  %165 = vst [vmem:[%s3 + $0x8] sm:$0xf] %v157
  %166 = vst [vmem:[%s3 + $0xc] sm:$0xf] %v158
  // Predicated region
  $region14: #{_lambda_.44} parent=0 // pred_check
    _
  $region15: #{_lambda_.44} parent=0 // pred_check_branch
    %168 = sbr.rel (0) target = $region17
  $region16: #{_lambda_.44} parent=0 // pred_region
    _
  $region17: #{_lambda_.44} parent=0 // pred_fallthru
    _
  // Predicated region
  $region18: #{_lambda_.44} parent=0 // pred_check
    _
  $region19: #{_lambda_.44} parent=0 // pred_check_branch
    %170 = sbr.rel (0) target = $region21
  $region20: #{_lambda_.44} parent=0 // pred_region
    _
  $region21: #{_lambda_.44} parent=0 // pred_fallthru
    _

// kernel: _lambda_.43
$region0: #{_lambda_.43}
  #allocation0 [shape = 'u32[]', space=smem, size = 0x4, offset = 0x4, fixed_abs, tag = 'smem constant byte address 0x4 - core index']
  #allocation1 [shape = 'u32[144,128]{1,0:T(1,128)}', space=vmem, size = 0x12000, scoped, tag = 'internal scratch']
  %s0 = inlined_call_operand.vmem [shape: bf16[32,16], index: 0, kind: input, shape index: {}]
  %s1 = inlined_call_operand.vmem [shape: bf16[16,128], index: 1, kind: input, shape index: {}]
  %s2 = inlined_call_operand.vmem [shape: f32[2,128], index: 2, kind: input, shape index: {}]
  %s3 = inlined_call_operand.vmem [shape: bf16[32,128], index: 3, kind: output, shape index: {}]
  %s4 = sld [smem:[#allocation0]]
  $region22: #{_lambda_.43} parent=0
    _
  %s6 = ssub.s32 1, %s4
  %s7 = scalar_select 0, %s6, %s4
  // Predicated region
  $region2: #{_lambda_.43} parent=0 // pred_check
    _
  $region3: #{_lambda_.43} parent=0 // pred_check_branch
    %9 = sbr.rel (0) target = $region5
  $region4: #{_lambda_.43} parent=0 // pred_region
    _
  $region5: #{_lambda_.43} parent=0 // pred_fallthru
    _
  // Predicated region
  $region6: #{_lambda_.43} parent=0 // pred_check
    _
  $region7: #{_lambda_.43} parent=0 // pred_check_branch
    %11 = sbr.rel (0) target = $region9
  $region8: #{_lambda_.43} parent=0 // pred_region
    _
  $region9: #{_lambda_.43} parent=0 // pred_fallthru
    _
  // Predicated region
  $region10: #{_lambda_.43} parent=0 // pred_check
    _
  $region11: #{_lambda_.43} parent=0 // pred_check_branch
    %13 = sbr.rel (0) target = $region13
  $region12: #{_lambda_.43} parent=0 // pred_region
    _
  $region13: #{_lambda_.43} parent=0 // pred_fallthru
    _
  %v15 = vld [vmem:[%s0] sm:$0xf]
  %v16 = vld [vmem:[%s0 + $0x4] sm:$0xf]
  %v17 = vld [vmem:[%s0 + $0x8] sm:$0xf]
  %v18 = vld [vmem:[%s0 + $0xc] sm:$0xf]
  %v19 = vld [vmem:[%s1] sm:$0xf]
  %v20 = vld [vmem:[%s1 + $0x4] sm:$0xf]
  %v25 = vunpack.c.l.b16 %v15
  %v26 = vunpack.c.l.b16 %v16
  %v27 = vunpack.c.l.b16 %v17
  %v28 = vunpack.c.l.b16 %v18
  %v29 = vpack.c.b16 %v26, %v25
  %v30 = vpack.c.b16 %v28, %v27
  %v33 = vunpack.c.l.b16 %v19
  %v34 = vunpack.c.l.b16 %v20
  %v35 = vpack.c.b16 %v34, %v33
  %vm37 = vcmask 130048
  %v39 = vsel %vm37, %v29, 0
  %v42 = vsel %vm37, %v30, 0
  %44 = vmatprep.subr.bf16.mxu0 0
  %45 = vmatpush1.bf16.msra.mxu0 0
  %46 = vmatprep.subr.bf16.mxu0 0
  %47 = vmatpush1.bf16.msra.mxu0 0
  %48 = vmatprep.subr.bf16.mxu0 0
  %49 = vmatpush1.bf16.msra.mxu0 0
  %50 = vmatprep.subr.bf16.mxu0 0
  %51 = vmatpush1.bf16.msra.mxu0 0
  %52 = vmatprep.subr.bf16.mxu0 0
  %53 = vmatpush1.bf16.msra.mxu0 0
  %54 = vmatprep.subr.bf16.mxu0 0
  %55 = vmatpush1.bf16.msra.mxu0 0
  %56 = vmatprep.subr.bf16.mxu0 0
  %57 = vmatpush1.bf16.msra.mxu0 0
  %58 = vmatprep.subr.bf16.mxu0 0
  %59 = vmatpush1.bf16.msra.mxu0 %v35
  %60 = vmatprep.subr.bf16.mxu0 0
  %61 = vmatpush2.bf16.msra.mxu0 0
  %62 = vmatprep.subr.bf16.mxu0 0
  %63 = vmatpush2.bf16.msra.mxu0 0
  %64 = vmatprep.subr.bf16.mxu0 0
  %65 = vmatpush2.bf16.msra.mxu0 0
  %66 = vmatprep.subr.bf16.mxu0 0
  %67 = vmatpush2.bf16.msra.mxu0 0
  %68 = vmatprep.subr.bf16.mxu0 0
  %69 = vmatpush2.bf16.msra.mxu0 0
  %70 = vmatprep.subr.bf16.mxu0 0
  %71 = vmatpush2.bf16.msra.mxu0 0
  %72 = vmatprep.subr.bf16.mxu0 0
  %73 = vmatpush2.bf16.msra.mxu0 0
  %74 = vmatprep.subr.bf16.mxu0 0
  %75 = vmatpush2.bf16.msra.mxu0 0
  %76 = vmatprep.mubr.bf16.mxu0 0
  %77 = vmatmul.mubr.bf16.gmra.mxu0 %v39
  %v78 = vpop.f32.mrf.mxu0
  %v79 = vadd.f32 0.0, %v78
  %v80 = vpop.f32.mrf.mxu0
  %v81 = vpop.f32.mrf.mxu0
  %v82 = vadd.f32 0.0, %v81
  %v83 = vpop.f32.mrf.mxu0
  %84 = vmatprep.mubr.bf16.mxu0 0
  %85 = vmatmul.mubr.bf16.gmra.mxu0 %v42
  %v86 = vpop.f32.mrf.mxu0
  %v87 = vadd.f32 0.0, %v86
  %v88 = vpop.f32.mrf.mxu0
  %v89 = vpop.f32.mrf.mxu0
  %v90 = vadd.f32 0.0, %v89
  %v91 = vpop.f32.mrf.mxu0
  %92 = vdwg.mxu0
  %v93 = vld [vmem:[%s2] sm:$0x1]
  %v94 = vlaneseq
  %v95 = vshrl.u32 %v94, 7
  %v96 = vsub.s32 0, %v95
  %v97 = vrot.slane %v93, %v96
  %v98 = vmul.f32 %v79, %v97
  %v99 = vmul.f32 %v82, %v97
  %v100 = vmul.f32 %v87, %v97
  %v101 = vmul.f32 %v90, %v97
  %v102 = vld [vmem:[%s2 + $0x1] sm:$0x1]
  %v103 = vlaneseq
  %v104 = vshrl.u32 %v103, 7
  %v105 = vsub.s32 0, %v104
  %v106 = vrot.slane %v102, %v105
  %v107 = vadd.f32 %v98, %v106
  %v108 = vadd.f32 %v99, %v106
  %v109 = vadd.f32 %v100, %v106
  %v110 = vadd.f32 %v101, %v106
  %v111 = vpack.c.bf16 %v108, %v107
  %v112 = vpack.c.bf16 %v110, %v109
  %v115 = vunpack.c.l.b16 %v111
  %v116 = vunpack.c.h.b16 %v111
  %v117 = vunpack.c.l.b16 %v112
  %v118 = vunpack.c.h.b16 %v112
  %v119 = vpack.c.b16 %v115, %v115
  %v120 = vpack.c.b16 %v116, %v116
  %v121 = vpack.c.b16 %v117, %v117
  %v122 = vpack.c.b16 %v118, %v118
  %127 = vst [vmem:[%s3] sm:$0xf] %v119
  %128 = vst [vmem:[%s3 + $0x4] sm:$0xf] %v120
  %129 = vst [vmem:[%s3 + $0x8] sm:$0xf] %v121
  %130 = vst [vmem:[%s3 + $0xc] sm:$0xf] %v122
  // Predicated region
  $region14: #{_lambda_.43} parent=0 // pred_check
    _
  $region15: #{_lambda_.43} parent=0 // pred_check_branch
    %132 = sbr.rel (0) target = $region17
  $region16: #{_lambda_.43} parent=0 // pred_region
    _
  $region17: #{_lambda_.43} parent=0 // pred_fallthru
    _
  // Predicated region
  $region18: #{_lambda_.43} parent=0 // pred_check
    _
  $region19: #{_lambda_.43} parent=0 // pred_check_branch
    %134 = sbr.rel (0) target = $region21
  $region20: #{_lambda_.43} parent=0 // pred_region
    _
  $region21: #{_lambda_.43} parent=0 // pred_fallthru
    _

// kernel: _lambda_.46
$region0: #{_lambda_.46}
  #allocation0 [shape = 'u32[]', space=smem, size = 0x4, offset = 0x4, fixed_abs, tag = 'smem constant byte address 0x4 - core index']
  #allocation1 [shape = 'u32[144,128]{1,0:T(1,128)}', space=vmem, size = 0x12000, scoped, tag = 'internal scratch']
  %s0 = inlined_call_operand.vmem [shape: bf16[32,144], index: 0, kind: input, shape index: {}]
  %s1 = inlined_call_operand.vmem [shape: bf16[144,128], index: 1, kind: input, shape index: {}]
  %s2 = inlined_call_operand.vmem [shape: f32[2,128], index: 2, kind: input, shape index: {}]
  %s3 = inlined_call_operand.vmem [shape: bf16[32,128], index: 3, kind: output, shape index: {}]
  %s4 = sld [smem:[#allocation0]]
  $region22: #{_lambda_.46} parent=0
    _
  %s6 = ssub.s32 1, %s4
  %s7 = scalar_select 0, %s6, %s4
  // Predicated region
  $region2: #{_lambda_.46} parent=0 // pred_check
    _
  $region3: #{_lambda_.46} parent=0 // pred_check_branch
    %9 = sbr.rel (0) target = $region5
  $region4: #{_lambda_.46} parent=0 // pred_region
    _
  $region5: #{_lambda_.46} parent=0 // pred_fallthru
    _
  // Predicated region
  $region6: #{_lambda_.46} parent=0 // pred_check
    _
  $region7: #{_lambda_.46} parent=0 // pred_check_branch
    %11 = sbr.rel (0) target = $region9
  $region8: #{_lambda_.46} parent=0 // pred_region
    _
  $region9: #{_lambda_.46} parent=0 // pred_fallthru
    _
  // Predicated region
  $region10: #{_lambda_.46} parent=0 // pred_check
    _
  $region11: #{_lambda_.46} parent=0 // pred_check_branch
    %13 = sbr.rel (0) target = $region13
  $region12: #{_lambda_.46} parent=0 // pred_region
    _
  $region13: #{_lambda_.46} parent=0 // pred_fallthru
    _
  %v15 = vld [vmem:[%s0] sm:$0xff]
  %v16 = vld [vmem:[%s0 + $0x8] sm:$0xff]
  %v17 = vld [vmem:[%s0 + $0x10] sm:$0xff]
  %v18 = vld [vmem:[%s0 + $0x18] sm:$0xff]
  %v19 = vld [vmem:[%s1] sm:$0xf]
  %v20 = vld [vmem:[%s1 + $0x4] sm:$0xf]
  %v21 = vld [vmem:[%s1 + $0x8] sm:$0xf]
  %v22 = vld [vmem:[%s1 + $0xc] sm:$0xf]
  %v23 = vld [vmem:[%s1 + $0x10] sm:$0xf]
  %v24 = vld [vmem:[%s1 + $0x14] sm:$0xf]
  %v25 = vld [vmem:[%s1 + $0x18] sm:$0xf]
  %v26 = vld [vmem:[%s1 + $0x1c] sm:$0xf]
  %v27 = vld [vmem:[%s1 + $0x20] sm:$0xf]
  %v28 = vld [vmem:[%s1 + $0x24] sm:$0xf]
  %v29 = vld [vmem:[%s1 + $0x28] sm:$0xf]
  %v30 = vld [vmem:[%s1 + $0x2c] sm:$0xf]
  %v31 = vld [vmem:[%s1 + $0x30] sm:$0xf]
  %v32 = vld [vmem:[%s1 + $0x34] sm:$0xf]
  %v33 = vld [vmem:[%s1 + $0x38] sm:$0xf]
  %v34 = vld [vmem:[%s1 + $0x3c] sm:$0xf]
  %v35 = vld [vmem:[%s1 + $0x40] sm:$0xf]
  %v36 = vld [vmem:[%s1 + $0x44] sm:$0xf]
  %v41 = vunpack.c.l.b16 %v15
  %v42 = vunpack.c.h.b16 %v15
  %v43 = vunpack.c.l.b16 %v16
  %v44 = vunpack.c.h.b16 %v16
  %v45 = vunpack.c.l.b16 %v17
  %v46 = vunpack.c.h.b16 %v17
  %v47 = vunpack.c.l.b16 %v18
  %v48 = vunpack.c.h.b16 %v18
  %v49 = vpack.c.b16 %v43, %v41
  %v50 = vpack.c.b16 %v44, %v42
  %v51 = vpack.c.b16 %v47, %v45
  %v52 = vpack.c.b16 %v48, %v46
  %v73 = vunpack.c.l.b16 %v19
  %v74 = vunpack.c.l.b16 %v20
  %v75 = vunpack.c.l.b16 %v21
  %v76 = vunpack.c.l.b16 %v22
  %v77 = vunpack.c.l.b16 %v23
  %v78 = vunpack.c.l.b16 %v24
  %v79 = vunpack.c.l.b16 %v25
  %v80 = vunpack.c.l.b16 %v26
  %v81 = vunpack.c.l.b16 %v27
  %v82 = vunpack.c.l.b16 %v28
  %v83 = vunpack.c.l.b16 %v29
  %v84 = vunpack.c.l.b16 %v30
  %v85 = vunpack.c.l.b16 %v31
  %v86 = vunpack.c.l.b16 %v32
  %v87 = vunpack.c.l.b16 %v33
  %v88 = vunpack.c.l.b16 %v34
  %v89 = vunpack.c.l.b16 %v35
  %v90 = vunpack.c.l.b16 %v36
  %v91 = vpack.c.b16 %v74, %v73
  %v92 = vpack.c.b16 %v76, %v75
  %v93 = vpack.c.b16 %v78, %v77
  %v94 = vpack.c.b16 %v80, %v79
  %v95 = vpack.c.b16 %v82, %v81
  %v96 = vpack.c.b16 %v84, %v83
  %v97 = vpack.c.b16 %v86, %v85
  %v98 = vpack.c.b16 %v88, %v87
  %v99 = vpack.c.b16 %v90, %v89
  %vm109 = vcmask 130048
  %v111 = vsel %vm109, %v50, 0
  %v114 = vsel %vm109, %v52, 0
  %116 = vmatprep.subr.bf16.mxu0 0
  %117 = vmatpush1.bf16.msra.mxu0 %v98
  %118 = vmatprep.subr.bf16.mxu0 0
  %119 = vmatpush1.bf16.msra.mxu0 %v97
  %120 = vmatprep.subr.bf16.mxu0 0
  %121 = vmatpush1.bf16.msra.mxu0 %v96
  %122 = vmatprep.subr.bf16.mxu0 0
  %123 = vmatpush1.bf16.msra.mxu0 %v95
  %124 = vmatprep.subr.bf16.mxu0 0
  %125 = vmatpush1.bf16.msra.mxu0 %v94
  %126 = vmatprep.subr.bf16.mxu0 0
  %127 = vmatpush1.bf16.msra.mxu0 %v93
  %128 = vmatprep.subr.bf16.mxu0 0
  %129 = vmatpush1.bf16.msra.mxu0 %v92
  %130 = vmatprep.subr.bf16.mxu0 0
  %131 = vmatpush1.bf16.msra.mxu0 %v91
  %132 = vmatprep.subr.bf16.mxu0 0
  %133 = vmatpush2.bf16.msra.mxu0 0
  %134 = vmatprep.subr.bf16.mxu0 0
  %135 = vmatpush2.bf16.msra.mxu0 0
  %136 = vmatprep.subr.bf16.mxu0 0
  %137 = vmatpush2.bf16.msra.mxu0 0
  %138 = vmatprep.subr.bf16.mxu0 0
  %139 = vmatpush2.bf16.msra.mxu0 0
  %140 = vmatprep.subr.bf16.mxu0 0
  %141 = vmatpush2.bf16.msra.mxu0 0
  %142 = vmatprep.subr.bf16.mxu0 0
  %143 = vmatpush2.bf16.msra.mxu0 0
  %144 = vmatprep.subr.bf16.mxu0 0
  %145 = vmatpush2.bf16.msra.mxu0 0
  %146 = vmatprep.subr.bf16.mxu0 0
  %147 = vmatpush2.bf16.msra.mxu0 %v99
  %148 = vmatprep.mubr.bf16.mxu0 %v111
  %149 = vmatmul.mubr.bf16.gmra.mxu0 %v49
  %v150 = vpop.f32.mrf.mxu0
  %v151 = vadd.f32 0.0, %v150
  %v152 = vpop.f32.mrf.mxu0
  %v153 = vpop.f32.mrf.mxu0
  %v154 = vadd.f32 0.0, %v153
  %v155 = vpop.f32.mrf.mxu0
  %156 = vmatprep.mubr.bf16.mxu0 %v114
  %157 = vmatmul.mubr.bf16.gmra.mxu0 %v51
  %v158 = vpop.f32.mrf.mxu0
  %v159 = vadd.f32 0.0, %v158
  %v160 = vpop.f32.mrf.mxu0
  %v161 = vpop.f32.mrf.mxu0
  %v162 = vadd.f32 0.0, %v161
  %v163 = vpop.f32.mrf.mxu0
  %164 = vdwg.mxu0
  %v165 = vld [vmem:[%s2] sm:$0x1]
  %v166 = vlaneseq
  %v167 = vshrl.u32 %v166, 7
  %v168 = vsub.s32 0, %v167
  %v169 = vrot.slane %v165, %v168
  %v170 = vmul.f32 %v151, %v169
  %v171 = vmul.f32 %v154, %v169
  %v172 = vmul.f32 %v159, %v169
  %v173 = vmul.f32 %v162, %v169
  %v174 = vld [vmem:[%s2 + $0x1] sm:$0x1]
  %v175 = vlaneseq
  %v176 = vshrl.u32 %v175, 7
  %v177 = vsub.s32 0, %v176
  %v178 = vrot.slane %v174, %v177
  %v179 = vadd.f32 %v170, %v178
  %v180 = vadd.f32 %v171, %v178
  %v181 = vadd.f32 %v172, %v178
  %v182 = vadd.f32 %v173, %v178
  %v183 = vmax.f32 %v179, 0.0
  %v184 = vmax.f32 %v180, 0.0
  %v185 = vmax.f32 %v181, 0.0
  %v186 = vmax.f32 %v182, 0.0
  %v187 = vpack.c.bf16 %v184, %v183
  %v188 = vpack.c.bf16 %v186, %v185
  %v191 = vunpack.c.l.b16 %v187
  %v192 = vunpack.c.h.b16 %v187
  %v193 = vunpack.c.l.b16 %v188
  %v194 = vunpack.c.h.b16 %v188
  %v195 = vpack.c.b16 %v191, %v191
  %v196 = vpack.c.b16 %v192, %v192
  %v197 = vpack.c.b16 %v193, %v193
  %v198 = vpack.c.b16 %v194, %v194
  %203 = vst [vmem:[%s3] sm:$0xf] %v195
  %204 = vst [vmem:[%s3 + $0x4] sm:$0xf] %v196
  %205 = vst [vmem:[%s3 + $0x8] sm:$0xf] %v197
  %206 = vst [vmem:[%s3 + $0xc] sm:$0xf] %v198
  // Predicated region
  $region14: #{_lambda_.46} parent=0 // pred_check
    _
  $region15: #{_lambda_.46} parent=0 // pred_check_branch
    %208 = sbr.rel (0) target = $region17
  $region16: #{_lambda_.46} parent=0 // pred_region
    _
  $region17: #{_lambda_.46} parent=0 // pred_fallthru
    _
  // Predicated region
  $region18: #{_lambda_.46} parent=0 // pred_check
    _
  $region19: #{_lambda_.46} parent=0 // pred_check_branch
    %210 = sbr.rel (0) target = $region21
  $region20: #{_lambda_.46} parent=0 // pred_region
    _
  $region21: #{_lambda_.46} parent=0 // pred_fallthru
    _

// kernel: _lambda_.45
$region0: #{_lambda_.45}
  #allocation0 [shape = 'u32[]', space=smem, size = 0x4, offset = 0x4, fixed_abs, tag = 'smem constant byte address 0x4 - core index']
  #allocation1 [shape = 'u32[144,128]{1,0:T(1,128)}', space=vmem, size = 0x12000, scoped, tag = 'internal scratch']
  %s0 = inlined_call_operand.vmem [shape: bf16[32,144], index: 0, kind: input, shape index: {}]
  %s1 = inlined_call_operand.vmem [shape: bf16[144,128], index: 1, kind: input, shape index: {}]
  %s2 = inlined_call_operand.vmem [shape: f32[2,128], index: 2, kind: input, shape index: {}]
  %s3 = inlined_call_operand.vmem [shape: bf16[32,128], index: 3, kind: input, shape index: {}]
  %s4 = inlined_call_operand.vmem [shape: bf16[32,128], index: 4, kind: output, shape index: {}]
  %s5 = sld [smem:[#allocation0]]
  $region26: #{_lambda_.45} parent=0
    _
  %s7 = ssub.s32 1, %s5
  %s8 = scalar_select 0, %s7, %s5
  // Predicated region
  $region2: #{_lambda_.45} parent=0 // pred_check
    _
  $region3: #{_lambda_.45} parent=0 // pred_check_branch
    %10 = sbr.rel (0) target = $region5
  $region4: #{_lambda_.45} parent=0 // pred_region
    _
  $region5: #{_lambda_.45} parent=0 // pred_fallthru
    _
  // Predicated region
  $region6: #{_lambda_.45} parent=0 // pred_check
    _
  $region7: #{_lambda_.45} parent=0 // pred_check_branch
    %12 = sbr.rel (0) target = $region9
  $region8: #{_lambda_.45} parent=0 // pred_region
    _
  $region9: #{_lambda_.45} parent=0 // pred_fallthru
    _
  // Predicated region
  $region10: #{_lambda_.45} parent=0 // pred_check
    _
  $region11: #{_lambda_.45} parent=0 // pred_check_branch
    %14 = sbr.rel (0) target = $region13
  $region12: #{_lambda_.45} parent=0 // pred_region
    _
  $region13: #{_lambda_.45} parent=0 // pred_fallthru
    _
  // Predicated region
  $region14: #{_lambda_.45} parent=0 // pred_check
    _
  $region15: #{_lambda_.45} parent=0 // pred_check_branch
    %16 = sbr.rel (0) target = $region17
  $region16: #{_lambda_.45} parent=0 // pred_region
    _
  $region17: #{_lambda_.45} parent=0 // pred_fallthru
    _
  %v18 = vld [vmem:[%s0] sm:$0xff]
  %v19 = vld [vmem:[%s0 + $0x8] sm:$0xff]
  %v20 = vld [vmem:[%s0 + $0x10] sm:$0xff]
  %v21 = vld [vmem:[%s0 + $0x18] sm:$0xff]
  %v22 = vld [vmem:[%s1] sm:$0xf]
  %v23 = vld [vmem:[%s1 + $0x4] sm:$0xf]
  %v24 = vld [vmem:[%s1 + $0x8] sm:$0xf]
  %v25 = vld [vmem:[%s1 + $0xc] sm:$0xf]
  %v26 = vld [vmem:[%s1 + $0x10] sm:$0xf]
  %v27 = vld [vmem:[%s1 + $0x14] sm:$0xf]
  %v28 = vld [vmem:[%s1 + $0x18] sm:$0xf]
  %v29 = vld [vmem:[%s1 + $0x1c] sm:$0xf]
  %v30 = vld [vmem:[%s1 + $0x20] sm:$0xf]
  %v31 = vld [vmem:[%s1 + $0x24] sm:$0xf]
  %v32 = vld [vmem:[%s1 + $0x28] sm:$0xf]
  %v33 = vld [vmem:[%s1 + $0x2c] sm:$0xf]
  %v34 = vld [vmem:[%s1 + $0x30] sm:$0xf]
  %v35 = vld [vmem:[%s1 + $0x34] sm:$0xf]
  %v36 = vld [vmem:[%s1 + $0x38] sm:$0xf]
  %v37 = vld [vmem:[%s1 + $0x3c] sm:$0xf]
  %v38 = vld [vmem:[%s1 + $0x40] sm:$0xf]
  %v39 = vld [vmem:[%s1 + $0x44] sm:$0xf]
  %v44 = vunpack.c.l.b16 %v18
  %v45 = vunpack.c.h.b16 %v18
  %v46 = vunpack.c.l.b16 %v19
  %v47 = vunpack.c.h.b16 %v19
  %v48 = vunpack.c.l.b16 %v20
  %v49 = vunpack.c.h.b16 %v20
  %v50 = vunpack.c.l.b16 %v21
  %v51 = vunpack.c.h.b16 %v21
  %v52 = vpack.c.b16 %v46, %v44
  %v53 = vpack.c.b16 %v47, %v45
  %v54 = vpack.c.b16 %v50, %v48
  %v55 = vpack.c.b16 %v51, %v49
  %v76 = vunpack.c.l.b16 %v22
  %v77 = vunpack.c.l.b16 %v23
  %v78 = vunpack.c.l.b16 %v24
  %v79 = vunpack.c.l.b16 %v25
  %v80 = vunpack.c.l.b16 %v26
  %v81 = vunpack.c.l.b16 %v27
  %v82 = vunpack.c.l.b16 %v28
  %v83 = vunpack.c.l.b16 %v29
  %v84 = vunpack.c.l.b16 %v30
  %v85 = vunpack.c.l.b16 %v31
  %v86 = vunpack.c.l.b16 %v32
  %v87 = vunpack.c.l.b16 %v33
  %v88 = vunpack.c.l.b16 %v34
  %v89 = vunpack.c.l.b16 %v35
  %v90 = vunpack.c.l.b16 %v36
  %v91 = vunpack.c.l.b16 %v37
  %v92 = vunpack.c.l.b16 %v38
  %v93 = vunpack.c.l.b16 %v39
  %v94 = vpack.c.b16 %v77, %v76
  %v95 = vpack.c.b16 %v79, %v78
  %v96 = vpack.c.b16 %v81, %v80
  %v97 = vpack.c.b16 %v83, %v82
  %v98 = vpack.c.b16 %v85, %v84
  %v99 = vpack.c.b16 %v87, %v86
  %v100 = vpack.c.b16 %v89, %v88
  %v101 = vpack.c.b16 %v91, %v90
  %v102 = vpack.c.b16 %v93, %v92
  %vm112 = vcmask 130048
  %v114 = vsel %vm112, %v53, 0
  %v117 = vsel %vm112, %v55, 0
  %119 = vmatprep.subr.bf16.mxu0 0
  %120 = vmatpush1.bf16.msra.mxu0 %v101
  %121 = vmatprep.subr.bf16.mxu0 0
  %122 = vmatpush1.bf16.msra.mxu0 %v100
  %123 = vmatprep.subr.bf16.mxu0 0
  %124 = vmatpush1.bf16.msra.mxu0 %v99
  %125 = vmatprep.subr.bf16.mxu0 0
  %126 = vmatpush1.bf16.msra.mxu0 %v98
  %127 = vmatprep.subr.bf16.mxu0 0
  %128 = vmatpush1.bf16.msra.mxu0 %v97
  %129 = vmatprep.subr.bf16.mxu0 0
  %130 = vmatpush1.bf16.msra.mxu0 %v96
  %131 = vmatprep.subr.bf16.mxu0 0
  %132 = vmatpush1.bf16.msra.mxu0 %v95
  %133 = vmatprep.subr.bf16.mxu0 0
  %134 = vmatpush1.bf16.msra.mxu0 %v94
  %135 = vmatprep.subr.bf16.mxu0 0
  %136 = vmatpush2.bf16.msra.mxu0 0
  %137 = vmatprep.subr.bf16.mxu0 0
  %138 = vmatpush2.bf16.msra.mxu0 0
  %139 = vmatprep.subr.bf16.mxu0 0
  %140 = vmatpush2.bf16.msra.mxu0 0
  %141 = vmatprep.subr.bf16.mxu0 0
  %142 = vmatpush2.bf16.msra.mxu0 0
  %143 = vmatprep.subr.bf16.mxu0 0
  %144 = vmatpush2.bf16.msra.mxu0 0
  %145 = vmatprep.subr.bf16.mxu0 0
  %146 = vmatpush2.bf16.msra.mxu0 0
  %147 = vmatprep.subr.bf16.mxu0 0
  %148 = vmatpush2.bf16.msra.mxu0 0
  %149 = vmatprep.subr.bf16.mxu0 0
  %150 = vmatpush2.bf16.msra.mxu0 %v102
  %151 = vmatprep.mubr.bf16.mxu0 %v114
  %152 = vmatmul.mubr.bf16.gmra.mxu0 %v52
  %v153 = vpop.f32.mrf.mxu0
  %v154 = vadd.f32 0.0, %v153
  %v155 = vpop.f32.mrf.mxu0
  %v156 = vpop.f32.mrf.mxu0
  %v157 = vadd.f32 0.0, %v156
  %v158 = vpop.f32.mrf.mxu0
  %159 = vmatprep.mubr.bf16.mxu0 %v117
  %160 = vmatmul.mubr.bf16.gmra.mxu0 %v54
  %v161 = vpop.f32.mrf.mxu0
  %v162 = vadd.f32 0.0, %v161
  %v163 = vpop.f32.mrf.mxu0
  %v164 = vpop.f32.mrf.mxu0
  %v165 = vadd.f32 0.0, %v164
  %v166 = vpop.f32.mrf.mxu0
  %167 = vdwg.mxu0
  %v168 = vld [vmem:[%s2] sm:$0x1]
  %v169 = vlaneseq
  %v170 = vshrl.u32 %v169, 7
  %v171 = vsub.s32 0, %v170
  %v172 = vrot.slane %v168, %v171
  %v173 = vmul.f32 %v154, %v172
  %v174 = vmul.f32 %v157, %v172
  %v175 = vmul.f32 %v162, %v172
  %v176 = vmul.f32 %v165, %v172
  %v177 = vld [vmem:[%s2 + $0x1] sm:$0x1]
  %v178 = vlaneseq
  %v179 = vshrl.u32 %v178, 7
  %v180 = vsub.s32 0, %v179
  %v181 = vrot.slane %v177, %v180
  %v182 = vadd.f32 %v173, %v181
  %v183 = vadd.f32 %v174, %v181
  %v184 = vadd.f32 %v175, %v181
  %v185 = vadd.f32 %v176, %v181
  %v186 = vld [vmem:[%s3] sm:$0xf]
  %v187 = vld [vmem:[%s3 + $0x4] sm:$0xf]
  %v188 = vld [vmem:[%s3 + $0x8] sm:$0xf]
  %v189 = vld [vmem:[%s3 + $0xc] sm:$0xf]
  %v190 = vunpack.c.l.bf16 %v186
  %v191 = vunpack.c.l.bf16 %v187
  %v192 = vunpack.c.l.bf16 %v188
  %v193 = vunpack.c.l.bf16 %v189
  %v194 = vadd.f32 %v182, %v190
  %v195 = vadd.f32 %v183, %v191
  %v196 = vadd.f32 %v184, %v192
  %v197 = vadd.f32 %v185, %v193
  %v198 = vmax.f32 %v194, 0.0
  %v199 = vmax.f32 %v195, 0.0
  %v200 = vmax.f32 %v196, 0.0
  %v201 = vmax.f32 %v197, 0.0
  %v202 = vpack.c.bf16 %v199, %v198
  %v203 = vpack.c.bf16 %v201, %v200
  %v206 = vunpack.c.l.b16 %v202
  %v207 = vunpack.c.h.b16 %v202
  %v208 = vunpack.c.l.b16 %v203
  %v209 = vunpack.c.h.b16 %v203
  %v210 = vpack.c.b16 %v206, %v206
  %v211 = vpack.c.b16 %v207, %v207
  %v212 = vpack.c.b16 %v208, %v208
  %v213 = vpack.c.b16 %v209, %v209
  %218 = vst [vmem:[%s4] sm:$0xf] %v210
  %219 = vst [vmem:[%s4 + $0x4] sm:$0xf] %v211
  %220 = vst [vmem:[%s4 + $0x8] sm:$0xf] %v212
  %221 = vst [vmem:[%s4 + $0xc] sm:$0xf] %v213
  // Predicated region
  $region18: #{_lambda_.45} parent=0 // pred_check
    _
  $region19: #{_lambda_.45} parent=0 // pred_check_branch
    %223 = sbr.rel (0) target = $region21
  $region20: #{_lambda_.45} parent=0 // pred_region
    _
  $region21: #{_lambda_.45} parent=0 // pred_fallthru
    _
  // Predicated region
  $region22: #{_lambda_.45} parent=0 // pred_check
    _
  $region23: #{_lambda_.45} parent=0 // pred_check_branch
    %225 = sbr.rel (0) target = $region25
  $region24: #{_lambda_.45} parent=0 // pred_region
    _
  $region25: #{_lambda_.45} parent=0 // pred_fallthru
    _

// kernel: _lambda_.53
$region0: #{_lambda_.53}
  #allocation0 [shape = 'u32[]', space=smem, size = 0x4, offset = 0x4, fixed_abs, tag = 'smem constant byte address 0x4 - core index']
  #allocation1 [shape = 'u32[144,128]{1,0:T(1,128)}', space=vmem, size = 0x12000, scoped, tag = 'internal scratch']
  %s0 = inlined_call_operand.vmem [shape: bf16[8,144], index: 0, kind: input, shape index: {}]
  %s1 = inlined_call_operand.vmem [shape: bf16[144,128], index: 1, kind: input, shape index: {}]
  %s2 = inlined_call_operand.vmem [shape: f32[2,128], index: 2, kind: input, shape index: {}]
  %s3 = inlined_call_operand.vmem [shape: bf16[8,128], index: 3, kind: output, shape index: {}]
  %s4 = sld [smem:[#allocation0]]
  $region22: #{_lambda_.53} parent=0
    _
  %s6 = ssub.s32 1, %s4
  %s7 = scalar_select 0, %s6, %s4
  // Predicated region
  $region2: #{_lambda_.53} parent=0 // pred_check
    _
  $region3: #{_lambda_.53} parent=0 // pred_check_branch
    %9 = sbr.rel (0) target = $region5
  $region4: #{_lambda_.53} parent=0 // pred_region
    _
  $region5: #{_lambda_.53} parent=0 // pred_fallthru
    _
  // Predicated region
  $region6: #{_lambda_.53} parent=0 // pred_check
    _
  $region7: #{_lambda_.53} parent=0 // pred_check_branch
    %11 = sbr.rel (0) target = $region9
  $region8: #{_lambda_.53} parent=0 // pred_region
    _
  $region9: #{_lambda_.53} parent=0 // pred_fallthru
    _
  // Predicated region
  $region10: #{_lambda_.53} parent=0 // pred_check
    _
  $region11: #{_lambda_.53} parent=0 // pred_check_branch
    %13 = sbr.rel (0) target = $region13
  $region12: #{_lambda_.53} parent=0 // pred_region
    _
  $region13: #{_lambda_.53} parent=0 // pred_fallthru
    _
  %v15 = vld [vmem:[%s0] sm:$0xff]
  %v16 = vld [vmem:[%s1] sm:$0xf]
  %v17 = vld [vmem:[%s1 + $0x4] sm:$0xf]
  %v18 = vld [vmem:[%s1 + $0x8] sm:$0xf]
  %v19 = vld [vmem:[%s1 + $0xc] sm:$0xf]
  %v20 = vld [vmem:[%s1 + $0x10] sm:$0xf]
  %v21 = vld [vmem:[%s1 + $0x14] sm:$0xf]
  %v22 = vld [vmem:[%s1 + $0x18] sm:$0xf]
  %v23 = vld [vmem:[%s1 + $0x1c] sm:$0xf]
  %v24 = vld [vmem:[%s1 + $0x20] sm:$0xf]
  %v25 = vld [vmem:[%s1 + $0x24] sm:$0xf]
  %v26 = vld [vmem:[%s1 + $0x28] sm:$0xf]
  %v27 = vld [vmem:[%s1 + $0x2c] sm:$0xf]
  %v28 = vld [vmem:[%s1 + $0x30] sm:$0xf]
  %v29 = vld [vmem:[%s1 + $0x34] sm:$0xf]
  %v30 = vld [vmem:[%s1 + $0x38] sm:$0xf]
  %v31 = vld [vmem:[%s1 + $0x3c] sm:$0xf]
  %v32 = vld [vmem:[%s1 + $0x40] sm:$0xf]
  %v33 = vld [vmem:[%s1 + $0x44] sm:$0xf]
  %v35 = vunpack.c.l.b16 %v15
  %v36 = vunpack.c.h.b16 %v15
  %v37 = vpack.c.b16 %v35, %v35
  %v38 = vpack.c.b16 %v36, %v36
  %v58 = vunpack.c.l.b16 %v16
  %v59 = vunpack.c.l.b16 %v17
  %v60 = vunpack.c.l.b16 %v18
  %v61 = vunpack.c.l.b16 %v19
  %v62 = vunpack.c.l.b16 %v20
  %v63 = vunpack.c.l.b16 %v21
  %v64 = vunpack.c.l.b16 %v22
  %v65 = vunpack.c.l.b16 %v23
  %v66 = vunpack.c.l.b16 %v24
  %v67 = vunpack.c.l.b16 %v25
  %v68 = vunpack.c.l.b16 %v26
  %v69 = vunpack.c.l.b16 %v27
  %v70 = vunpack.c.l.b16 %v28
  %v71 = vunpack.c.l.b16 %v29
  %v72 = vunpack.c.l.b16 %v30
  %v73 = vunpack.c.l.b16 %v31
  %v74 = vunpack.c.l.b16 %v32
  %v75 = vunpack.c.l.b16 %v33
  %v76 = vpack.c.b16 %v59, %v58
  %v77 = vpack.c.b16 %v61, %v60
  %v78 = vpack.c.b16 %v63, %v62
  %v79 = vpack.c.b16 %v65, %v64
  %v80 = vpack.c.b16 %v67, %v66
  %v81 = vpack.c.b16 %v69, %v68
  %v82 = vpack.c.b16 %v71, %v70
  %v83 = vpack.c.b16 %v73, %v72
  %v84 = vpack.c.b16 %v75, %v74
  %vm94 = vcmask 130048
  %v96 = vsel %vm94, %v38, 0
  %98 = vmatprep.subr.bf16.mxu0 0
  %99 = vmatpush1.bf16.msra.mxu0 %v83
  %100 = vmatprep.subr.bf16.mxu0 0
  %101 = vmatpush1.bf16.msra.mxu0 %v82
  %102 = vmatprep.subr.bf16.mxu0 0
  %103 = vmatpush1.bf16.msra.mxu0 %v81
  %104 = vmatprep.subr.bf16.mxu0 0
  %105 = vmatpush1.bf16.msra.mxu0 %v80
  %106 = vmatprep.subr.bf16.mxu0 0
  %107 = vmatpush1.bf16.msra.mxu0 %v79
  %108 = vmatprep.subr.bf16.mxu0 0
  %109 = vmatpush1.bf16.msra.mxu0 %v78
  %110 = vmatprep.subr.bf16.mxu0 0
  %111 = vmatpush1.bf16.msra.mxu0 %v77
  %112 = vmatprep.subr.bf16.mxu0 0
  %113 = vmatpush1.bf16.msra.mxu0 %v76
  %114 = vmatprep.subr.bf16.mxu0 0
  %115 = vmatpush2.bf16.msra.mxu0 0
  %116 = vmatprep.subr.bf16.mxu0 0
  %117 = vmatpush2.bf16.msra.mxu0 0
  %118 = vmatprep.subr.bf16.mxu0 0
  %119 = vmatpush2.bf16.msra.mxu0 0
  %120 = vmatprep.subr.bf16.mxu0 0
  %121 = vmatpush2.bf16.msra.mxu0 0
  %122 = vmatprep.subr.bf16.mxu0 0
  %123 = vmatpush2.bf16.msra.mxu0 0
  %124 = vmatprep.subr.bf16.mxu0 0
  %125 = vmatpush2.bf16.msra.mxu0 0
  %126 = vmatprep.subr.bf16.mxu0 0
  %127 = vmatpush2.bf16.msra.mxu0 0
  %128 = vmatprep.subr.bf16.mxu0 0
  %129 = vmatpush2.bf16.msra.mxu0 %v84
  %130 = vmatprep.mubr.bf16.mxu0 %v96
  %131 = vmatmul.mubr.bf16.gmra.mxu0 %v37
  %v132 = vpop.f32.mrf.mxu0
  %v133 = vadd.f32 0.0, %v132
  %v134 = vpop.f32.mrf.mxu0
  %v135 = vpop.f32.mrf.mxu0
  %v136 = vpop.f32.mrf.mxu0
  %137 = vdwg.mxu0
  %v138 = vld [vmem:[%s2] sm:$0x1]
  %v139 = vlaneseq
  %v140 = vshrl.u32 %v139, 7
  %v141 = vsub.s32 0, %v140
  %v142 = vrot.slane %v138, %v141
  %v143 = vmul.f32 %v133, %v142
  %v144 = vld [vmem:[%s2 + $0x1] sm:$0x1]
  %v145 = vlaneseq
  %v146 = vshrl.u32 %v145, 7
  %v147 = vsub.s32 0, %v146
  %v148 = vrot.slane %v144, %v147
  %v149 = vadd.f32 %v143, %v148
  %v150 = vmax.f32 %v149, 0.0
  %v151 = vpack.c.bf16 %v150, %v150
  %152 = vst [vmem:[%s3] sm:$0xf] %v151
  // Predicated region
  $region14: #{_lambda_.53} parent=0 // pred_check
    _
  $region15: #{_lambda_.53} parent=0 // pred_check_branch
    %154 = sbr.rel (0) target = $region17
  $region16: #{_lambda_.53} parent=0 // pred_region
    _
  $region17: #{_lambda_.53} parent=0 // pred_fallthru
    _
  // Predicated region
  $region18: #{_lambda_.53} parent=0 // pred_check
    _
  $region19: #{_lambda_.53} parent=0 // pred_check_branch
    %156 = sbr.rel (0) target = $region21
  $region20: #{_lambda_.53} parent=0 // pred_region
    _
  $region21: #{_lambda_.53} parent=0 // pred_fallthru
    _

// kernel: _lambda_.52
$region0: #{_lambda_.52}
  #allocation0 [shape = 'u32[]', space=smem, size = 0x4, offset = 0x4, fixed_abs, tag = 'smem constant byte address 0x4 - core index']
  #allocation1 [shape = 'u32[144,128]{1,0:T(1,128)}', space=vmem, size = 0x12000, scoped, tag = 'internal scratch']
  %s0 = inlined_call_operand.vmem [shape: bf16[8,16], index: 0, kind: input, shape index: {}]
  %s1 = inlined_call_operand.vmem [shape: bf16[16,128], index: 1, kind: input, shape index: {}]
  %s2 = inlined_call_operand.vmem [shape: f32[2,128], index: 2, kind: input, shape index: {}]
  %s3 = inlined_call_operand.vmem [shape: bf16[8,128], index: 3, kind: output, shape index: {}]
  %s4 = sld [smem:[#allocation0]]
  $region22: #{_lambda_.52} parent=0
    _
  %s6 = ssub.s32 1, %s4
  %s7 = scalar_select 0, %s6, %s4
  // Predicated region
  $region2: #{_lambda_.52} parent=0 // pred_check
    _
  $region3: #{_lambda_.52} parent=0 // pred_check_branch
    %9 = sbr.rel (0) target = $region5
  $region4: #{_lambda_.52} parent=0 // pred_region
    _
  $region5: #{_lambda_.52} parent=0 // pred_fallthru
    _
  // Predicated region
  $region6: #{_lambda_.52} parent=0 // pred_check
    _
  $region7: #{_lambda_.52} parent=0 // pred_check_branch
    %11 = sbr.rel (0) target = $region9
  $region8: #{_lambda_.52} parent=0 // pred_region
    _
  $region9: #{_lambda_.52} parent=0 // pred_fallthru
    _
  // Predicated region
  $region10: #{_lambda_.52} parent=0 // pred_check
    _
  $region11: #{_lambda_.52} parent=0 // pred_check_branch
    %13 = sbr.rel (0) target = $region13
  $region12: #{_lambda_.52} parent=0 // pred_region
    _
  $region13: #{_lambda_.52} parent=0 // pred_fallthru
    _
  %v15 = vld [vmem:[%s0] sm:$0xf]
  %v16 = vld [vmem:[%s1] sm:$0xf]
  %v17 = vld [vmem:[%s1 + $0x4] sm:$0xf]
  %v20 = vunpack.c.l.b16 %v16
  %v21 = vunpack.c.l.b16 %v17
  %v22 = vpack.c.b16 %v21, %v20
  %vm24 = vcmask 130048
  %v26 = vsel %vm24, %v15, 0
  %28 = vmatprep.subr.bf16.mxu0 0
  %29 = vmatpush1.bf16.msra.mxu0 0
  %30 = vmatprep.subr.bf16.mxu0 0
  %31 = vmatpush1.bf16.msra.mxu0 0
  %32 = vmatprep.subr.bf16.mxu0 0
  %33 = vmatpush1.bf16.msra.mxu0 0
  %34 = vmatprep.subr.bf16.mxu0 0
  %35 = vmatpush1.bf16.msra.mxu0 0
  %36 = vmatprep.subr.bf16.mxu0 0
  %37 = vmatpush1.bf16.msra.mxu0 0
  %38 = vmatprep.subr.bf16.mxu0 0
  %39 = vmatpush1.bf16.msra.mxu0 0
  %40 = vmatprep.subr.bf16.mxu0 0
  %41 = vmatpush1.bf16.msra.mxu0 0
  %42 = vmatprep.subr.bf16.mxu0 0
  %43 = vmatpush1.bf16.msra.mxu0 %v22
  %44 = vmatprep.subr.bf16.mxu0 0
  %45 = vmatpush2.bf16.msra.mxu0 0
  %46 = vmatprep.subr.bf16.mxu0 0
  %47 = vmatpush2.bf16.msra.mxu0 0
  %48 = vmatprep.subr.bf16.mxu0 0
  %49 = vmatpush2.bf16.msra.mxu0 0
  %50 = vmatprep.subr.bf16.mxu0 0
  %51 = vmatpush2.bf16.msra.mxu0 0
  %52 = vmatprep.subr.bf16.mxu0 0
  %53 = vmatpush2.bf16.msra.mxu0 0
  %54 = vmatprep.subr.bf16.mxu0 0
  %55 = vmatpush2.bf16.msra.mxu0 0
  %56 = vmatprep.subr.bf16.mxu0 0
  %57 = vmatpush2.bf16.msra.mxu0 0
  %58 = vmatprep.subr.bf16.mxu0 0
  %59 = vmatpush2.bf16.msra.mxu0 0
  %60 = vmatprep.mubr.bf16.mxu0 0
  %61 = vmatmul.mubr.bf16.gmra.mxu0 %v26
  %v62 = vpop.f32.mrf.mxu0
  %v63 = vadd.f32 0.0, %v62
  %v64 = vpop.f32.mrf.mxu0
  %v65 = vpop.f32.mrf.mxu0
  %v66 = vpop.f32.mrf.mxu0
  %67 = vdwg.mxu0
  %v68 = vld [vmem:[%s2] sm:$0x1]
  %v69 = vlaneseq
  %v70 = vshrl.u32 %v69, 7
  %v71 = vsub.s32 0, %v70
  %v72 = vrot.slane %v68, %v71
  %v73 = vmul.f32 %v63, %v72
  %v74 = vld [vmem:[%s2 + $0x1] sm:$0x1]
  %v75 = vlaneseq
  %v76 = vshrl.u32 %v75, 7
  %v77 = vsub.s32 0, %v76
  %v78 = vrot.slane %v74, %v77
  %v79 = vadd.f32 %v73, %v78
  %v80 = vpack.c.bf16 %v79, %v79
  %81 = vst [vmem:[%s3] sm:$0xf] %v80
  // Predicated region
  $region14: #{_lambda_.52} parent=0 // pred_check
    _
  $region15: #{_lambda_.52} parent=0 // pred_check_branch
    %83 = sbr.rel (0) target = $region17
  $region16: #{_lambda_.52} parent=0 // pred_region
    _
  $region17: #{_lambda_.52} parent=0 // pred_fallthru
    _
  // Predicated region
  $region18: #{_lambda_.52} parent=0 // pred_check
    _
  $region19: #{_lambda_.52} parent=0 // pred_check_branch
    %85 = sbr.rel (0) target = $region21
  $region20: #{_lambda_.52} parent=0 // pred_region
    _
  $region21: #{_lambda_.52} parent=0 // pred_fallthru
    _

// kernel: _lambda_.54
$region0: #{_lambda_.54}
  #allocation0 [shape = 'u32[]', space=smem, size = 0x4, offset = 0x4, fixed_abs, tag = 'smem constant byte address 0x4 - core index']
  #allocation1 [shape = 'u32[144,128]{1,0:T(1,128)}', space=vmem, size = 0x12000, scoped, tag = 'internal scratch']
  %s0 = inlined_call_operand.vmem [shape: bf16[8,288], index: 0, kind: input, shape index: {}]
  %s1 = inlined_call_operand.vmem [shape: bf16[288,128], index: 1, kind: input, shape index: {}]
  %s2 = inlined_call_operand.vmem [shape: f32[2,128], index: 2, kind: input, shape index: {}]
  %s3 = inlined_call_operand.vmem [shape: bf16[8,128], index: 3, kind: input, shape index: {}]
  %s4 = inlined_call_operand.vmem [shape: bf16[8,128], index: 4, kind: output, shape index: {}]
  %s5 = sld [smem:[#allocation0]]
  $region26: #{_lambda_.54} parent=0
    _
  %s7 = ssub.s32 1, %s5
  %s8 = scalar_select 0, %s7, %s5
  // Predicated region
  $region2: #{_lambda_.54} parent=0 // pred_check
    _
  $region3: #{_lambda_.54} parent=0 // pred_check_branch
    %10 = sbr.rel (0) target = $region5
  $region4: #{_lambda_.54} parent=0 // pred_region
    _
  $region5: #{_lambda_.54} parent=0 // pred_fallthru
    _
  // Predicated region
  $region6: #{_lambda_.54} parent=0 // pred_check
    _
  $region7: #{_lambda_.54} parent=0 // pred_check_branch
    %12 = sbr.rel (0) target = $region9
  $region8: #{_lambda_.54} parent=0 // pred_region
    _
  $region9: #{_lambda_.54} parent=0 // pred_fallthru
    _
  // Predicated region
  $region10: #{_lambda_.54} parent=0 // pred_check
    _
  $region11: #{_lambda_.54} parent=0 // pred_check_branch
    %14 = sbr.rel (0) target = $region13
  $region12: #{_lambda_.54} parent=0 // pred_region
    _
  $region13: #{_lambda_.54} parent=0 // pred_fallthru
    _
  // Predicated region
  $region14: #{_lambda_.54} parent=0 // pred_check
    _
  $region15: #{_lambda_.54} parent=0 // pred_check_branch
    %16 = sbr.rel (0) target = $region17
  $region16: #{_lambda_.54} parent=0 // pred_region
    _
  $region17: #{_lambda_.54} parent=0 // pred_fallthru
    _
  %v18 = vld [vmem:[%s0] sm:$0xff]
  %v19 = vld [vmem:[%s0 + $0x8] sm:$0xf]
  %v20 = vld [vmem:[%s1] sm:$0xf]
  %v21 = vld [vmem:[%s1 + $0x4] sm:$0xf]
  %v22 = vld [vmem:[%s1 + $0x8] sm:$0xf]
  %v23 = vld [vmem:[%s1 + $0xc] sm:$0xf]
  %v24 = vld [vmem:[%s1 + $0x10] sm:$0xf]
  %v25 = vld [vmem:[%s1 + $0x14] sm:$0xf]
  %v26 = vld [vmem:[%s1 + $0x18] sm:$0xf]
  %v27 = vld [vmem:[%s1 + $0x1c] sm:$0xf]
  %v28 = vld [vmem:[%s1 + $0x20] sm:$0xf]
  %v29 = vld [vmem:[%s1 + $0x24] sm:$0xf]
  %v30 = vld [vmem:[%s1 + $0x28] sm:$0xf]
  %v31 = vld [vmem:[%s1 + $0x2c] sm:$0xf]
  %v32 = vld [vmem:[%s1 + $0x30] sm:$0xf]
  %v33 = vld [vmem:[%s1 + $0x34] sm:$0xf]
  %v34 = vld [vmem:[%s1 + $0x38] sm:$0xf]
  %v35 = vld [vmem:[%s1 + $0x3c] sm:$0xf]
  %v36 = vld [vmem:[%s1 + $0x40] sm:$0xf]
  %v37 = vld [vmem:[%s1 + $0x44] sm:$0xf]
  %v38 = vld [vmem:[%s1 + $0x48] sm:$0xf]
  %v39 = vld [vmem:[%s1 + $0x4c] sm:$0xf]
  %v40 = vld [vmem:[%s1 + $0x50] sm:$0xf]
  %v41 = vld [vmem:[%s1 + $0x54] sm:$0xf]
  %v42 = vld [vmem:[%s1 + $0x58] sm:$0xf]
  %v43 = vld [vmem:[%s1 + $0x5c] sm:$0xf]
  %v44 = vld [vmem:[%s1 + $0x60] sm:$0xf]
  %v45 = vld [vmem:[%s1 + $0x64] sm:$0xf]
  %v46 = vld [vmem:[%s1 + $0x68] sm:$0xf]
  %v47 = vld [vmem:[%s1 + $0x6c] sm:$0xf]
  %v48 = vld [vmem:[%s1 + $0x70] sm:$0xf]
  %v49 = vld [vmem:[%s1 + $0x74] sm:$0xf]
  %v50 = vld [vmem:[%s1 + $0x78] sm:$0xf]
  %v51 = vld [vmem:[%s1 + $0x7c] sm:$0xf]
  %v52 = vld [vmem:[%s1 + $0x80] sm:$0xf]
  %v53 = vld [vmem:[%s1 + $0x84] sm:$0xf]
  %v54 = vld [vmem:[%s1 + $0x88] sm:$0xf]
  %v55 = vld [vmem:[%s1 + $0x8c] sm:$0xf]
  %v58 = vunpack.c.l.b16 %v18
  %v59 = vunpack.c.h.b16 %v18
  %v60 = vunpack.c.l.b16 %v19
  %v61 = vpack.c.b16 %v58, %v58
  %v62 = vpack.c.b16 %v59, %v59
  %v63 = vpack.c.b16 %v60, %v60
  %v102 = vunpack.c.l.b16 %v20
  %v103 = vunpack.c.l.b16 %v21
  %v104 = vunpack.c.l.b16 %v22
  %v105 = vunpack.c.l.b16 %v23
  %v106 = vunpack.c.l.b16 %v24
  %v107 = vunpack.c.l.b16 %v25
  %v108 = vunpack.c.l.b16 %v26
  %v109 = vunpack.c.l.b16 %v27
  %v110 = vunpack.c.l.b16 %v28
  %v111 = vunpack.c.l.b16 %v29
  %v112 = vunpack.c.l.b16 %v30
  %v113 = vunpack.c.l.b16 %v31
  %v114 = vunpack.c.l.b16 %v32
  %v115 = vunpack.c.l.b16 %v33
  %v116 = vunpack.c.l.b16 %v34
  %v117 = vunpack.c.l.b16 %v35
  %v118 = vunpack.c.l.b16 %v36
  %v119 = vunpack.c.l.b16 %v37
  %v120 = vunpack.c.l.b16 %v38
  %v121 = vunpack.c.l.b16 %v39
  %v122 = vunpack.c.l.b16 %v40
  %v123 = vunpack.c.l.b16 %v41
  %v124 = vunpack.c.l.b16 %v42
  %v125 = vunpack.c.l.b16 %v43
  %v126 = vunpack.c.l.b16 %v44
  %v127 = vunpack.c.l.b16 %v45
  %v128 = vunpack.c.l.b16 %v46
  %v129 = vunpack.c.l.b16 %v47
  %v130 = vunpack.c.l.b16 %v48
  %v131 = vunpack.c.l.b16 %v49
  %v132 = vunpack.c.l.b16 %v50
  %v133 = vunpack.c.l.b16 %v51
  %v134 = vunpack.c.l.b16 %v52
  %v135 = vunpack.c.l.b16 %v53
  %v136 = vunpack.c.l.b16 %v54
  %v137 = vunpack.c.l.b16 %v55
  %v138 = vpack.c.b16 %v103, %v102
  %v139 = vpack.c.b16 %v105, %v104
  %v140 = vpack.c.b16 %v107, %v106
  %v141 = vpack.c.b16 %v109, %v108
  %v142 = vpack.c.b16 %v111, %v110
  %v143 = vpack.c.b16 %v113, %v112
  %v144 = vpack.c.b16 %v115, %v114
  %v145 = vpack.c.b16 %v117, %v116
  %v146 = vpack.c.b16 %v119, %v118
  %v147 = vpack.c.b16 %v121, %v120
  %v148 = vpack.c.b16 %v123, %v122
  %v149 = vpack.c.b16 %v125, %v124
  %v150 = vpack.c.b16 %v127, %v126
  %v151 = vpack.c.b16 %v129, %v128
  %v152 = vpack.c.b16 %v131, %v130
  %v153 = vpack.c.b16 %v133, %v132
  %v154 = vpack.c.b16 %v135, %v134
  %v155 = vpack.c.b16 %v137, %v136
  %vm174 = vcmask 261120
  %v176 = vsel %vm174, %v63, 0
  %178 = vmatprep.subr.bf16.mxu0 0
  %179 = vmatpush1.bf16.msra.mxu0 %v145
  %180 = vmatprep.subr.bf16.mxu0 0
  %181 = vmatpush1.bf16.msra.mxu0 %v144
  %182 = vmatprep.subr.bf16.mxu0 0
  %183 = vmatpush1.bf16.msra.mxu0 %v143
  %184 = vmatprep.subr.bf16.mxu0 0
  %185 = vmatpush1.bf16.msra.mxu0 %v142
  %186 = vmatprep.subr.bf16.mxu0 0
  %187 = vmatpush1.bf16.msra.mxu0 %v141
  %188 = vmatprep.subr.bf16.mxu0 0
  %189 = vmatpush1.bf16.msra.mxu0 %v140
  %190 = vmatprep.subr.bf16.mxu0 0
  %191 = vmatpush1.bf16.msra.mxu0 %v139
  %192 = vmatprep.subr.bf16.mxu0 0
  %193 = vmatpush1.bf16.msra.mxu0 %v138
  %194 = vmatprep.subr.bf16.mxu0 0
  %195 = vmatpush2.bf16.msra.mxu0 %v153
  %196 = vmatprep.subr.bf16.mxu0 0
  %197 = vmatpush2.bf16.msra.mxu0 %v152
  %198 = vmatprep.subr.bf16.mxu0 0
  %199 = vmatpush2.bf16.msra.mxu0 %v151
  %200 = vmatprep.subr.bf16.mxu0 0
  %201 = vmatpush2.bf16.msra.mxu0 %v150
  %202 = vmatprep.subr.bf16.mxu0 0
  %203 = vmatpush2.bf16.msra.mxu0 %v149
  %204 = vmatprep.subr.bf16.mxu0 0
  %205 = vmatpush2.bf16.msra.mxu0 %v148
  %206 = vmatprep.subr.bf16.mxu0 0
  %207 = vmatpush2.bf16.msra.mxu0 %v147
  %208 = vmatprep.subr.bf16.mxu0 0
  %209 = vmatpush2.bf16.msra.mxu0 %v146
  %210 = vmatprep.mubr.bf16.mxu0 %v62
  %211 = vmatmul.mubr.bf16.gmra.mxu0 %v61
  %v212 = vpop.f32.mrf.mxu0
  %v213 = vadd.f32 0.0, %v212
  %v214 = vpop.f32.mrf.mxu0
  %v215 = vpop.f32.mrf.mxu0
  %v216 = vpop.f32.mrf.mxu0
  %217 = vdwg.mxu0
  %218 = vmatprep.subr.bf16.mxu0 0
  %219 = vmatpush1.bf16.msra.mxu0 0
  %220 = vmatprep.subr.bf16.mxu0 0
  %221 = vmatpush1.bf16.msra.mxu0 0
  %222 = vmatprep.subr.bf16.mxu0 0
  %223 = vmatpush1.bf16.msra.mxu0 0
  %224 = vmatprep.subr.bf16.mxu0 0
  %225 = vmatpush1.bf16.msra.mxu0 0
  %226 = vmatprep.subr.bf16.mxu0 0
  %227 = vmatpush1.bf16.msra.mxu0 0
  %228 = vmatprep.subr.bf16.mxu0 0
  %229 = vmatpush1.bf16.msra.mxu0 0
  %230 = vmatprep.subr.bf16.mxu0 0
  %231 = vmatpush1.bf16.msra.mxu0 %v155
  %232 = vmatprep.subr.bf16.mxu0 0
  %233 = vmatpush1.bf16.msra.mxu0 %v154
  %234 = vmatprep.subr.bf16.mxu0 0
  %235 = vmatpush2.bf16.msra.mxu0 0
  %236 = vmatprep.subr.bf16.mxu0 0
  %237 = vmatpush2.bf16.msra.mxu0 0
  %238 = vmatprep.subr.bf16.mxu0 0
  %239 = vmatpush2.bf16.msra.mxu0 0
  %240 = vmatprep.subr.bf16.mxu0 0
  %241 = vmatpush2.bf16.msra.mxu0 0
  %242 = vmatprep.subr.bf16.mxu0 0
  %243 = vmatpush2.bf16.msra.mxu0 0
  %244 = vmatprep.subr.bf16.mxu0 0
  %245 = vmatpush2.bf16.msra.mxu0 0
  %246 = vmatprep.subr.bf16.mxu0 0
  %247 = vmatpush2.bf16.msra.mxu0 0
  %248 = vmatprep.subr.bf16.mxu0 0
  %249 = vmatpush2.bf16.msra.mxu0 0
  %250 = vmatprep.mubr.bf16.mxu0 0
  %251 = vmatmul.mubr.bf16.gmra.mxu0 %v176
  %v252 = vpop.f32.mrf.mxu0
  %v253 = vadd.f32 %v213, %v252
  %v254 = vpop.f32.mrf.mxu0
  %v255 = vpop.f32.mrf.mxu0
  %v256 = vpop.f32.mrf.mxu0
  %257 = vdwg.mxu0
  %v258 = vld [vmem:[%s2] sm:$0x1]
  %v259 = vlaneseq
  %v260 = vshrl.u32 %v259, 7
  %v261 = vsub.s32 0, %v260
  %v262 = vrot.slane %v258, %v261
  %v263 = vmul.f32 %v253, %v262
  %v264 = vld [vmem:[%s2 + $0x1] sm:$0x1]
  %v265 = vlaneseq
  %v266 = vshrl.u32 %v265, 7
  %v267 = vsub.s32 0, %v266
  %v268 = vrot.slane %v264, %v267
  %v269 = vadd.f32 %v263, %v268
  %v270 = vld [vmem:[%s3] sm:$0xf]
  %v271 = vunpack.c.l.bf16 %v270
  %v272 = vadd.f32 %v269, %v271
  %v273 = vmax.f32 %v272, 0.0
  %v274 = vpack.c.bf16 %v273, %v273
  %275 = vst [vmem:[%s4] sm:$0xf] %v274
  // Predicated region
  $region18: #{_lambda_.54} parent=0 // pred_check
    _
  $region19: #{_lambda_.54} parent=0 // pred_check_branch
    %277 = sbr.rel (0) target = $region21
  $region20: #{_lambda_.54} parent=0 // pred_region
    _
  $region21: #{_lambda_.54} parent=0 // pred_fallthru
    _
  // Predicated region
  $region22: #{_lambda_.54} parent=0 // pred_check
    _
  $region23: #{_lambda_.54} parent=0 // pred_check_branch
    %279 = sbr.rel (0) target = $region25
  $region24: #{_lambda_.54} parent=0 // pred_region
    _
  $region25: #{_lambda_.54} parent=0 // pred_fallthru
    _

// kernel: _lambda_.55
$region0: #{_lambda_.55}
  #allocation0 [shape = 'u32[]', space=smem, size = 0x4, offset = 0x4, fixed_abs, tag = 'smem constant byte address 0x4 - core index']
  #allocation1 [shape = 'u32[144,128]{1,0:T(1,128)}', space=vmem, size = 0x12000, scoped, tag = 'internal scratch']
  %s0 = inlined_call_operand.vmem [shape: bf16[8,288], index: 0, kind: input, shape index: {}]
  %s1 = inlined_call_operand.vmem [shape: bf16[288,128], index: 1, kind: input, shape index: {}]
  %s2 = inlined_call_operand.vmem [shape: f32[2,128], index: 2, kind: input, shape index: {}]
  %s3 = inlined_call_operand.vmem [shape: bf16[8,128], index: 3, kind: output, shape index: {}]
  %s4 = sld [smem:[#allocation0]]
  $region22: #{_lambda_.55} parent=0
    _
  %s6 = ssub.s32 1, %s4
  %s7 = scalar_select 0, %s6, %s4
  // Predicated region
  $region2: #{_lambda_.55} parent=0 // pred_check
    _
  $region3: #{_lambda_.55} parent=0 // pred_check_branch
    %9 = sbr.rel (0) target = $region5
  $region4: #{_lambda_.55} parent=0 // pred_region
    _
  $region5: #{_lambda_.55} parent=0 // pred_fallthru
    _
  // Predicated region
  $region6: #{_lambda_.55} parent=0 // pred_check
    _
  $region7: #{_lambda_.55} parent=0 // pred_check_branch
    %11 = sbr.rel (0) target = $region9
  $region8: #{_lambda_.55} parent=0 // pred_region
    _
  $region9: #{_lambda_.55} parent=0 // pred_fallthru
    _
  // Predicated region
  $region10: #{_lambda_.55} parent=0 // pred_check
    _
  $region11: #{_lambda_.55} parent=0 // pred_check_branch
    %13 = sbr.rel (0) target = $region13
  $region12: #{_lambda_.55} parent=0 // pred_region
    _
  $region13: #{_lambda_.55} parent=0 // pred_fallthru
    _
  %v15 = vld [vmem:[%s0] sm:$0xff]
  %v16 = vld [vmem:[%s0 + $0x8] sm:$0xf]
  %v17 = vld [vmem:[%s1] sm:$0xf]
  %v18 = vld [vmem:[%s1 + $0x4] sm:$0xf]
  %v19 = vld [vmem:[%s1 + $0x8] sm:$0xf]
  %v20 = vld [vmem:[%s1 + $0xc] sm:$0xf]
  %v21 = vld [vmem:[%s1 + $0x10] sm:$0xf]
  %v22 = vld [vmem:[%s1 + $0x14] sm:$0xf]
  %v23 = vld [vmem:[%s1 + $0x18] sm:$0xf]
  %v24 = vld [vmem:[%s1 + $0x1c] sm:$0xf]
  %v25 = vld [vmem:[%s1 + $0x20] sm:$0xf]
  %v26 = vld [vmem:[%s1 + $0x24] sm:$0xf]
  %v27 = vld [vmem:[%s1 + $0x28] sm:$0xf]
  %v28 = vld [vmem:[%s1 + $0x2c] sm:$0xf]
  %v29 = vld [vmem:[%s1 + $0x30] sm:$0xf]
  %v30 = vld [vmem:[%s1 + $0x34] sm:$0xf]
  %v31 = vld [vmem:[%s1 + $0x38] sm:$0xf]
  %v32 = vld [vmem:[%s1 + $0x3c] sm:$0xf]
  %v33 = vld [vmem:[%s1 + $0x40] sm:$0xf]
  %v34 = vld [vmem:[%s1 + $0x44] sm:$0xf]
  %v35 = vld [vmem:[%s1 + $0x48] sm:$0xf]
  %v36 = vld [vmem:[%s1 + $0x4c] sm:$0xf]
  %v37 = vld [vmem:[%s1 + $0x50] sm:$0xf]
  %v38 = vld [vmem:[%s1 + $0x54] sm:$0xf]
  %v39 = vld [vmem:[%s1 + $0x58] sm:$0xf]
  %v40 = vld [vmem:[%s1 + $0x5c] sm:$0xf]
  %v41 = vld [vmem:[%s1 + $0x60] sm:$0xf]
  %v42 = vld [vmem:[%s1 + $0x64] sm:$0xf]
  %v43 = vld [vmem:[%s1 + $0x68] sm:$0xf]
  %v44 = vld [vmem:[%s1 + $0x6c] sm:$0xf]
  %v45 = vld [vmem:[%s1 + $0x70] sm:$0xf]
  %v46 = vld [vmem:[%s1 + $0x74] sm:$0xf]
  %v47 = vld [vmem:[%s1 + $0x78] sm:$0xf]
  %v48 = vld [vmem:[%s1 + $0x7c] sm:$0xf]
  %v49 = vld [vmem:[%s1 + $0x80] sm:$0xf]
  %v50 = vld [vmem:[%s1 + $0x84] sm:$0xf]
  %v51 = vld [vmem:[%s1 + $0x88] sm:$0xf]
  %v52 = vld [vmem:[%s1 + $0x8c] sm:$0xf]
  %v55 = vunpack.c.l.b16 %v15
  %v56 = vunpack.c.h.b16 %v15
  %v57 = vunpack.c.l.b16 %v16
  %v58 = vpack.c.b16 %v55, %v55
  %v59 = vpack.c.b16 %v56, %v56
  %v60 = vpack.c.b16 %v57, %v57
  %v99 = vunpack.c.l.b16 %v17
  %v100 = vunpack.c.l.b16 %v18
  %v101 = vunpack.c.l.b16 %v19
  %v102 = vunpack.c.l.b16 %v20
  %v103 = vunpack.c.l.b16 %v21
  %v104 = vunpack.c.l.b16 %v22
  %v105 = vunpack.c.l.b16 %v23
  %v106 = vunpack.c.l.b16 %v24
  %v107 = vunpack.c.l.b16 %v25
  %v108 = vunpack.c.l.b16 %v26
  %v109 = vunpack.c.l.b16 %v27
  %v110 = vunpack.c.l.b16 %v28
  %v111 = vunpack.c.l.b16 %v29
  %v112 = vunpack.c.l.b16 %v30
  %v113 = vunpack.c.l.b16 %v31
  %v114 = vunpack.c.l.b16 %v32
  %v115 = vunpack.c.l.b16 %v33
  %v116 = vunpack.c.l.b16 %v34
  %v117 = vunpack.c.l.b16 %v35
  %v118 = vunpack.c.l.b16 %v36
  %v119 = vunpack.c.l.b16 %v37
  %v120 = vunpack.c.l.b16 %v38
  %v121 = vunpack.c.l.b16 %v39
  %v122 = vunpack.c.l.b16 %v40
  %v123 = vunpack.c.l.b16 %v41
  %v124 = vunpack.c.l.b16 %v42
  %v125 = vunpack.c.l.b16 %v43
  %v126 = vunpack.c.l.b16 %v44
  %v127 = vunpack.c.l.b16 %v45
  %v128 = vunpack.c.l.b16 %v46
  %v129 = vunpack.c.l.b16 %v47
  %v130 = vunpack.c.l.b16 %v48
  %v131 = vunpack.c.l.b16 %v49
  %v132 = vunpack.c.l.b16 %v50
  %v133 = vunpack.c.l.b16 %v51
  %v134 = vunpack.c.l.b16 %v52
  %v135 = vpack.c.b16 %v100, %v99
  %v136 = vpack.c.b16 %v102, %v101
  %v137 = vpack.c.b16 %v104, %v103
  %v138 = vpack.c.b16 %v106, %v105
  %v139 = vpack.c.b16 %v108, %v107
  %v140 = vpack.c.b16 %v110, %v109
  %v141 = vpack.c.b16 %v112, %v111
  %v142 = vpack.c.b16 %v114, %v113
  %v143 = vpack.c.b16 %v116, %v115
  %v144 = vpack.c.b16 %v118, %v117
  %v145 = vpack.c.b16 %v120, %v119
  %v146 = vpack.c.b16 %v122, %v121
  %v147 = vpack.c.b16 %v124, %v123
  %v148 = vpack.c.b16 %v126, %v125
  %v149 = vpack.c.b16 %v128, %v127
  %v150 = vpack.c.b16 %v130, %v129
  %v151 = vpack.c.b16 %v132, %v131
  %v152 = vpack.c.b16 %v134, %v133
  %vm171 = vcmask 261120
  %v173 = vsel %vm171, %v60, 0
  %175 = vmatprep.subr.bf16.mxu0 0
  %176 = vmatpush1.bf16.msra.mxu0 %v142
  %177 = vmatprep.subr.bf16.mxu0 0
  %178 = vmatpush1.bf16.msra.mxu0 %v141
  %179 = vmatprep.subr.bf16.mxu0 0
  %180 = vmatpush1.bf16.msra.mxu0 %v140
  %181 = vmatprep.subr.bf16.mxu0 0
  %182 = vmatpush1.bf16.msra.mxu0 %v139
  %183 = vmatprep.subr.bf16.mxu0 0
  %184 = vmatpush1.bf16.msra.mxu0 %v138
  %185 = vmatprep.subr.bf16.mxu0 0
  %186 = vmatpush1.bf16.msra.mxu0 %v137
  %187 = vmatprep.subr.bf16.mxu0 0
  %188 = vmatpush1.bf16.msra.mxu0 %v136
  %189 = vmatprep.subr.bf16.mxu0 0
  %190 = vmatpush1.bf16.msra.mxu0 %v135
  %191 = vmatprep.subr.bf16.mxu0 0
  %192 = vmatpush2.bf16.msra.mxu0 %v150
  %193 = vmatprep.subr.bf16.mxu0 0
  %194 = vmatpush2.bf16.msra.mxu0 %v149
  %195 = vmatprep.subr.bf16.mxu0 0
  %196 = vmatpush2.bf16.msra.mxu0 %v148
  %197 = vmatprep.subr.bf16.mxu0 0
  %198 = vmatpush2.bf16.msra.mxu0 %v147
  %199 = vmatprep.subr.bf16.mxu0 0
  %200 = vmatpush2.bf16.msra.mxu0 %v146
  %201 = vmatprep.subr.bf16.mxu0 0
  %202 = vmatpush2.bf16.msra.mxu0 %v145
  %203 = vmatprep.subr.bf16.mxu0 0
  %204 = vmatpush2.bf16.msra.mxu0 %v144
  %205 = vmatprep.subr.bf16.mxu0 0
  %206 = vmatpush2.bf16.msra.mxu0 %v143
  %207 = vmatprep.mubr.bf16.mxu0 %v59
  %208 = vmatmul.mubr.bf16.gmra.mxu0 %v58
  %v209 = vpop.f32.mrf.mxu0
  %v210 = vadd.f32 0.0, %v209
  %v211 = vpop.f32.mrf.mxu0
  %v212 = vpop.f32.mrf.mxu0
  %v213 = vpop.f32.mrf.mxu0
  %214 = vdwg.mxu0
  %215 = vmatprep.subr.bf16.mxu0 0
  %216 = vmatpush1.bf16.msra.mxu0 0
  %217 = vmatprep.subr.bf16.mxu0 0
  %218 = vmatpush1.bf16.msra.mxu0 0
  %219 = vmatprep.subr.bf16.mxu0 0
  %220 = vmatpush1.bf16.msra.mxu0 0
  %221 = vmatprep.subr.bf16.mxu0 0
  %222 = vmatpush1.bf16.msra.mxu0 0
  %223 = vmatprep.subr.bf16.mxu0 0
  %224 = vmatpush1.bf16.msra.mxu0 0
  %225 = vmatprep.subr.bf16.mxu0 0
  %226 = vmatpush1.bf16.msra.mxu0 0
  %227 = vmatprep.subr.bf16.mxu0 0
  %228 = vmatpush1.bf16.msra.mxu0 %v152
  %229 = vmatprep.subr.bf16.mxu0 0
  %230 = vmatpush1.bf16.msra.mxu0 %v151
  %231 = vmatprep.subr.bf16.mxu0 0
  %232 = vmatpush2.bf16.msra.mxu0 0
  %233 = vmatprep.subr.bf16.mxu0 0
  %234 = vmatpush2.bf16.msra.mxu0 0
  %235 = vmatprep.subr.bf16.mxu0 0
  %236 = vmatpush2.bf16.msra.mxu0 0
  %237 = vmatprep.subr.bf16.mxu0 0
  %238 = vmatpush2.bf16.msra.mxu0 0
  %239 = vmatprep.subr.bf16.mxu0 0
  %240 = vmatpush2.bf16.msra.mxu0 0
  %241 = vmatprep.subr.bf16.mxu0 0
  %242 = vmatpush2.bf16.msra.mxu0 0
  %243 = vmatprep.subr.bf16.mxu0 0
  %244 = vmatpush2.bf16.msra.mxu0 0
  %245 = vmatprep.subr.bf16.mxu0 0
  %246 = vmatpush2.bf16.msra.mxu0 0
  %247 = vmatprep.mubr.bf16.mxu0 0
  %248 = vmatmul.mubr.bf16.gmra.mxu0 %v173
  %v249 = vpop.f32.mrf.mxu0
  %v250 = vadd.f32 %v210, %v249
  %v251 = vpop.f32.mrf.mxu0
  %v252 = vpop.f32.mrf.mxu0
  %v253 = vpop.f32.mrf.mxu0
  %254 = vdwg.mxu0
  %v255 = vld [vmem:[%s2] sm:$0x1]
  %v256 = vlaneseq
  %v257 = vshrl.u32 %v256, 7
  %v258 = vsub.s32 0, %v257
  %v259 = vrot.slane %v255, %v258
  %v260 = vmul.f32 %v250, %v259
  %v261 = vld [vmem:[%s2 + $0x1] sm:$0x1]
  %v262 = vlaneseq
  %v263 = vshrl.u32 %v262, 7
  %v264 = vsub.s32 0, %v263
  %v265 = vrot.slane %v261, %v264
  %v266 = vadd.f32 %v260, %v265
  %v267 = vmax.f32 %v266, 0.0
  %v268 = vpack.c.bf16 %v267, %v267
  %269 = vst [vmem:[%s3] sm:$0xf] %v268
  // Predicated region
  $region14: #{_lambda_.55} parent=0 // pred_check
    _
  $region15: #{_lambda_.55} parent=0 // pred_check_branch
    %271 = sbr.rel (0) target = $region17
  $region16: #{_lambda_.55} parent=0 // pred_region
    _
  $region17: #{_lambda_.55} parent=0 // pred_fallthru
    _
  // Predicated region
  $region18: #{_lambda_.55} parent=0 // pred_check
    _
  $region19: #{_lambda_.55} parent=0 // pred_check_branch
    %273 = sbr.rel (0) target = $region21
  $region20: #{_lambda_.55} parent=0 // pred_region
    _
  $region21: #{_lambda_.55} parent=0 // pred_fallthru
    _

// kernel: _lambda_.65
$region0: #{_lambda_.65}
  #allocation0 [shape = 'u32[]', space=smem, size = 0x4, offset = 0x4, fixed_abs, tag = 'smem constant byte address 0x4 - core index']
  #allocation1 [shape = 'u32[144,128]{1,0:T(1,128)}', space=vmem, size = 0x12000, scoped, tag = 'internal scratch']
  %s0 = inlined_call_operand.vmem [shape: bf16[8,32], index: 0, kind: input, shape index: {}]
  %s1 = inlined_call_operand.vmem [shape: bf16[32,128], index: 1, kind: input, shape index: {}]
  %s2 = inlined_call_operand.vmem [shape: f32[2,128], index: 2, kind: input, shape index: {}]
  %s3 = inlined_call_operand.vmem [shape: bf16[8,128], index: 3, kind: output, shape index: {}]
  %s4 = sld [smem:[#allocation0]]
  $region22: #{_lambda_.65} parent=0
    _
  %s6 = ssub.s32 1, %s4
  %s7 = scalar_select 0, %s6, %s4
  // Predicated region
  $region2: #{_lambda_.65} parent=0 // pred_check
    _
  $region3: #{_lambda_.65} parent=0 // pred_check_branch
    %9 = sbr.rel (0) target = $region5
  $region4: #{_lambda_.65} parent=0 // pred_region
    _
  $region5: #{_lambda_.65} parent=0 // pred_fallthru
    _
  // Predicated region
  $region6: #{_lambda_.65} parent=0 // pred_check
    _
  $region7: #{_lambda_.65} parent=0 // pred_check_branch
    %11 = sbr.rel (0) target = $region9
  $region8: #{_lambda_.65} parent=0 // pred_region
    _
  $region9: #{_lambda_.65} parent=0 // pred_fallthru
    _
  // Predicated region
  $region10: #{_lambda_.65} parent=0 // pred_check
    _
  $region11: #{_lambda_.65} parent=0 // pred_check_branch
    %13 = sbr.rel (0) target = $region13
  $region12: #{_lambda_.65} parent=0 // pred_region
    _
  $region13: #{_lambda_.65} parent=0 // pred_fallthru
    _
  %v15 = vld [vmem:[%s0] sm:$0xf]
  %v16 = vld [vmem:[%s1] sm:$0xf]
  %v17 = vld [vmem:[%s1 + $0x4] sm:$0xf]
  %v18 = vld [vmem:[%s1 + $0x8] sm:$0xf]
  %v19 = vld [vmem:[%s1 + $0xc] sm:$0xf]
  %v24 = vunpack.c.l.b16 %v16
  %v25 = vunpack.c.l.b16 %v17
  %v26 = vunpack.c.l.b16 %v18
  %v27 = vunpack.c.l.b16 %v19
  %v28 = vpack.c.b16 %v25, %v24
  %v29 = vpack.c.b16 %v27, %v26
  %vm32 = vcmask 261120
  %v34 = vsel %vm32, %v15, 0
  %36 = vmatprep.subr.bf16.mxu0 0
  %37 = vmatpush1.bf16.msra.mxu0 0
  %38 = vmatprep.subr.bf16.mxu0 0
  %39 = vmatpush1.bf16.msra.mxu0 0
  %40 = vmatprep.subr.bf16.mxu0 0
  %41 = vmatpush1.bf16.msra.mxu0 0
  %42 = vmatprep.subr.bf16.mxu0 0
  %43 = vmatpush1.bf16.msra.mxu0 0
  %44 = vmatprep.subr.bf16.mxu0 0
  %45 = vmatpush1.bf16.msra.mxu0 0
  %46 = vmatprep.subr.bf16.mxu0 0
  %47 = vmatpush1.bf16.msra.mxu0 0
  %48 = vmatprep.subr.bf16.mxu0 0
  %49 = vmatpush1.bf16.msra.mxu0 %v29
  %50 = vmatprep.subr.bf16.mxu0 0
  %51 = vmatpush1.bf16.msra.mxu0 %v28
  %52 = vmatprep.subr.bf16.mxu0 0
  %53 = vmatpush2.bf16.msra.mxu0 0
  %54 = vmatprep.subr.bf16.mxu0 0
  %55 = vmatpush2.bf16.msra.mxu0 0
  %56 = vmatprep.subr.bf16.mxu0 0
  %57 = vmatpush2.bf16.msra.mxu0 0
  %58 = vmatprep.subr.bf16.mxu0 0
  %59 = vmatpush2.bf16.msra.mxu0 0
  %60 = vmatprep.subr.bf16.mxu0 0
  %61 = vmatpush2.bf16.msra.mxu0 0
  %62 = vmatprep.subr.bf16.mxu0 0
  %63 = vmatpush2.bf16.msra.mxu0 0
  %64 = vmatprep.subr.bf16.mxu0 0
  %65 = vmatpush2.bf16.msra.mxu0 0
  %66 = vmatprep.subr.bf16.mxu0 0
  %67 = vmatpush2.bf16.msra.mxu0 0
  %68 = vmatprep.mubr.bf16.mxu0 0
  %69 = vmatmul.mubr.bf16.gmra.mxu0 %v34
  %v70 = vpop.f32.mrf.mxu0
  %v71 = vadd.f32 0.0, %v70
  %v72 = vpop.f32.mrf.mxu0
  %v73 = vpop.f32.mrf.mxu0
  %v74 = vpop.f32.mrf.mxu0
  %75 = vdwg.mxu0
  %v76 = vld [vmem:[%s2] sm:$0x1]
  %v77 = vlaneseq
  %v78 = vshrl.u32 %v77, 7
  %v79 = vsub.s32 0, %v78
  %v80 = vrot.slane %v76, %v79
  %v81 = vmul.f32 %v71, %v80
  %v82 = vld [vmem:[%s2 + $0x1] sm:$0x1]
  %v83 = vlaneseq
  %v84 = vshrl.u32 %v83, 7
  %v85 = vsub.s32 0, %v84
  %v86 = vrot.slane %v82, %v85
  %v87 = vadd.f32 %v81, %v86
  %v88 = vpack.c.bf16 %v87, %v87
  %89 = vst [vmem:[%s3] sm:$0xf] %v88
  // Predicated region
  $region14: #{_lambda_.65} parent=0 // pred_check
    _
  $region15: #{_lambda_.65} parent=0 // pred_check_branch
    %91 = sbr.rel (0) target = $region17
  $region16: #{_lambda_.65} parent=0 // pred_region
    _
  $region17: #{_lambda_.65} parent=0 // pred_fallthru
    _
  // Predicated region
  $region18: #{_lambda_.65} parent=0 // pred_check
    _
  $region19: #{_lambda_.65} parent=0 // pred_check_branch
    %93 = sbr.rel (0) target = $region21
  $region20: #{_lambda_.65} parent=0 // pred_region
    _
  $region21: #{_lambda_.65} parent=0 // pred_fallthru
    _

// kernel: _lambda_.67
$region0: #{_lambda_.67}
  #allocation0 [shape = 'u32[]', space=smem, size = 0x4, offset = 0x4, fixed_abs, tag = 'smem constant byte address 0x4 - core index']
  #allocation1 [shape = 'u32[144,128]{1,0:T(1,128)}', space=vmem, size = 0x12000, scoped, tag = 'internal scratch']
  %s0 = inlined_call_operand.vmem [shape: bf16[8,576], index: 0, kind: input, shape index: {}]
  %s1 = inlined_call_operand.vmem [shape: bf16[576,128], index: 1, kind: input, shape index: {}]
  %s2 = inlined_call_operand.vmem [shape: f32[2,128], index: 2, kind: input, shape index: {}]
  %s3 = inlined_call_operand.vmem [shape: bf16[8,128], index: 3, kind: input, shape index: {}]
  %s4 = inlined_call_operand.vmem [shape: bf16[8,128], index: 4, kind: output, shape index: {}]
  %s5 = sld [smem:[#allocation0]]
  $region26: #{_lambda_.67} parent=0
    _
  %s7 = ssub.s32 1, %s5
  %s8 = scalar_select 0, %s7, %s5
  // Predicated region
  $region2: #{_lambda_.67} parent=0 // pred_check
    _
  $region3: #{_lambda_.67} parent=0 // pred_check_branch
    %10 = sbr.rel (0) target = $region5
  $region4: #{_lambda_.67} parent=0 // pred_region
    _
  $region5: #{_lambda_.67} parent=0 // pred_fallthru
    _
  // Predicated region
  $region6: #{_lambda_.67} parent=0 // pred_check
    _
  $region7: #{_lambda_.67} parent=0 // pred_check_branch
    %12 = sbr.rel (0) target = $region9
  $region8: #{_lambda_.67} parent=0 // pred_region
    _
  $region9: #{_lambda_.67} parent=0 // pred_fallthru
    _
  // Predicated region
  $region10: #{_lambda_.67} parent=0 // pred_check
    _
  $region11: #{_lambda_.67} parent=0 // pred_check_branch
    %14 = sbr.rel (0) target = $region13
  $region12: #{_lambda_.67} parent=0 // pred_region
    _
  $region13: #{_lambda_.67} parent=0 // pred_fallthru
    _
  // Predicated region
  $region14: #{_lambda_.67} parent=0 // pred_check
    _
  $region15: #{_lambda_.67} parent=0 // pred_check_branch
    %16 = sbr.rel (0) target = $region17
  $region16: #{_lambda_.67} parent=0 // pred_region
    _
  $region17: #{_lambda_.67} parent=0 // pred_fallthru
    _
  %v18 = vld [vmem:[%s0] sm:$0xff]
  %v19 = vld [vmem:[%s0 + $0x8] sm:$0xff]
  %v20 = vld [vmem:[%s0 + $0x10] sm:$0xf]
  %v21 = vld [vmem:[%s1] sm:$0xf]
  %v22 = vld [vmem:[%s1 + $0x4] sm:$0xf]
  %v23 = vld [vmem:[%s1 + $0x8] sm:$0xf]
  %v24 = vld [vmem:[%s1 + $0xc] sm:$0xf]
  %v25 = vld [vmem:[%s1 + $0x10] sm:$0xf]
  %v26 = vld [vmem:[%s1 + $0x14] sm:$0xf]
  %v27 = vld [vmem:[%s1 + $0x18] sm:$0xf]
  %v28 = vld [vmem:[%s1 + $0x1c] sm:$0xf]
  %v29 = vld [vmem:[%s1 + $0x20] sm:$0xf]
  %v30 = vld [vmem:[%s1 + $0x24] sm:$0xf]
  %v31 = vld [vmem:[%s1 + $0x28] sm:$0xf]
  %v32 = vld [vmem:[%s1 + $0x2c] sm:$0xf]
  %v33 = vld [vmem:[%s1 + $0x30] sm:$0xf]
  %v34 = vld [vmem:[%s1 + $0x34] sm:$0xf]
  %v35 = vld [vmem:[%s1 + $0x38] sm:$0xf]
  %v36 = vld [vmem:[%s1 + $0x3c] sm:$0xf]
  %v37 = vld [vmem:[%s1 + $0x40] sm:$0xf]
  %v38 = vld [vmem:[%s1 + $0x44] sm:$0xf]
  %v39 = vld [vmem:[%s1 + $0x48] sm:$0xf]
  %v40 = vld [vmem:[%s1 + $0x4c] sm:$0xf]
  %v41 = vld [vmem:[%s1 + $0x50] sm:$0xf]
  %v42 = vld [vmem:[%s1 + $0x54] sm:$0xf]
  %v43 = vld [vmem:[%s1 + $0x58] sm:$0xf]
  %v44 = vld [vmem:[%s1 + $0x5c] sm:$0xf]
  %v45 = vld [vmem:[%s1 + $0x60] sm:$0xf]
  %v46 = vld [vmem:[%s1 + $0x64] sm:$0xf]
  %v47 = vld [vmem:[%s1 + $0x68] sm:$0xf]
  %v48 = vld [vmem:[%s1 + $0x6c] sm:$0xf]
  %v49 = vld [vmem:[%s1 + $0x70] sm:$0xf]
  %v50 = vld [vmem:[%s1 + $0x74] sm:$0xf]
  %v51 = vld [vmem:[%s1 + $0x78] sm:$0xf]
  %v52 = vld [vmem:[%s1 + $0x7c] sm:$0xf]
  %v53 = vld [vmem:[%s1 + $0x80] sm:$0xf]
  %v54 = vld [vmem:[%s1 + $0x84] sm:$0xf]
  %v55 = vld [vmem:[%s1 + $0x88] sm:$0xf]
  %v56 = vld [vmem:[%s1 + $0x8c] sm:$0xf]
  %v57 = vld [vmem:[%s1 + $0x90] sm:$0xf]
  %v58 = vld [vmem:[%s1 + $0x94] sm:$0xf]
  %v59 = vld [vmem:[%s1 + $0x98] sm:$0xf]
  %v60 = vld [vmem:[%s1 + $0x9c] sm:$0xf]
  %v61 = vld [vmem:[%s1 + $0xa0] sm:$0xf]
  %v62 = vld [vmem:[%s1 + $0xa4] sm:$0xf]
  %v63 = vld [vmem:[%s1 + $0xa8] sm:$0xf]
  %v64 = vld [vmem:[%s1 + $0xac] sm:$0xf]
  %v65 = vld [vmem:[%s1 + $0xb0] sm:$0xf]
  %v66 = vld [vmem:[%s1 + $0xb4] sm:$0xf]
  %v67 = vld [vmem:[%s1 + $0xb8] sm:$0xf]
  %v68 = vld [vmem:[%s1 + $0xbc] sm:$0xf]
  %v69 = vld [vmem:[%s1 + $0xc0] sm:$0xf]
  %v70 = vld [vmem:[%s1 + $0xc4] sm:$0xf]
  %v71 = vld [vmem:[%s1 + $0xc8] sm:$0xf]
  %v72 = vld [vmem:[%s1 + $0xcc] sm:$0xf]
  %v73 = vld [vmem:[%s1 + $0xd0] sm:$0xf]
  %v74 = vld [vmem:[%s1 + $0xd4] sm:$0xf]
  %v75 = vld [vmem:[%s1 + $0xd8] sm:$0xf]
  %v76 = vld [vmem:[%s1 + $0xdc] sm:$0xf]
  %v77 = vld [vmem:[%s1 + $0xe0] sm:$0xf]
  %v78 = vld [vmem:[%s1 + $0xe4] sm:$0xf]
  %v79 = vld [vmem:[%s1 + $0xe8] sm:$0xf]
  %v80 = vld [vmem:[%s1 + $0xec] sm:$0xf]
  %v81 = vld [vmem:[%s1 + $0xf0] sm:$0xf]
  %v82 = vld [vmem:[%s1 + $0xf4] sm:$0xf]
  %v83 = vld [vmem:[%s1 + $0xf8] sm:$0xf]
  %v84 = vld [vmem:[%s1 + $0xfc] sm:$0xf]
  %v85 = vld [vmem:[%s1 + $0x100] sm:$0xf]
  %v86 = vld [vmem:[%s1 + $0x104] sm:$0xf]
  %v87 = vld [vmem:[%s1 + $0x108] sm:$0xf]
  %v88 = vld [vmem:[%s1 + $0x10c] sm:$0xf]
  %v89 = vld [vmem:[%s1 + $0x110] sm:$0xf]
  %v90 = vld [vmem:[%s1 + $0x114] sm:$0xf]
  %v91 = vld [vmem:[%s1 + $0x118] sm:$0xf]
  %v92 = vld [vmem:[%s1 + $0x11c] sm:$0xf]
  %v96 = vunpack.c.l.b16 %v18
  %v97 = vunpack.c.h.b16 %v18
  %v98 = vunpack.c.l.b16 %v19
  %v99 = vunpack.c.h.b16 %v19
  %v100 = vunpack.c.l.b16 %v20
  %v101 = vpack.c.b16 %v96, %v96
  %v102 = vpack.c.b16 %v97, %v97
  %v103 = vpack.c.b16 %v98, %v98
  %v104 = vpack.c.b16 %v99, %v99
  %v105 = vpack.c.b16 %v100, %v100
  %v182 = vunpack.c.l.b16 %v21
  %v183 = vunpack.c.l.b16 %v22
  %v184 = vunpack.c.l.b16 %v23
  %v185 = vunpack.c.l.b16 %v24
  %v186 = vunpack.c.l.b16 %v25
  %v187 = vunpack.c.l.b16 %v26
  %v188 = vunpack.c.l.b16 %v27
  %v189 = vunpack.c.l.b16 %v28
  %v190 = vunpack.c.l.b16 %v29
  %v191 = vunpack.c.l.b16 %v30
  %v192 = vunpack.c.l.b16 %v31
  %v193 = vunpack.c.l.b16 %v32
  %v194 = vunpack.c.l.b16 %v33
  %v195 = vunpack.c.l.b16 %v34
  %v196 = vunpack.c.l.b16 %v35
  %v197 = vunpack.c.l.b16 %v36
  %v198 = vunpack.c.l.b16 %v37
  %v199 = vunpack.c.l.b16 %v38
  %v200 = vunpack.c.l.b16 %v39
  %v201 = vunpack.c.l.b16 %v40
  %v202 = vunpack.c.l.b16 %v41
  %v203 = vunpack.c.l.b16 %v42
  %v204 = vunpack.c.l.b16 %v43
  %v205 = vunpack.c.l.b16 %v44
  %v206 = vunpack.c.l.b16 %v45
  %v207 = vunpack.c.l.b16 %v46
  %v208 = vunpack.c.l.b16 %v47
  %v209 = vunpack.c.l.b16 %v48
  %v210 = vunpack.c.l.b16 %v49
  %v211 = vunpack.c.l.b16 %v50
  %v212 = vunpack.c.l.b16 %v51
  %v213 = vunpack.c.l.b16 %v52
  %v214 = vunpack.c.l.b16 %v53
  %v215 = vunpack.c.l.b16 %v54
  %v216 = vunpack.c.l.b16 %v55
  %v217 = vunpack.c.l.b16 %v56
  %v218 = vunpack.c.l.b16 %v57
  %v219 = vunpack.c.l.b16 %v58
  %v220 = vunpack.c.l.b16 %v59
  %v221 = vunpack.c.l.b16 %v60
  %v222 = vunpack.c.l.b16 %v61
  %v223 = vunpack.c.l.b16 %v62
  %v224 = vunpack.c.l.b16 %v63
  %v225 = vunpack.c.l.b16 %v64
  %v226 = vunpack.c.l.b16 %v65
  %v227 = vunpack.c.l.b16 %v66
  %v228 = vunpack.c.l.b16 %v67
  %v229 = vunpack.c.l.b16 %v68
  %v230 = vunpack.c.l.b16 %v69
  %v231 = vunpack.c.l.b16 %v70
  %v232 = vunpack.c.l.b16 %v71
  %v233 = vunpack.c.l.b16 %v72
  %v234 = vunpack.c.l.b16 %v73
  %v235 = vunpack.c.l.b16 %v74
  %v236 = vunpack.c.l.b16 %v75
  %v237 = vunpack.c.l.b16 %v76
  %v238 = vunpack.c.l.b16 %v77
  %v239 = vunpack.c.l.b16 %v78
  %v240 = vunpack.c.l.b16 %v79
  %v241 = vunpack.c.l.b16 %v80
  %v242 = vunpack.c.l.b16 %v81
  %v243 = vunpack.c.l.b16 %v82
  %v244 = vunpack.c.l.b16 %v83
  %v245 = vunpack.c.l.b16 %v84
  %v246 = vunpack.c.l.b16 %v85
  %v247 = vunpack.c.l.b16 %v86
  %v248 = vunpack.c.l.b16 %v87
  %v249 = vunpack.c.l.b16 %v88
  %v250 = vunpack.c.l.b16 %v89
  %v251 = vunpack.c.l.b16 %v90
  %v252 = vunpack.c.l.b16 %v91
  %v253 = vunpack.c.l.b16 %v92
  %v254 = vpack.c.b16 %v183, %v182
  %v255 = vpack.c.b16 %v185, %v184
  %v256 = vpack.c.b16 %v187, %v186
  %v257 = vpack.c.b16 %v189, %v188
  %v258 = vpack.c.b16 %v191, %v190
  %v259 = vpack.c.b16 %v193, %v192
  %v260 = vpack.c.b16 %v195, %v194
  %v261 = vpack.c.b16 %v197, %v196
  %v262 = vpack.c.b16 %v199, %v198
  %v263 = vpack.c.b16 %v201, %v200
  %v264 = vpack.c.b16 %v203, %v202
  %v265 = vpack.c.b16 %v205, %v204
  %v266 = vpack.c.b16 %v207, %v206
  %v267 = vpack.c.b16 %v209, %v208
  %v268 = vpack.c.b16 %v211, %v210
  %v269 = vpack.c.b16 %v213, %v212
  %v270 = vpack.c.b16 %v215, %v214
  %v271 = vpack.c.b16 %v217, %v216
  %v272 = vpack.c.b16 %v219, %v218
  %v273 = vpack.c.b16 %v221, %v220
  %v274 = vpack.c.b16 %v223, %v222
  %v275 = vpack.c.b16 %v225, %v224
  %v276 = vpack.c.b16 %v227, %v226
  %v277 = vpack.c.b16 %v229, %v228
  %v278 = vpack.c.b16 %v231, %v230
  %v279 = vpack.c.b16 %v233, %v232
  %v280 = vpack.c.b16 %v235, %v234
  %v281 = vpack.c.b16 %v237, %v236
  %v282 = vpack.c.b16 %v239, %v238
  %v283 = vpack.c.b16 %v241, %v240
  %v284 = vpack.c.b16 %v243, %v242
  %v285 = vpack.c.b16 %v245, %v244
  %v286 = vpack.c.b16 %v247, %v246
  %v287 = vpack.c.b16 %v249, %v248
  %v288 = vpack.c.b16 %v251, %v250
  %v289 = vpack.c.b16 %v253, %v252
  %vm326 = vcmask 523264
  %v328 = vsel %vm326, %v105, 0
  %330 = vmatprep.subr.bf16.mxu0 0
  %331 = vmatpush1.bf16.msra.mxu0 %v261
  %332 = vmatprep.subr.bf16.mxu0 0
  %333 = vmatpush1.bf16.msra.mxu0 %v260
  %334 = vmatprep.subr.bf16.mxu0 0
  %335 = vmatpush1.bf16.msra.mxu0 %v259
  %336 = vmatprep.subr.bf16.mxu0 0
  %337 = vmatpush1.bf16.msra.mxu0 %v258
  %338 = vmatprep.subr.bf16.mxu0 0
  %339 = vmatpush1.bf16.msra.mxu0 %v257
  %340 = vmatprep.subr.bf16.mxu0 0
  %341 = vmatpush1.bf16.msra.mxu0 %v256
  %342 = vmatprep.subr.bf16.mxu0 0
  %343 = vmatpush1.bf16.msra.mxu0 %v255
  %344 = vmatprep.subr.bf16.mxu0 0
  %345 = vmatpush1.bf16.msra.mxu0 %v254
  %346 = vmatprep.subr.bf16.mxu0 0
  %347 = vmatpush2.bf16.msra.mxu0 %v269
  %348 = vmatprep.subr.bf16.mxu0 0
  %349 = vmatpush2.bf16.msra.mxu0 %v268
  %350 = vmatprep.subr.bf16.mxu0 0
  %351 = vmatpush2.bf16.msra.mxu0 %v267
  %352 = vmatprep.subr.bf16.mxu0 0
  %353 = vmatpush2.bf16.msra.mxu0 %v266
  %354 = vmatprep.subr.bf16.mxu0 0
  %355 = vmatpush2.bf16.msra.mxu0 %v265
  %356 = vmatprep.subr.bf16.mxu0 0
  %357 = vmatpush2.bf16.msra.mxu0 %v264
  %358 = vmatprep.subr.bf16.mxu0 0
  %359 = vmatpush2.bf16.msra.mxu0 %v263
  %360 = vmatprep.subr.bf16.mxu0 0
  %361 = vmatpush2.bf16.msra.mxu0 %v262
  %362 = vmatprep.mubr.bf16.mxu0 %v102
  %363 = vmatmul.mubr.bf16.gmra.mxu0 %v101
  %v364 = vpop.f32.mrf.mxu0
  %v365 = vadd.f32 0.0, %v364
  %v366 = vpop.f32.mrf.mxu0
  %v367 = vpop.f32.mrf.mxu0
  %v368 = vpop.f32.mrf.mxu0
  %369 = vdwg.mxu0
  %370 = vmatprep.subr.bf16.mxu0 0
  %371 = vmatpush1.bf16.msra.mxu0 %v277
  %372 = vmatprep.subr.bf16.mxu0 0
  %373 = vmatpush1.bf16.msra.mxu0 %v276
  %374 = vmatprep.subr.bf16.mxu0 0
  %375 = vmatpush1.bf16.msra.mxu0 %v275
  %376 = vmatprep.subr.bf16.mxu0 0
  %377 = vmatpush1.bf16.msra.mxu0 %v274
  %378 = vmatprep.subr.bf16.mxu0 0
  %379 = vmatpush1.bf16.msra.mxu0 %v273
  %380 = vmatprep.subr.bf16.mxu0 0
  %381 = vmatpush1.bf16.msra.mxu0 %v272
  %382 = vmatprep.subr.bf16.mxu0 0
  %383 = vmatpush1.bf16.msra.mxu0 %v271
  %384 = vmatprep.subr.bf16.mxu0 0
  %385 = vmatpush1.bf16.msra.mxu0 %v270
  %386 = vmatprep.subr.bf16.mxu0 0
  %387 = vmatpush2.bf16.msra.mxu0 %v285
  %388 = vmatprep.subr.bf16.mxu0 0
  %389 = vmatpush2.bf16.msra.mxu0 %v284
  %390 = vmatprep.subr.bf16.mxu0 0
  %391 = vmatpush2.bf16.msra.mxu0 %v283
  %392 = vmatprep.subr.bf16.mxu0 0
  %393 = vmatpush2.bf16.msra.mxu0 %v282
  %394 = vmatprep.subr.bf16.mxu0 0
  %395 = vmatpush2.bf16.msra.mxu0 %v281
  %396 = vmatprep.subr.bf16.mxu0 0
  %397 = vmatpush2.bf16.msra.mxu0 %v280
  %398 = vmatprep.subr.bf16.mxu0 0
  %399 = vmatpush2.bf16.msra.mxu0 %v279
  %400 = vmatprep.subr.bf16.mxu0 0
  %401 = vmatpush2.bf16.msra.mxu0 %v278
  %402 = vmatprep.mubr.bf16.mxu0 %v104
  %403 = vmatmul.mubr.bf16.gmra.mxu0 %v103
  %v404 = vpop.f32.mrf.mxu0
  %v405 = vadd.f32 %v365, %v404
  %v406 = vpop.f32.mrf.mxu0
  %v407 = vpop.f32.mrf.mxu0
  %v408 = vpop.f32.mrf.mxu0
  %409 = vdwg.mxu0
  %410 = vmatprep.subr.bf16.mxu0 0
  %411 = vmatpush1.bf16.msra.mxu0 0
  %412 = vmatprep.subr.bf16.mxu0 0
  %413 = vmatpush1.bf16.msra.mxu0 0
  %414 = vmatprep.subr.bf16.mxu0 0
  %415 = vmatpush1.bf16.msra.mxu0 0
  %416 = vmatprep.subr.bf16.mxu0 0
  %417 = vmatpush1.bf16.msra.mxu0 0
  %418 = vmatprep.subr.bf16.mxu0 0
  %419 = vmatpush1.bf16.msra.mxu0 %v289
  %420 = vmatprep.subr.bf16.mxu0 0
  %421 = vmatpush1.bf16.msra.mxu0 %v288
  %422 = vmatprep.subr.bf16.mxu0 0
  %423 = vmatpush1.bf16.msra.mxu0 %v287
  %424 = vmatprep.subr.bf16.mxu0 0
  %425 = vmatpush1.bf16.msra.mxu0 %v286
  %426 = vmatprep.subr.bf16.mxu0 0
  %427 = vmatpush2.bf16.msra.mxu0 0
  %428 = vmatprep.subr.bf16.mxu0 0
  %429 = vmatpush2.bf16.msra.mxu0 0
  %430 = vmatprep.subr.bf16.mxu0 0
  %431 = vmatpush2.bf16.msra.mxu0 0
  %432 = vmatprep.subr.bf16.mxu0 0
  %433 = vmatpush2.bf16.msra.mxu0 0
  %434 = vmatprep.subr.bf16.mxu0 0
  %435 = vmatpush2.bf16.msra.mxu0 0
  %436 = vmatprep.subr.bf16.mxu0 0
  %437 = vmatpush2.bf16.msra.mxu0 0
  %438 = vmatprep.subr.bf16.mxu0 0
  %439 = vmatpush2.bf16.msra.mxu0 0
  %440 = vmatprep.subr.bf16.mxu0 0
  %441 = vmatpush2.bf16.msra.mxu0 0
  %442 = vmatprep.mubr.bf16.mxu0 0
  %443 = vmatmul.mubr.bf16.gmra.mxu0 %v328
  %v444 = vpop.f32.mrf.mxu0
  %v445 = vadd.f32 %v405, %v444
  %v446 = vpop.f32.mrf.mxu0
  %v447 = vpop.f32.mrf.mxu0
  %v448 = vpop.f32.mrf.mxu0
  %449 = vdwg.mxu0
  %v450 = vld [vmem:[%s2] sm:$0x1]
  %v451 = vlaneseq
  %v452 = vshrl.u32 %v451, 7
  %v453 = vsub.s32 0, %v452
  %v454 = vrot.slane %v450, %v453
  %v455 = vmul.f32 %v445, %v454
  %v456 = vld [vmem:[%s2 + $0x1] sm:$0x1]
  %v457 = vlaneseq
  %v458 = vshrl.u32 %v457, 7
  %v459 = vsub.s32 0, %v458
  %v460 = vrot.slane %v456, %v459
  %v461 = vadd.f32 %v455, %v460
  %v462 = vld [vmem:[%s3] sm:$0xf]
  %v463 = vunpack.c.l.bf16 %v462
  %v464 = vadd.f32 %v461, %v463
  %v465 = vmax.f32 %v464, 0.0
  %v466 = vpack.c.bf16 %v465, %v465
  %467 = vst [vmem:[%s4] sm:$0xf] %v466
  // Predicated region
  $region18: #{_lambda_.67} parent=0 // pred_check
    _
  $region19: #{_lambda_.67} parent=0 // pred_check_branch
    %469 = sbr.rel (0) target = $region21
  $region20: #{_lambda_.67} parent=0 // pred_region
    _
  $region21: #{_lambda_.67} parent=0 // pred_fallthru
    _
  // Predicated region
  $region22: #{_lambda_.67} parent=0 // pred_check
    _
  $region23: #{_lambda_.67} parent=0 // pred_check_branch
    %471 = sbr.rel (0) target = $region25
  $region24: #{_lambda_.67} parent=0 // pred_region
    _
  $region25: #{_lambda_.67} parent=0 // pred_fallthru
    _

// kernel: _lambda_.68
$region0: #{_lambda_.68}
  #allocation0 [shape = 'u32[]', space=smem, size = 0x4, offset = 0x4, fixed_abs, tag = 'smem constant byte address 0x4 - core index']
  #allocation1 [shape = 'u32[144,128]{1,0:T(1,128)}', space=vmem, size = 0x12000, scoped, tag = 'internal scratch']
  %s0 = inlined_call_operand.vmem [shape: bf16[8,576], index: 0, kind: input, shape index: {}]
  %s1 = inlined_call_operand.vmem [shape: bf16[576,128], index: 1, kind: input, shape index: {}]
  %s2 = inlined_call_operand.vmem [shape: f32[2,128], index: 2, kind: input, shape index: {}]
  %s3 = inlined_call_operand.vmem [shape: bf16[8,128], index: 3, kind: output, shape index: {}]
  %s4 = sld [smem:[#allocation0]]
  $region22: #{_lambda_.68} parent=0
    _
  %s6 = ssub.s32 1, %s4
  %s7 = scalar_select 0, %s6, %s4
  // Predicated region
  $region2: #{_lambda_.68} parent=0 // pred_check
    _
  $region3: #{_lambda_.68} parent=0 // pred_check_branch
    %9 = sbr.rel (0) target = $region5
  $region4: #{_lambda_.68} parent=0 // pred_region
    _
  $region5: #{_lambda_.68} parent=0 // pred_fallthru
    _
  // Predicated region
  $region6: #{_lambda_.68} parent=0 // pred_check
    _
  $region7: #{_lambda_.68} parent=0 // pred_check_branch
    %11 = sbr.rel (0) target = $region9
  $region8: #{_lambda_.68} parent=0 // pred_region
    _
  $region9: #{_lambda_.68} parent=0 // pred_fallthru
    _
  // Predicated region
  $region10: #{_lambda_.68} parent=0 // pred_check
    _
  $region11: #{_lambda_.68} parent=0 // pred_check_branch
    %13 = sbr.rel (0) target = $region13
  $region12: #{_lambda_.68} parent=0 // pred_region
    _
  $region13: #{_lambda_.68} parent=0 // pred_fallthru
    _
  %v15 = vld [vmem:[%s0] sm:$0xff]
  %v16 = vld [vmem:[%s0 + $0x8] sm:$0xff]
  %v17 = vld [vmem:[%s0 + $0x10] sm:$0xf]
  %v18 = vld [vmem:[%s1] sm:$0xf]
  %v19 = vld [vmem:[%s1 + $0x4] sm:$0xf]
  %v20 = vld [vmem:[%s1 + $0x8] sm:$0xf]
  %v21 = vld [vmem:[%s1 + $0xc] sm:$0xf]
  %v22 = vld [vmem:[%s1 + $0x10] sm:$0xf]
  %v23 = vld [vmem:[%s1 + $0x14] sm:$0xf]
  %v24 = vld [vmem:[%s1 + $0x18] sm:$0xf]
  %v25 = vld [vmem:[%s1 + $0x1c] sm:$0xf]
  %v26 = vld [vmem:[%s1 + $0x20] sm:$0xf]
  %v27 = vld [vmem:[%s1 + $0x24] sm:$0xf]
  %v28 = vld [vmem:[%s1 + $0x28] sm:$0xf]
  %v29 = vld [vmem:[%s1 + $0x2c] sm:$0xf]
  %v30 = vld [vmem:[%s1 + $0x30] sm:$0xf]
  %v31 = vld [vmem:[%s1 + $0x34] sm:$0xf]
  %v32 = vld [vmem:[%s1 + $0x38] sm:$0xf]
  %v33 = vld [vmem:[%s1 + $0x3c] sm:$0xf]
  %v34 = vld [vmem:[%s1 + $0x40] sm:$0xf]
  %v35 = vld [vmem:[%s1 + $0x44] sm:$0xf]
  %v36 = vld [vmem:[%s1 + $0x48] sm:$0xf]
  %v37 = vld [vmem:[%s1 + $0x4c] sm:$0xf]
  %v38 = vld [vmem:[%s1 + $0x50] sm:$0xf]
  %v39 = vld [vmem:[%s1 + $0x54] sm:$0xf]
  %v40 = vld [vmem:[%s1 + $0x58] sm:$0xf]
  %v41 = vld [vmem:[%s1 + $0x5c] sm:$0xf]
  %v42 = vld [vmem:[%s1 + $0x60] sm:$0xf]
  %v43 = vld [vmem:[%s1 + $0x64] sm:$0xf]
  %v44 = vld [vmem:[%s1 + $0x68] sm:$0xf]
  %v45 = vld [vmem:[%s1 + $0x6c] sm:$0xf]
  %v46 = vld [vmem:[%s1 + $0x70] sm:$0xf]
  %v47 = vld [vmem:[%s1 + $0x74] sm:$0xf]
  %v48 = vld [vmem:[%s1 + $0x78] sm:$0xf]
  %v49 = vld [vmem:[%s1 + $0x7c] sm:$0xf]
  %v50 = vld [vmem:[%s1 + $0x80] sm:$0xf]
  %v51 = vld [vmem:[%s1 + $0x84] sm:$0xf]
  %v52 = vld [vmem:[%s1 + $0x88] sm:$0xf]
  %v53 = vld [vmem:[%s1 + $0x8c] sm:$0xf]
  %v54 = vld [vmem:[%s1 + $0x90] sm:$0xf]
  %v55 = vld [vmem:[%s1 + $0x94] sm:$0xf]
  %v56 = vld [vmem:[%s1 + $0x98] sm:$0xf]
  %v57 = vld [vmem:[%s1 + $0x9c] sm:$0xf]
  %v58 = vld [vmem:[%s1 + $0xa0] sm:$0xf]
  %v59 = vld [vmem:[%s1 + $0xa4] sm:$0xf]
  %v60 = vld [vmem:[%s1 + $0xa8] sm:$0xf]
  %v61 = vld [vmem:[%s1 + $0xac] sm:$0xf]
  %v62 = vld [vmem:[%s1 + $0xb0] sm:$0xf]
  %v63 = vld [vmem:[%s1 + $0xb4] sm:$0xf]
  %v64 = vld [vmem:[%s1 + $0xb8] sm:$0xf]
  %v65 = vld [vmem:[%s1 + $0xbc] sm:$0xf]
  %v66 = vld [vmem:[%s1 + $0xc0] sm:$0xf]
  %v67 = vld [vmem:[%s1 + $0xc4] sm:$0xf]
  %v68 = vld [vmem:[%s1 + $0xc8] sm:$0xf]
  %v69 = vld [vmem:[%s1 + $0xcc] sm:$0xf]
  %v70 = vld [vmem:[%s1 + $0xd0] sm:$0xf]
  %v71 = vld [vmem:[%s1 + $0xd4] sm:$0xf]
  %v72 = vld [vmem:[%s1 + $0xd8] sm:$0xf]
  %v73 = vld [vmem:[%s1 + $0xdc] sm:$0xf]
  %v74 = vld [vmem:[%s1 + $0xe0] sm:$0xf]
  %v75 = vld [vmem:[%s1 + $0xe4] sm:$0xf]
  %v76 = vld [vmem:[%s1 + $0xe8] sm:$0xf]
  %v77 = vld [vmem:[%s1 + $0xec] sm:$0xf]
  %v78 = vld [vmem:[%s1 + $0xf0] sm:$0xf]
  %v79 = vld [vmem:[%s1 + $0xf4] sm:$0xf]
  %v80 = vld [vmem:[%s1 + $0xf8] sm:$0xf]
  %v81 = vld [vmem:[%s1 + $0xfc] sm:$0xf]
  %v82 = vld [vmem:[%s1 + $0x100] sm:$0xf]
  %v83 = vld [vmem:[%s1 + $0x104] sm:$0xf]
  %v84 = vld [vmem:[%s1 + $0x108] sm:$0xf]
  %v85 = vld [vmem:[%s1 + $0x10c] sm:$0xf]
  %v86 = vld [vmem:[%s1 + $0x110] sm:$0xf]
  %v87 = vld [vmem:[%s1 + $0x114] sm:$0xf]
  %v88 = vld [vmem:[%s1 + $0x118] sm:$0xf]
  %v89 = vld [vmem:[%s1 + $0x11c] sm:$0xf]
  %v93 = vunpack.c.l.b16 %v15
  %v94 = vunpack.c.h.b16 %v15
  %v95 = vunpack.c.l.b16 %v16
  %v96 = vunpack.c.h.b16 %v16
  %v97 = vunpack.c.l.b16 %v17
  %v98 = vpack.c.b16 %v93, %v93
  %v99 = vpack.c.b16 %v94, %v94
  %v100 = vpack.c.b16 %v95, %v95
  %v101 = vpack.c.b16 %v96, %v96
  %v102 = vpack.c.b16 %v97, %v97
  %v179 = vunpack.c.l.b16 %v18
  %v180 = vunpack.c.l.b16 %v19
  %v181 = vunpack.c.l.b16 %v20
  %v182 = vunpack.c.l.b16 %v21
  %v183 = vunpack.c.l.b16 %v22
  %v184 = vunpack.c.l.b16 %v23
  %v185 = vunpack.c.l.b16 %v24
  %v186 = vunpack.c.l.b16 %v25
  %v187 = vunpack.c.l.b16 %v26
  %v188 = vunpack.c.l.b16 %v27
  %v189 = vunpack.c.l.b16 %v28
  %v190 = vunpack.c.l.b16 %v29
  %v191 = vunpack.c.l.b16 %v30
  %v192 = vunpack.c.l.b16 %v31
  %v193 = vunpack.c.l.b16 %v32
  %v194 = vunpack.c.l.b16 %v33
  %v195 = vunpack.c.l.b16 %v34
  %v196 = vunpack.c.l.b16 %v35
  %v197 = vunpack.c.l.b16 %v36
  %v198 = vunpack.c.l.b16 %v37
  %v199 = vunpack.c.l.b16 %v38
  %v200 = vunpack.c.l.b16 %v39
  %v201 = vunpack.c.l.b16 %v40
  %v202 = vunpack.c.l.b16 %v41
  %v203 = vunpack.c.l.b16 %v42
  %v204 = vunpack.c.l.b16 %v43
  %v205 = vunpack.c.l.b16 %v44
  %v206 = vunpack.c.l.b16 %v45
  %v207 = vunpack.c.l.b16 %v46
  %v208 = vunpack.c.l.b16 %v47
  %v209 = vunpack.c.l.b16 %v48
  %v210 = vunpack.c.l.b16 %v49
  %v211 = vunpack.c.l.b16 %v50
  %v212 = vunpack.c.l.b16 %v51
  %v213 = vunpack.c.l.b16 %v52
  %v214 = vunpack.c.l.b16 %v53
  %v215 = vunpack.c.l.b16 %v54
  %v216 = vunpack.c.l.b16 %v55
  %v217 = vunpack.c.l.b16 %v56
  %v218 = vunpack.c.l.b16 %v57
  %v219 = vunpack.c.l.b16 %v58
  %v220 = vunpack.c.l.b16 %v59
  %v221 = vunpack.c.l.b16 %v60
  %v222 = vunpack.c.l.b16 %v61
  %v223 = vunpack.c.l.b16 %v62
  %v224 = vunpack.c.l.b16 %v63
  %v225 = vunpack.c.l.b16 %v64
  %v226 = vunpack.c.l.b16 %v65
  %v227 = vunpack.c.l.b16 %v66
  %v228 = vunpack.c.l.b16 %v67
  %v229 = vunpack.c.l.b16 %v68
  %v230 = vunpack.c.l.b16 %v69
  %v231 = vunpack.c.l.b16 %v70
  %v232 = vunpack.c.l.b16 %v71
  %v233 = vunpack.c.l.b16 %v72
  %v234 = vunpack.c.l.b16 %v73
  %v235 = vunpack.c.l.b16 %v74
  %v236 = vunpack.c.l.b16 %v75
  %v237 = vunpack.c.l.b16 %v76
  %v238 = vunpack.c.l.b16 %v77
  %v239 = vunpack.c.l.b16 %v78
  %v240 = vunpack.c.l.b16 %v79
  %v241 = vunpack.c.l.b16 %v80
  %v242 = vunpack.c.l.b16 %v81
  %v243 = vunpack.c.l.b16 %v82
  %v244 = vunpack.c.l.b16 %v83
  %v245 = vunpack.c.l.b16 %v84
  %v246 = vunpack.c.l.b16 %v85
  %v247 = vunpack.c.l.b16 %v86
  %v248 = vunpack.c.l.b16 %v87
  %v249 = vunpack.c.l.b16 %v88
  %v250 = vunpack.c.l.b16 %v89
  %v251 = vpack.c.b16 %v180, %v179
  %v252 = vpack.c.b16 %v182, %v181
  %v253 = vpack.c.b16 %v184, %v183
  %v254 = vpack.c.b16 %v186, %v185
  %v255 = vpack.c.b16 %v188, %v187
  %v256 = vpack.c.b16 %v190, %v189
  %v257 = vpack.c.b16 %v192, %v191
  %v258 = vpack.c.b16 %v194, %v193
  %v259 = vpack.c.b16 %v196, %v195
  %v260 = vpack.c.b16 %v198, %v197
  %v261 = vpack.c.b16 %v200, %v199
  %v262 = vpack.c.b16 %v202, %v201
  %v263 = vpack.c.b16 %v204, %v203
  %v264 = vpack.c.b16 %v206, %v205
  %v265 = vpack.c.b16 %v208, %v207
  %v266 = vpack.c.b16 %v210, %v209
  %v267 = vpack.c.b16 %v212, %v211
  %v268 = vpack.c.b16 %v214, %v213
  %v269 = vpack.c.b16 %v216, %v215
  %v270 = vpack.c.b16 %v218, %v217
  %v271 = vpack.c.b16 %v220, %v219
  %v272 = vpack.c.b16 %v222, %v221
  %v273 = vpack.c.b16 %v224, %v223
  %v274 = vpack.c.b16 %v226, %v225
  %v275 = vpack.c.b16 %v228, %v227
  %v276 = vpack.c.b16 %v230, %v229
  %v277 = vpack.c.b16 %v232, %v231
  %v278 = vpack.c.b16 %v234, %v233
  %v279 = vpack.c.b16 %v236, %v235
  %v280 = vpack.c.b16 %v238, %v237
  %v281 = vpack.c.b16 %v240, %v239
  %v282 = vpack.c.b16 %v242, %v241
  %v283 = vpack.c.b16 %v244, %v243
  %v284 = vpack.c.b16 %v246, %v245
  %v285 = vpack.c.b16 %v248, %v247
  %v286 = vpack.c.b16 %v250, %v249
  %vm323 = vcmask 523264
  %v325 = vsel %vm323, %v102, 0
  %327 = vmatprep.subr.bf16.mxu0 0
  %328 = vmatpush1.bf16.msra.mxu0 %v258
  %329 = vmatprep.subr.bf16.mxu0 0
  %330 = vmatpush1.bf16.msra.mxu0 %v257
  %331 = vmatprep.subr.bf16.mxu0 0
  %332 = vmatpush1.bf16.msra.mxu0 %v256
  %333 = vmatprep.subr.bf16.mxu0 0
  %334 = vmatpush1.bf16.msra.mxu0 %v255
  %335 = vmatprep.subr.bf16.mxu0 0
  %336 = vmatpush1.bf16.msra.mxu0 %v254
  %337 = vmatprep.subr.bf16.mxu0 0
  %338 = vmatpush1.bf16.msra.mxu0 %v253
  %339 = vmatprep.subr.bf16.mxu0 0
  %340 = vmatpush1.bf16.msra.mxu0 %v252
  %341 = vmatprep.subr.bf16.mxu0 0
  %342 = vmatpush1.bf16.msra.mxu0 %v251
  %343 = vmatprep.subr.bf16.mxu0 0
  %344 = vmatpush2.bf16.msra.mxu0 %v266
  %345 = vmatprep.subr.bf16.mxu0 0
  %346 = vmatpush2.bf16.msra.mxu0 %v265
  %347 = vmatprep.subr.bf16.mxu0 0
  %348 = vmatpush2.bf16.msra.mxu0 %v264
  %349 = vmatprep.subr.bf16.mxu0 0
  %350 = vmatpush2.bf16.msra.mxu0 %v263
  %351 = vmatprep.subr.bf16.mxu0 0
  %352 = vmatpush2.bf16.msra.mxu0 %v262
  %353 = vmatprep.subr.bf16.mxu0 0
  %354 = vmatpush2.bf16.msra.mxu0 %v261
  %355 = vmatprep.subr.bf16.mxu0 0
  %356 = vmatpush2.bf16.msra.mxu0 %v260
  %357 = vmatprep.subr.bf16.mxu0 0
  %358 = vmatpush2.bf16.msra.mxu0 %v259
  %359 = vmatprep.mubr.bf16.mxu0 %v99
  %360 = vmatmul.mubr.bf16.gmra.mxu0 %v98
  %v361 = vpop.f32.mrf.mxu0
  %v362 = vadd.f32 0.0, %v361
  %v363 = vpop.f32.mrf.mxu0
  %v364 = vpop.f32.mrf.mxu0
  %v365 = vpop.f32.mrf.mxu0
  %366 = vdwg.mxu0
  %367 = vmatprep.subr.bf16.mxu0 0
  %368 = vmatpush1.bf16.msra.mxu0 %v274
  %369 = vmatprep.subr.bf16.mxu0 0
  %370 = vmatpush1.bf16.msra.mxu0 %v273
  %371 = vmatprep.subr.bf16.mxu0 0
  %372 = vmatpush1.bf16.msra.mxu0 %v272
  %373 = vmatprep.subr.bf16.mxu0 0
  %374 = vmatpush1.bf16.msra.mxu0 %v271
  %375 = vmatprep.subr.bf16.mxu0 0
  %376 = vmatpush1.bf16.msra.mxu0 %v270
  %377 = vmatprep.subr.bf16.mxu0 0
  %378 = vmatpush1.bf16.msra.mxu0 %v269
  %379 = vmatprep.subr.bf16.mxu0 0
  %380 = vmatpush1.bf16.msra.mxu0 %v268
  %381 = vmatprep.subr.bf16.mxu0 0
  %382 = vmatpush1.bf16.msra.mxu0 %v267
  %383 = vmatprep.subr.bf16.mxu0 0
  %384 = vmatpush2.bf16.msra.mxu0 %v282
  %385 = vmatprep.subr.bf16.mxu0 0
  %386 = vmatpush2.bf16.msra.mxu0 %v281
  %387 = vmatprep.subr.bf16.mxu0 0
  %388 = vmatpush2.bf16.msra.mxu0 %v280
  %389 = vmatprep.subr.bf16.mxu0 0
  %390 = vmatpush2.bf16.msra.mxu0 %v279
  %391 = vmatprep.subr.bf16.mxu0 0
  %392 = vmatpush2.bf16.msra.mxu0 %v278
  %393 = vmatprep.subr.bf16.mxu0 0
  %394 = vmatpush2.bf16.msra.mxu0 %v277
  %395 = vmatprep.subr.bf16.mxu0 0
  %396 = vmatpush2.bf16.msra.mxu0 %v276
  %397 = vmatprep.subr.bf16.mxu0 0
  %398 = vmatpush2.bf16.msra.mxu0 %v275
  %399 = vmatprep.mubr.bf16.mxu0 %v101
  %400 = vmatmul.mubr.bf16.gmra.mxu0 %v100
  %v401 = vpop.f32.mrf.mxu0
  %v402 = vadd.f32 %v362, %v401
  %v403 = vpop.f32.mrf.mxu0
  %v404 = vpop.f32.mrf.mxu0
  %v405 = vpop.f32.mrf.mxu0
  %406 = vdwg.mxu0
  %407 = vmatprep.subr.bf16.mxu0 0
  %408 = vmatpush1.bf16.msra.mxu0 0
  %409 = vmatprep.subr.bf16.mxu0 0
  %410 = vmatpush1.bf16.msra.mxu0 0
  %411 = vmatprep.subr.bf16.mxu0 0
  %412 = vmatpush1.bf16.msra.mxu0 0
  %413 = vmatprep.subr.bf16.mxu0 0
  %414 = vmatpush1.bf16.msra.mxu0 0
  %415 = vmatprep.subr.bf16.mxu0 0
  %416 = vmatpush1.bf16.msra.mxu0 %v286
  %417 = vmatprep.subr.bf16.mxu0 0
  %418 = vmatpush1.bf16.msra.mxu0 %v285
  %419 = vmatprep.subr.bf16.mxu0 0
  %420 = vmatpush1.bf16.msra.mxu0 %v284
  %421 = vmatprep.subr.bf16.mxu0 0
  %422 = vmatpush1.bf16.msra.mxu0 %v283
  %423 = vmatprep.subr.bf16.mxu0 0
  %424 = vmatpush2.bf16.msra.mxu0 0
  %425 = vmatprep.subr.bf16.mxu0 0
  %426 = vmatpush2.bf16.msra.mxu0 0
  %427 = vmatprep.subr.bf16.mxu0 0
  %428 = vmatpush2.bf16.msra.mxu0 0
  %429 = vmatprep.subr.bf16.mxu0 0
  %430 = vmatpush2.bf16.msra.mxu0 0
  %431 = vmatprep.subr.bf16.mxu0 0
  %432 = vmatpush2.bf16.msra.mxu0 0
  %433 = vmatprep.subr.bf16.mxu0 0
  %434 = vmatpush2.bf16.msra.mxu0 0
  %435 = vmatprep.subr.bf16.mxu0 0
  %436 = vmatpush2.bf16.msra.mxu0 0
  %437 = vmatprep.subr.bf16.mxu0 0
  %438 = vmatpush2.bf16.msra.mxu0 0
  %439 = vmatprep.mubr.bf16.mxu0 0
  %440 = vmatmul.mubr.bf16.gmra.mxu0 %v325
  %v441 = vpop.f32.mrf.mxu0
  %v442 = vadd.f32 %v402, %v441
  %v443 = vpop.f32.mrf.mxu0
  %v444 = vpop.f32.mrf.mxu0
  %v445 = vpop.f32.mrf.mxu0
  %446 = vdwg.mxu0
  %v447 = vld [vmem:[%s2] sm:$0x1]
  %v448 = vlaneseq
  %v449 = vshrl.u32 %v448, 7
  %v450 = vsub.s32 0, %v449
  %v451 = vrot.slane %v447, %v450
  %v452 = vmul.f32 %v442, %v451
  %v453 = vld [vmem:[%s2 + $0x1] sm:$0x1]
  %v454 = vlaneseq
  %v455 = vshrl.u32 %v454, 7
  %v456 = vsub.s32 0, %v455
  %v457 = vrot.slane %v453, %v456
  %v458 = vadd.f32 %v452, %v457
  %v459 = vmax.f32 %v458, 0.0
  %v460 = vpack.c.bf16 %v459, %v459
  %461 = vst [vmem:[%s3] sm:$0xf] %v460
  // Predicated region
  $region14: #{_lambda_.68} parent=0 // pred_check
    _
  $region15: #{_lambda_.68} parent=0 // pred_check_branch
    %463 = sbr.rel (0) target = $region17
  $region16: #{_lambda_.68} parent=0 // pred_region
    _
  $region17: #{_lambda_.68} parent=0 // pred_fallthru
    _
  // Predicated region
  $region18: #{_lambda_.68} parent=0 // pred_check
    _
  $region19: #{_lambda_.68} parent=0 // pred_check_branch
    %465 = sbr.rel (0) target = $region21
  $region20: #{_lambda_.68} parent=0 // pred_region
    _
  $region21: #{_lambda_.68} parent=0 // pred_fallthru
    _

</llo_original>
